<compile_context>
chip_gen: v7x
topology: tpu7x:2x2x1
jax: 0.10.0
libtpu: 0.0.40
codegen_flags: <defaults>
</compile_context>

<pallas_src>
import math

import jax
import jax.numpy as jnp
from jax.experimental import pallas as pl
from jax.experimental.pallas import tpu as pltpu


# --------------------------------------------------------------------------- #
# Helpers: hardware query, VMEM accounting, tile sizing.
# --------------------------------------------------------------------------- #
def _pad_up(n, m):
    return -(-n // m) * m


def _tpu_vmem_bytes():
    """Per-core VMEM capacity; conservative (v7x-like) default if unavailable."""
    try:
        return int(pltpu.get_tpu_info().vmem_capacity_bytes)
    except Exception:
        return 64 << 20


def _sublane_elems(itemsize):
    # Sub-32-bit dtypes pack along sublanes: 8 (f32), 16 (bf16), 32 (int8/fp8).
    return 8 * max(1, 4 // itemsize)


def _compiler_params(vmem_needed, phys_vmem):
    # Explicit scoped-VMEM limit: large enough for the planned tiles + margin,
    # never above ~3/4 of physical (48 MiB on v7x's 64 MiB, 96 MiB on v5e/v6e).
    limit = int(min(phys_vmem * 3 // 4, max(32 << 20, vmem_needed + (8 << 20))))
    return pltpu.CompilerParams(
        dimension_semantics=("parallel",),
        vmem_limit_bytes=limit,
    )


def _primary_vmem_bytes(Ln, C, BT, itemsize):
    """VMEM footprint of the lane-dense kernel: double-buffered in/out tiles
    plus the single transpose scratch (which is lane-padded to 128)."""
    sub = _sublane_elems(itemsize)
    Lc = Ln * C
    in_tiles = 2 * _pad_up(BT, sub) * Lc * itemsize
    out_tiles = 2 * _pad_up(Ln, sub) * _pad_up(C * BT, 128) * itemsize
    scratch = Lc * _pad_up(BT, 128) * itemsize
    return in_tiles + out_tiles + scratch


def _pick_node_block(N, C, BT, itemsize, budget):
    """Largest legal node block that fits `budget` and keeps a multi-step grid.

    The block must satisfy (Ln*C) % 128 == 0 and Ln % 8 == 0 (or Ln == N),
    so the 2-D input block and the lane-dense output block are both legal.
    """
    lane_mult = 128 // math.gcd(C, 128)                 # makes Ln*C % 128 == 0
    mult = 8 * lane_mult // math.gcd(8, lane_mult)      # lcm(8, lane_mult)
    if N <= mult:
        return N                                        # full-extent block
    # Keep >= ~8 grid steps when possible so "parallel" can shard across cores
    # (v7x has 2 TensorCores); never fall back to a single huge block.
    target_steps = 8 if N >= 8 * mult else 2
    step_cap = max(mult, (N // target_steps) // mult * mult)
    hard_cap = min(N, 1024, step_cap)                   # also bounds unrolling
    best = mult
    ln = mult
    while ln <= hard_cap:
        if _primary_vmem_bytes(ln, C, BT, itemsize) <= budget:
            best = ln
        ln += mult
    return best


# --------------------------------------------------------------------------- #
# Primary kernel: lane-dense (N, C*BT) output.
# --------------------------------------------------------------------------- #
def _relayout_kernel(x_ref, o_ref, t_ref):
    """x_ref: (BT, Ln*C) dense input tile
       t_ref: (Ln*C, BT) VMEM scratch holding the 2-D transpose of x_ref
       o_ref: (Ln, C*BT) lane-dense output tile
       Mapping: o[i, c*BT + bt] = x[bt, i*C + c]."""
    BT, Lc = x_ref.shape
    Ln = o_ref.shape[0]
    C = Lc // Ln
    TW = 256  # lanes per transpose chunk  (bounds live vregs)
    RW = 256  # node rows per gather chunk (bounds live vregs)

    # Step 1: minor-2D (XLU) transpose of the whole tile into scratch.
    for s in range(0, Lc, TW):
        w = min(TW, Lc - s)
        t_ref[s:s + w, :] = jnp.transpose(x_ref[:, s:s + w], (1, 0))

    # Step 2: per-channel sublane-strided gather -> lane-dense placement.
    #         rows i*C + c of the scratch are exactly column block c of node i.
    for r0 in range(0, Ln, RW):
        rw = min(RW, Ln - r0)
        for c in range(C):
            o_ref[r0:r0 + rw, c * BT:(c + 1) * BT] = (
                t_ref[pl.ds(r0 * C + c, rw, stride=C), :])


def _forward_lane_dense(x):
    B, T, N, C = x.shape
    BT = B * T
    itemsize = x.dtype.itemsize
    phys = _tpu_vmem_bytes()
    budget = min(phys // 2, 48 << 20)

    Ln = _pick_node_block(N, C, BT, itemsize, budget)
    Lc = Ln * C
    x2 = x.reshape(BT, N * C)                 # free row-major metadata reshape
    grid = (pl.cdiv(N, Ln),)

    out = pl.pallas_call(
        _relayout_kernel,
        out_shape=jax.ShapeDtypeStruct((N, C * BT), x.dtype),
        grid=grid,
        in_specs=[pl.BlockSpec((BT, Lc), lambda g: (0, g))],
        out_specs=pl.BlockSpec((Ln, C * BT), lambda g: (g, 0)),
        scratch_shapes=[pltpu.VMEM((Lc, BT), x.dtype)],
        compiler_params=_compiler_params(
            _primary_vmem_bytes(Ln, C, BT, itemsize), phys),
        cost_estimate=pl.CostEstimate(
            flops=0, transcendentals=0,
            bytes_accessed=2 * x.size * itemsize),
    )(x2)
    return out                                # already (N, C*BT) -- no reshape


# --------------------------------------------------------------------------- #
# Fallback kernel: proven plain 2-D transpose, (N*C, BT) + free reshape.
# --------------------------------------------------------------------------- #
def _transpose_block_kernel(x_ref, o_ref):
    """x_ref: (BT, L) block;  o_ref: (L, BT) block;  o[r, bt] = x[bt, r]."""
    _, lanes = x_ref.shape
    for s in range(0, lanes, 256):
        w = min(256, lanes - s)
        o_ref[s:s + w, :] = jnp.transpose(x_ref[:, s:s + w], (1, 0))


def _forward_fallback(x):
    B, T, N, C = x.shape
    BT = B * T
    total = N * C
    itemsize = x.dtype.itemsize
    phys = _tpu_vmem_bytes()

    x2 = x.reshape(BT, total)                 # free row-major metadata reshape
    if total <= 128:
        L = total                             # full-extent block is legal
    else:
        L = max(128, min(8192, (min(total, 8192) // 128) * 128))
    grid = (pl.cdiv(total, L),)

    sub = _sublane_elems(itemsize)
    vmem_needed = 2 * (_pad_up(BT, sub) * L + L * _pad_up(BT, 128)) * itemsize

    out2 = pl.pallas_call(
        _transpose_block_kernel,
        out_shape=jax.ShapeDtypeStruct((total, BT), x.dtype),
        grid=grid,
        in_specs=[pl.BlockSpec((BT, L), lambda g: (0, g))],
        out_specs=pl.BlockSpec((L, BT), lambda g: (g, 0)),
        compiler_params=_compiler_params(vmem_needed, phys),
        cost_estimate=pl.CostEstimate(
            flops=0, transcendentals=0,
            bytes_accessed=2 * x.size * itemsize),
    )(x2)
    return out2.reshape(N, C * BT)            # free row-major metadata reshape


# --------------------------------------------------------------------------- #
# Public wrapper (replicates ChebyConv.forward).
# --------------------------------------------------------------------------- #
def cheby_conv_forward(x):
    """Replicates ChebyConv.forward.

    Args:
        x: (B, T, N, C) array (same axis order as the PyTorch module).
    Returns:
        (N, C * B * T) array with out[n, c*(B*T) + b*T + t] == x[b, t, n, c].
    """
    assert x.ndim == 4
    try:
        out = _forward_lane_dense(x)
        return jax.block_until_ready(out)
    except Exception:
        # Guarded fallback: proven transpose kernel (identical semantics),
        # used only if the strided-gather path fails to lower on this stack.
        return _forward_fallback(x)
    # TODO(synk): the reference forward defines no Chebyshev weights and applies
    # no matmul, so there is no further compute to fuse into this kernel.


if __name__ == "__main__":
    key = jax.random.PRNGKey(0)
    B, T, N, C = 2, 4, 256, 16            # BT=8, N*C=4096 -> multi-step grid
    x = jax.random.normal(key, (B, T, N, C), dtype=jnp.float32)

    out = cheby_conv_forward(x)
    out = jax.block_until_ready(out)

    # Pure-JAX reference of the exact PyTorch chain.
    ref = jnp.transpose(x.reshape(B * T, N, C), (1, 2, 0)).reshape(N, B * T * C)
    assert out.shape == (N, B * T * C)
    assert out.dtype == x.dtype
    assert bool(jnp.array_equal(out, ref))   # exact: pure permutation

    print("KERNEL_OK")
</pallas_src>

<mosaic_0001>
module attributes {stable_mosaic.version = 11 : i64} {
  func.func @_relayout_kernel(%arg0: i32, %arg1: memref<8x512xf32, #tpu.memory_space<vmem>>, %arg2: memref<32x128xf32, #tpu.memory_space<vmem>>, %arg3: memref<512x8xf32, #tpu.memory_space<vmem>>) attributes {dimension_semantics = [#tpu.dimension_semantics<parallel>], iteration_bounds = array<i64: 8>, scalar_prefetch = 0 : i64, scratch_operands = 1 : i64, tpu.core_type = #tpu.core_type<tc>, window_params = [{transform_indices = @transform_0, window_bounds = array<i64: 8, 512>}, {transform_indices = @transform_1, window_bounds = array<i64: 32, 128>}]} {
    %c0 = arith.constant 0 : index
    %c0_0 = arith.constant 0 : index
    %0 = vector.load %arg1[%c0, %c0_0] : memref<8x512xf32, #tpu.memory_space<vmem>>, vector<8x256xf32>
    %1 = tpu.transpose %0, [1, 0] : vector<8x256xf32> -> vector<256x8xf32>
    %c0_1 = arith.constant 0 : index
    %c0_2 = arith.constant 0 : index
    %2 = vector.load %arg3[%c0_1, %c0_2] : memref<512x8xf32, #tpu.memory_space<vmem>>, vector<256x8xf32>
    tpu.vector_store %arg3[%c0_1, %c0_2], %1 {strides = array<i32>} : memref<512x8xf32, #tpu.memory_space<vmem>>, vector<256x8xf32>,
    %c0_3 = arith.constant 0 : index
    %c256 = arith.constant 256 : index
    %3 = vector.load %arg1[%c0_3, %c256] : memref<8x512xf32, #tpu.memory_space<vmem>>, vector<8x256xf32>
    %4 = tpu.transpose %3, [1, 0] : vector<8x256xf32> -> vector<256x8xf32>
    %c256_4 = arith.constant 256 : index
    %c0_5 = arith.constant 0 : index
    %5 = vector.load %arg3[%c256_4, %c0_5] : memref<512x8xf32, #tpu.memory_space<vmem>>, vector<256x8xf32>
    tpu.vector_store %arg3[%c256_4, %c0_5], %4 {strides = array<i32>} : memref<512x8xf32, #tpu.memory_space<vmem>>, vector<256x8xf32>,
    %c0_6 = arith.constant 0 : index
    %c0_7 = arith.constant 0 : index
    %6 = tpu.strided_load %arg3[%c0_6, %c0_7] {strides = array<i32: 16, 1>} : memref<512x8xf32, #tpu.memory_space<vmem>>, vector<32x8xf32>
    %c0_8 = arith.constant 0 : index
    %c0_9 = arith.constant 0 : index
    %7 = vector.load %arg2[%c0_8, %c0_9] : memref<32x128xf32, #tpu.memory_space<vmem>>, vector<32x8xf32>
    tpu.vector_store %arg2[%c0_8, %c0_9], %6 {strides = array<i32>} : memref<32x128xf32, #tpu.memory_space<vmem>>, vector<32x8xf32>,
    %c1 = arith.constant 1 : index
    %c0_10 = arith.constant 0 : index
    %8 = tpu.strided_load %arg3[%c1, %c0_10] {strides = array<i32: 16, 1>} : memref<512x8xf32, #tpu.memory_space<vmem>>, vector<32x8xf32>
    %c0_11 = arith.constant 0 : index
    %c8 = arith.constant 8 : index
    %9 = vector.load %arg2[%c0_11, %c8] : memref<32x128xf32, #tpu.memory_space<vmem>>, vector<32x8xf32>
    tpu.vector_store %arg2[%c0_11, %c8], %8 {strides = array<i32>} : memref<32x128xf32, #tpu.memory_space<vmem>>, vector<32x8xf32>,
    %c2 = arith.constant 2 : index
    %c0_12 = arith.constant 0 : index
    %10 = tpu.strided_load %arg3[%c2, %c0_12] {strides = array<i32: 16, 1>} : memref<512x8xf32, #tpu.memory_space<vmem>>, vector<32x8xf32>
    %c0_13 = arith.constant 0 : index
    %c16 = arith.constant 16 : index
    %11 = vector.load %arg2[%c0_13, %c16] : memref<32x128xf32, #tpu.memory_space<vmem>>, vector<32x8xf32>
    tpu.vector_store %arg2[%c0_13, %c16], %10 {strides = array<i32>} : memref<32x128xf32, #tpu.memory_space<vmem>>, vector<32x8xf32>,
    %c3 = arith.constant 3 : index
    %c0_14 = arith.constant 0 : index
    %12 = tpu.strided_load %arg3[%c3, %c0_14] {strides = array<i32: 16, 1>} : memref<512x8xf32, #tpu.memory_space<vmem>>, vector<32x8xf32>
    %c0_15 = arith.constant 0 : index
    %c24 = arith.constant 24 : index
    %13 = vector.load %arg2[%c0_15, %c24] : memref<32x128xf32, #tpu.memory_space<vmem>>, vector<32x8xf32>
    tpu.vector_store %arg2[%c0_15, %c24], %12 {strides = array<i32>} : memref<32x128xf32, #tpu.memory_space<vmem>>, vector<32x8xf32>,
    %c4 = arith.constant 4 : index
    %c0_16 = arith.constant 0 : index
    %14 = tpu.strided_load %arg3[%c4, %c0_16] {strides = array<i32: 16, 1>} : memref<512x8xf32, #tpu.memory_space<vmem>>, vector<32x8xf32>
    %c0_17 = arith.constant 0 : index
    %c32 = arith.constant 32 : index
    %15 = vector.load %arg2[%c0_17, %c32] : memref<32x128xf32, #tpu.memory_space<vmem>>, vector<32x8xf32>
    tpu.vector_store %arg2[%c0_17, %c32], %14 {strides = array<i32>} : memref<32x128xf32, #tpu.memory_space<vmem>>, vector<32x8xf32>,
    %c5 = arith.constant 5 : index
    %c0_18 = arith.constant 0 : index
    %16 = tpu.strided_load %arg3[%c5, %c0_18] {strides = array<i32: 16, 1>} : memref<512x8xf32, #tpu.memory_space<vmem>>, vector<32x8xf32>
    %c0_19 = arith.constant 0 : index
    %c40 = arith.constant 40 : index
    %17 = vector.load %arg2[%c0_19, %c40] : memref<32x128xf32, #tpu.memory_space<vmem>>, vector<32x8xf32>
    tpu.vector_store %arg2[%c0_19, %c40], %16 {strides = array<i32>} : memref<32x128xf32, #tpu.memory_space<vmem>>, vector<32x8xf32>,
    %c6 = arith.constant 6 : index
    %c0_20 = arith.constant 0 : index
    %18 = tpu.strided_load %arg3[%c6, %c0_20] {strides = array<i32: 16, 1>} : memref<512x8xf32, #tpu.memory_space<vmem>>, vector<32x8xf32>
    %c0_21 = arith.constant 0 : index
    %c48 = arith.constant 48 : index
    %19 = vector.load %arg2[%c0_21, %c48] : memref<32x128xf32, #tpu.memory_space<vmem>>, vector<32x8xf32>
    tpu.vector_store %arg2[%c0_21, %c48], %18 {strides = array<i32>} : memref<32x128xf32, #tpu.memory_space<vmem>>, vector<32x8xf32>,
    %c7 = arith.constant 7 : index
    %c0_22 = arith.constant 0 : index
    %20 = tpu.strided_load %arg3[%c7, %c0_22] {strides = array<i32: 16, 1>} : memref<512x8xf32, #tpu.memory_space<vmem>>, vector<32x8xf32>
    %c0_23 = arith.constant 0 : index
    %c56 = arith.constant 56 : index
    %21 = vector.load %arg2[%c0_23, %c56] : memref<32x128xf32, #tpu.memory_space<vmem>>, vector<32x8xf32>
    tpu.vector_store %arg2[%c0_23, %c56], %20 {strides = array<i32>} : memref<32x128xf32, #tpu.memory_space<vmem>>, vector<32x8xf32>,
    %c8_24 = arith.constant 8 : index
    %c0_25 = arith.constant 0 : index
    %22 = tpu.strided_load %arg3[%c8_24, %c0_25] {strides = array<i32: 16, 1>} : memref<512x8xf32, #tpu.memory_space<vmem>>, vector<32x8xf32>
    %c0_26 = arith.constant 0 : index
    %c64 = arith.constant 64 : index
    %23 = vector.load %arg2[%c0_26, %c64] : memref<32x128xf32, #tpu.memory_space<vmem>>, vector<32x8xf32>
    tpu.vector_store %arg2[%c0_26, %c64], %22 {strides = array<i32>} : memref<32x128xf32, #tpu.memory_space<vmem>>, vector<32x8xf32>,
    %c9 = arith.constant 9 : index
    %c0_27 = arith.constant 0 : index
    %24 = tpu.strided_load %arg3[%c9, %c0_27] {strides = array<i32: 16, 1>} : memref<512x8xf32, #tpu.memory_space<vmem>>, vector<32x8xf32>
    %c0_28 = arith.constant 0 : index
    %c72 = arith.constant 72 : index
    %25 = vector.load %arg2[%c0_28, %c72] : memref<32x128xf32, #tpu.memory_space<vmem>>, vector<32x8xf32>
    tpu.vector_store %arg2[%c0_28, %c72], %24 {strides = array<i32>} : memref<32x128xf32, #tpu.memory_space<vmem>>, vector<32x8xf32>,
    %c10 = arith.constant 10 : index
    %c0_29 = arith.constant 0 : index
    %26 = tpu.strided_load %arg3[%c10, %c0_29] {strides = array<i32: 16, 1>} : memref<512x8xf32, #tpu.memory_space<vmem>>, vector<32x8xf32>
    %c0_30 = arith.constant 0 : index
    %c80 = arith.constant 80 : index
    %27 = vector.load %arg2[%c0_30, %c80] : memref<32x128xf32, #tpu.memory_space<vmem>>, vector<32x8xf32>
    tpu.vector_store %arg2[%c0_30, %c80], %26 {strides = array<i32>} : memref<32x128xf32, #tpu.memory_space<vmem>>, vector<32x8xf32>,
    %c11 = arith.constant 11 : index
    %c0_31 = arith.constant 0 : index
    %28 = tpu.strided_load %arg3[%c11, %c0_31] {strides = array<i32: 16, 1>} : memref<512x8xf32, #tpu.memory_space<vmem>>, vector<32x8xf32>
    %c0_32 = arith.constant 0 : index
    %c88 = arith.constant 88 : index
    %29 = vector.load %arg2[%c0_32, %c88] : memref<32x128xf32, #tpu.memory_space<vmem>>, vector<32x8xf32>
    tpu.vector_store %arg2[%c0_32, %c88], %28 {strides = array<i32>} : memref<32x128xf32, #tpu.memory_space<vmem>>, vector<32x8xf32>,
    %c12 = arith.constant 12 : index
    %c0_33 = arith.constant 0 : index
    %30 = tpu.strided_load %arg3[%c12, %c0_33] {strides = array<i32: 16, 1>} : memref<512x8xf32, #tpu.memory_space<vmem>>, vector<32x8xf32>
    %c0_34 = arith.constant 0 : index
    %c96 = arith.constant 96 : index
    %31 = vector.load %arg2[%c0_34, %c96] : memref<32x128xf32, #tpu.memory_space<vmem>>, vector<32x8xf32>
    tpu.vector_store %arg2[%c0_34, %c96], %30 {strides = array<i32>} : memref<32x128xf32, #tpu.memory_space<vmem>>, vector<32x8xf32>,
    %c13 = arith.constant 13 : index
    %c0_35 = arith.constant 0 : index
    %32 = tpu.strided_load %arg3[%c13, %c0_35] {strides = array<i32: 16, 1>} : memref<512x8xf32, #tpu.memory_space<vmem>>, vector<32x8xf32>
    %c0_36 = arith.constant 0 : index
    %c104 = arith.constant 104 : index
    %33 = vector.load %arg2[%c0_36, %c104] : memref<32x128xf32, #tpu.memory_space<vmem>>, vector<32x8xf32>
    tpu.vector_store %arg2[%c0_36, %c104], %32 {strides = array<i32>} : memref<32x128xf32, #tpu.memory_space<vmem>>, vector<32x8xf32>,
    %c14 = arith.constant 14 : index
    %c0_37 = arith.constant 0 : index
    %34 = tpu.strided_load %arg3[%c14, %c0_37] {strides = array<i32: 16, 1>} : memref<512x8xf32, #tpu.memory_space<vmem>>, vector<32x8xf32>
    %c0_38 = arith.constant 0 : index
    %c112 = arith.constant 112 : index
    %35 = vector.load %arg2[%c0_38, %c112] : memref<32x128xf32, #tpu.memory_space<vmem>>, vector<32x8xf32>
    tpu.vector_store %arg2[%c0_38, %c112], %34 {strides = array<i32>} : memref<32x128xf32, #tpu.memory_space<vmem>>, vector<32x8xf32>,
    %c15 = arith.constant 15 : index
    %c0_39 = arith.constant 0 : index
    %36 = tpu.strided_load %arg3[%c15, %c0_39] {strides = array<i32: 16, 1>} : memref<512x8xf32, #tpu.memory_space<vmem>>, vector<32x8xf32>
    %c0_40 = arith.constant 0 : index
    %c120 = arith.constant 120 : index
    %37 = vector.load %arg2[%c0_40, %c120] : memref<32x128xf32, #tpu.memory_space<vmem>>, vector<32x8xf32>
    tpu.vector_store %arg2[%c0_40, %c120], %36 {strides = array<i32>} : memref<32x128xf32, #tpu.memory_space<vmem>>, vector<32x8xf32>,
    return
  }
  func.func @transform_0(%arg0: i32) -> (i32, i32) {
    %c0_i32 = arith.constant 0 : i32
    %c0_i32_0 = arith.constant 0 : i32
    return %c0_i32, %arg0 : i32, i32
  }
  func.func @transform_1(%arg0: i32) -> (i32, i32) {
    %c0_i32 = arith.constant 0 : i32
    %c0_i32_0 = arith.constant 0 : i32
    return %arg0, %c0_i32 : i32, i32
  }
}

module attributes {stable_mosaic.version = 11 : i64} {
  func.func @_transpose_block_kernel(%arg0: i32, %arg1: memref<8x4096xf32, #tpu.memory_space<vmem>>, %arg2: memref<4096x8xf32, #tpu.memory_space<vmem>>) attributes {dimension_semantics = [#tpu.dimension_semantics<parallel>], iteration_bounds = array<i64: 1>, scalar_prefetch = 0 : i64, scratch_operands = 0 : i64, tpu.core_type = #tpu.core_type<tc>, window_params = [{transform_indices = @transform_0, window_bounds = array<i64: 8, 4096>}, {transform_indices = @transform_1, window_bounds = array<i64: 4096, 8>}]} {
    %c0 = arith.constant 0 : index
    %c0_0 = arith.constant 0 : index
    %0 = vector.load %arg1[%c0, %c0_0] : memref<8x4096xf32, #tpu.memory_space<vmem>>, vector<8x256xf32>
    %1 = tpu.transpose %0, [1, 0] : vector<8x256xf32> -> vector<256x8xf32>
    %c0_1 = arith.constant 0 : index
    %c0_2 = arith.constant 0 : index
    %2 = vector.load %arg2[%c0_1, %c0_2] : memref<4096x8xf32, #tpu.memory_space<vmem>>, vector<256x8xf32>
    tpu.vector_store %arg2[%c0_1, %c0_2], %1 {strides = array<i32>} : memref<4096x8xf32, #tpu.memory_space<vmem>>, vector<256x8xf32>,
    %c0_3 = arith.constant 0 : index
    %c256 = arith.constant 256 : index
    %3 = vector.load %arg1[%c0_3, %c256] : memref<8x4096xf32, #tpu.memory_space<vmem>>, vector<8x256xf32>
    %4 = tpu.transpose %3, [1, 0] : vector<8x256xf32> -> vector<256x8xf32>
    %c256_4 = arith.constant 256 : index
    %c0_5 = arith.constant 0 : index
    %5 = vector.load %arg2[%c256_4, %c0_5] : memref<4096x8xf32, #tpu.memory_space<vmem>>, vector<256x8xf32>
    tpu.vector_store %arg2[%c256_4, %c0_5], %4 {strides = array<i32>} : memref<4096x8xf32, #tpu.memory_space<vmem>>, vector<256x8xf32>,
    %c0_6 = arith.constant 0 : index
    %c512 = arith.constant 512 : index
    %6 = vector.load %arg1[%c0_6, %c512] : memref<8x4096xf32, #tpu.memory_space<vmem>>, vector<8x256xf32>
    %7 = tpu.transpose %6, [1, 0] : vector<8x256xf32> -> vector<256x8xf32>
    %c512_7 = arith.constant 512 : index
    %c0_8 = arith.constant 0 : index
    %8 = vector.load %arg2[%c512_7, %c0_8] : memref<4096x8xf32, #tpu.memory_space<vmem>>, vector<256x8xf32>
    tpu.vector_store %arg2[%c512_7, %c0_8], %7 {strides = array<i32>} : memref<4096x8xf32, #tpu.memory_space<vmem>>, vector<256x8xf32>,
    %c0_9 = arith.constant 0 : index
    %c768 = arith.constant 768 : index
    %9 = vector.load %arg1[%c0_9, %c768] : memref<8x4096xf32, #tpu.memory_space<vmem>>, vector<8x256xf32>
    %10 = tpu.transpose %9, [1, 0] : vector<8x256xf32> -> vector<256x8xf32>
    %c768_10 = arith.constant 768 : index
    %c0_11 = arith.constant 0 : index
    %11 = vector.load %arg2[%c768_10, %c0_11] : memref<4096x8xf32, #tpu.memory_space<vmem>>, vector<256x8xf32>
    tpu.vector_store %arg2[%c768_10, %c0_11], %10 {strides = array<i32>} : memref<4096x8xf32, #tpu.memory_space<vmem>>, vector<256x8xf32>,
    %c0_12 = arith.constant 0 : index
    %c1024 = arith.constant 1024 : index
    %12 = vector.load %arg1[%c0_12, %c1024] : memref<8x4096xf32, #tpu.memory_space<vmem>>, vector<8x256xf32>
    %13 = tpu.transpose %12, [1, 0] : vector<8x256xf32> -> vector<256x8xf32>
    %c1024_13 = arith.constant 1024 : index
    %c0_14 = arith.constant 0 : index
    %14 = vector.load %arg2[%c1024_13, %c0_14] : memref<4096x8xf32, #tpu.memory_space<vmem>>, vector<256x8xf32>
    tpu.vector_store %arg2[%c1024_13, %c0_14], %13 {strides = array<i32>} : memref<4096x8xf32, #tpu.memory_space<vmem>>, vector<256x8xf32>,
    %c0_15 = arith.constant 0 : index
    %c1280 = arith.constant 1280 : index
    %15 = vector.load %arg1[%c0_15, %c1280] : memref<8x4096xf32, #tpu.memory_space<vmem>>, vector<8x256xf32>
    %16 = tpu.transpose %15, [1, 0] : vector<8x256xf32> -> vector<256x8xf32>
    %c1280_16 = arith.constant 1280 : index
    %c0_17 = arith.constant 0 : index
    %17 = vector.load %arg2[%c1280_16, %c0_17] : memref<4096x8xf32, #tpu.memory_space<vmem>>, vector<256x8xf32>
    tpu.vector_store %arg2[%c1280_16, %c0_17], %16 {strides = array<i32>} : memref<4096x8xf32, #tpu.memory_space<vmem>>, vector<256x8xf32>,
    %c0_18 = arith.constant 0 : index
    %c1536 = arith.constant 1536 : index
    %18 = vector.load %arg1[%c0_18, %c1536] : memref<8x4096xf32, #tpu.memory_space<vmem>>, vector<8x256xf32>
    %19 = tpu.transpose %18, [1, 0] : vector<8x256xf32> -> vector<256x8xf32>
    %c1536_19 = arith.constant 1536 : index
    %c0_20 = arith.constant 0 : index
    %20 = vector.load %arg2[%c1536_19, %c0_20] : memref<4096x8xf32, #tpu.memory_space<vmem>>, vector<256x8xf32>
    tpu.vector_store %arg2[%c1536_19, %c0_20], %19 {strides = array<i32>} : memref<4096x8xf32, #tpu.memory_space<vmem>>, vector<256x8xf32>,
    %c0_21 = arith.constant 0 : index
    %c1792 = arith.constant 1792 : index
    %21 = vector.load %arg1[%c0_21, %c1792] : memref<8x4096xf32, #tpu.memory_space<vmem>>, vector<8x256xf32>
    %22 = tpu.transpose %21, [1, 0] : vector<8x256xf32> -> vector<256x8xf32>
    %c1792_22 = arith.constant 1792 : index
    %c0_23 = arith.constant 0 : index
    %23 = vector.load %arg2[%c1792_22, %c0_23] : memref<4096x8xf32, #tpu.memory_space<vmem>>, vector<256x8xf32>
    tpu.vector_store %arg2[%c1792_22, %c0_23], %22 {strides = array<i32>} : memref<4096x8xf32, #tpu.memory_space<vmem>>, vector<256x8xf32>,
    %c0_24 = arith.constant 0 : index
    %c2048 = arith.constant 2048 : index
    %24 = vector.load %arg1[%c0_24, %c2048] : memref<8x4096xf32, #tpu.memory_space<vmem>>, vector<8x256xf32>
    %25 = tpu.transpose %24, [1, 0] : vector<8x256xf32> -> vector<256x8xf32>
    %c2048_25 = arith.constant 2048 : index
    %c0_26 = arith.constant 0 : index
    %26 = vector.load %arg2[%c2048_25, %c0_26] : memref<4096x8xf32, #tpu.memory_space<vmem>>, vector<256x8xf32>
    tpu.vector_store %arg2[%c2048_25, %c0_26], %25 {strides = array<i32>} : memref<4096x8xf32, #tpu.memory_space<vmem>>, vector<256x8xf32>,
    %c0_27 = arith.constant 0 : index
    %c2304 = arith.constant 2304 : index
    %27 = vector.load %arg1[%c0_27, %c2304] : memref<8x4096xf32, #tpu.memory_space<vmem>>, vector<8x256xf32>
    %28 = tpu.transpose %27, [1, 0] : vector<8x256xf32> -> vector<256x8xf32>
    %c2304_28 = arith.constant 2304 : index
    %c0_29 = arith.constant 0 : index
    %29 = vector.load %arg2[%c2304_28, %c0_29] : memref<4096x8xf32, #tpu.memory_space<vmem>>, vector<256x8xf32>
    tpu.vector_store %arg2[%c2304_28, %c0_29], %28 {strides = array<i32>} : memref<4096x8xf32, #tpu.memory_space<vmem>>, vector<256x8xf32>,
    %c0_30 = arith.constant 0 : index
    %c2560 = arith.constant 2560 : index
    %30 = vector.load %arg1[%c0_30, %c2560] : memref<8x4096xf32, #tpu.memory_space<vmem>>, vector<8x256xf32>
    %31 = tpu.transpose %30, [1, 0] : vector<8x256xf32> -> vector<256x8xf32>
    %c2560_31 = arith.constant 2560 : index
    %c0_32 = arith.constant 0 : index
    %32 = vector.load %arg2[%c2560_31, %c0_32] : memref<4096x8xf32, #tpu.memory_space<vmem>>, vector<256x8xf32>
    tpu.vector_store %arg2[%c2560_31, %c0_32], %31 {strides = array<i32>} : memref<4096x8xf32, #tpu.memory_space<vmem>>, vector<256x8xf32>,
    %c0_33 = arith.constant 0 : index
    %c2816 = arith.constant 2816 : index
    %33 = vector.load %arg1[%c0_33, %c2816] : memref<8x4096xf32, #tpu.memory_space<vmem>>, vector<8x256xf32>
    %34 = tpu.transpose %33, [1, 0] : vector<8x256xf32> -> vector<256x8xf32>
    %c2816_34 = arith.constant 2816 : index
    %c0_35 = arith.constant 0 : index
    %35 = vector.load %arg2[%c2816_34, %c0_35] : memref<4096x8xf32, #tpu.memory_space<vmem>>, vector<256x8xf32>
    tpu.vector_store %arg2[%c2816_34, %c0_35], %34 {strides = array<i32>} : memref<4096x8xf32, #tpu.memory_space<vmem>>, vector<256x8xf32>,
    %c0_36 = arith.constant 0 : index
    %c3072 = arith.constant 3072 : index
    %36 = vector.load %arg1[%c0_36, %c3072] : memref<8x4096xf32, #tpu.memory_space<vmem>>, vector<8x256xf32>
    %37 = tpu.transpose %36, [1, 0] : vector<8x256xf32> -> vector<256x8xf32>
    %c3072_37 = arith.constant 3072 : index
    %c0_38 = arith.constant 0 : index
    %38 = vector.load %arg2[%c3072_37, %c0_38] : memref<4096x8xf32, #tpu.memory_space<vmem>>, vector<256x8xf32>
    tpu.vector_store %arg2[%c3072_37, %c0_38], %37 {strides = array<i32>} : memref<4096x8xf32, #tpu.memory_space<vmem>>, vector<256x8xf32>,
    %c0_39 = arith.constant 0 : index
    %c3328 = arith.constant 3328 : index
    %39 = vector.load %arg1[%c0_39, %c3328] : memref<8x4096xf32, #tpu.memory_space<vmem>>, vector<8x256xf32>
    %40 = tpu.transpose %39, [1, 0] : vector<8x256xf32> -> vector<256x8xf32>
    %c3328_40 = arith.constant 3328 : index
    %c0_41 = arith.constant 0 : index
    %41 = vector.load %arg2[%c3328_40, %c0_41] : memref<4096x8xf32, #tpu.memory_space<vmem>>, vector<256x8xf32>
    tpu.vector_store %arg2[%c3328_40, %c0_41], %40 {strides = array<i32>} : memref<4096x8xf32, #tpu.memory_space<vmem>>, vector<256x8xf32>,
    %c0_42 = arith.constant 0 : index
    %c3584 = arith.constant 3584 : index
    %42 = vector.load %arg1[%c0_42, %c3584] : memref<8x4096xf32, #tpu.memory_space<vmem>>, vector<8x256xf32>
    %43 = tpu.transpose %42, [1, 0] : vector<8x256xf32> -> vector<256x8xf32>
    %c3584_43 = arith.constant 3584 : index
    %c0_44 = arith.constant 0 : index
    %44 = vector.load %arg2[%c3584_43, %c0_44] : memref<4096x8xf32, #tpu.memory_space<vmem>>, vector<256x8xf32>
    tpu.vector_store %arg2[%c3584_43, %c0_44], %43 {strides = array<i32>} : memref<4096x8xf32, #tpu.memory_space<vmem>>, vector<256x8xf32>,
    %c0_45 = arith.constant 0 : index
    %c3840 = arith.constant 3840 : index
    %45 = vector.load %arg1[%c0_45, %c3840] : memref<8x4096xf32, #tpu.memory_space<vmem>>, vector<8x256xf32>
    %46 = tpu.transpose %45, [1, 0] : vector<8x256xf32> -> vector<256x8xf32>
    %c3840_46 = arith.constant 3840 : index
    %c0_47 = arith.constant 0 : index
    %47 = vector.load %arg2[%c3840_46, %c0_47] : memref<4096x8xf32, #tpu.memory_space<vmem>>, vector<256x8xf32>
    tpu.vector_store %arg2[%c3840_46, %c0_47], %46 {strides = array<i32>} : memref<4096x8xf32, #tpu.memory_space<vmem>>, vector<256x8xf32>,
    return
  }
  func.func @transform_0(%arg0: i32) -> (i32, i32) {
    %c0_i32 = arith.constant 0 : i32
    %c0_i32_0 = arith.constant 0 : i32
    return %c0_i32, %arg0 : i32, i32
  }
  func.func @transform_1(%arg0: i32) -> (i32, i32) {
    %c0_i32 = arith.constant 0 : i32
    %c0_i32_0 = arith.constant 0 : i32
    return %arg0, %c0_i32 : i32, i32
  }
}

</mosaic_0001>

<llo_original>
// kernel: tpu_custom_call.1
$region0: #{tpu_custom_call.1}
  #allocation0 [shape = 'u32[]', space=smem, size = 0x4, offset = 0x4, fixed_abs, tag = 'smem constant byte address 0x4 - core index']
  #allocation1 [shape = 'u32[144,128]{1,0:T(1,128)}', space=vmem, size = 0x12000, scoped, tag = 'internal scratch']
  #allocation2 [shape = 'f32[512,8]{1,0:T(8,128)}', space=vmem, size = 0x40000, scoped, tag = 'scratch operand']
  %s0 = inlined_call_operand.hbm [shape: f32[8,4096], index: 0, kind: input, shape index: {}]
  %s1 = inlined_call_operand.hbm [shape: f32[256,128], index: 1, kind: output, shape index: {}]
  %s2 = sld [smem:[#allocation0]]
  $region41: #{tpu_custom_call.1} parent=0
    _
  %s4 = ssub.s32 1, %s2
  %s5 = scalar_select 0, %s4, %s2
  $region1: #{tpu_custom_call.1} parent=0
    #allocation3 [shape = 'u8[32768]{0}', space=vmem, size = 0x8000, scoped, tag = 'input window, operand 0']
    #allocation4 [shape = 's32[2]{0}', space=sflag, size = 0x8, scoped, tag = 'scoped memory for tpu_custom_call.1']
    #allocation5 [shape = 's32[2]{0}', space=sflag, size = 0x8, scoped, tag = 'scoped memory for tpu_custom_call.1']
    #allocation6 [shape = 'u8[32768]{0}', space=vmem, size = 0x8000, scoped, tag = 'output window, operand 0']
    %6 = vsyncpa [#allocation4], 0
    %s7 = scalar_lea.sflag [#allocation4], 1
    %8 = vsyncpa %s7, 0
    %9 = vsyncpa [#allocation5], 0
    %s10 = scalar_lea.sflag [#allocation5], 1
    %11 = vsyncpa %s10, 0
    loop: start=0, step=1, limit=10
    $region2: #{tpu_custom_call.1} parent=1 // loop_pre_header
      _
    $region3: #{tpu_custom_call.1} parent=1 // loop_header
      %s13 = sphi 0, %s17
      %p14 = scmp.ge.s32.totalorder %s13, 10
      %s23 = sphi 0, %s25
      %s26 = sphi 0, %s23
      %s27 = sphi 0, %s26
      %s43 = sphi 0, %s27
      %s49 = sphi 0, %s51
      %s52 = sphi 0, %s49
      %s53 = sphi 0, %s52
      %s69 = sphi 0, %s53
    $region4: #{tpu_custom_call.1} parent=1 // loop_header_branch
      %16 = sbr.rel (%p14) target = $region8
    $region5: #{tpu_custom_call.1} parent=1 // loop_body
      %s18 = ssub.s32 %s13, 1
      %s19 = ssub.s32 %s13, 2
      %s20 = sadd.s32 %s13, 1
      %s21 = ssub.s32 %s13, %s20
      %p22 = scmp.eq.s32.totalorder %s21, 0
      %s24 = sadd.s32 %s23, 1
      %s25 = scalar_select %p22, %s23, %s24
      %p28 = pneg %p22
      %p29 = scmp.eq.s32.totalorder %s13, 7
      %p30 = por %p28, %p29
      %p31 = scmp.ne.s32.totalorder %s23, %s26
      %p32 = scmp.eq.s32.totalorder %s13, 0
      %p33 = por %p31, %p32
      %p34 = scmp.ne.s32.totalorder %s23, %s26
      %p35 = scmp.eq.s32.totalorder %s18, 7
      %p36 = por %p34, %p35
      %p37 = scmp.ne.s32.totalorder %s26, %s27
      %p38 = scmp.eq.s32.totalorder %s18, 0
      %p39 = por %p37, %p38
      %p40 = scmp.ne.s32.totalorder %s26, %s27
      %p41 = scmp.eq.s32.totalorder %s19, 7
      %p42 = por %p40, %p41
      %p44 = scmp.ne.s32.totalorder %s27, %s43
      %p45 = scmp.eq.s32.totalorder %s19, 0
      %p46 = por %p44, %p45
      %s47 = ssub.s32 %s13, %s20
      %p48 = scmp.eq.s32.totalorder %s47, 0
      %s50 = sadd.s32 %s49, 1
      %s51 = scalar_select %p48, %s49, %s50
      %p54 = pneg %p48
      %p55 = scmp.eq.s32.totalorder %s13, 7
      %p56 = por %p54, %p55
      %p57 = scmp.ne.s32.totalorder %s49, %s52
      %p58 = scmp.eq.s32.totalorder %s13, 0
      %p59 = por %p57, %p58
      %p60 = scmp.ne.s32.totalorder %s49, %s52
      %p61 = scmp.eq.s32.totalorder %s18, 7
      %p62 = por %p60, %p61
      %p63 = scmp.ne.s32.totalorder %s52, %s53
      %p64 = scmp.eq.s32.totalorder %s18, 0
      %p65 = por %p63, %p64
      %p66 = scmp.ne.s32.totalorder %s52, %s53
      %p67 = scmp.eq.s32.totalorder %s19, 7
      %p68 = por %p66, %p67
      %p70 = scmp.ne.s32.totalorder %s53, %s69
      %p71 = scmp.eq.s32.totalorder %s19, 0
      %p72 = por %p70, %p71
      %p73 = scmp.le.s32.totalorder 1, %s13
      %p74 = scmp.lt.s32.totalorder %s13, 9
      %p75 = pnand %p73, %p74
      %p76 = pneg %p75
      // Predicated region
      $region9: #{tpu_custom_call.1} parent=5 // pred_check
        _
      $region10: #{tpu_custom_call.1} parent=5 // pred_check_branch
        %78 = sbr.rel (%p75) target = $region12
      $region11: #{tpu_custom_call.1} parent=5 // pred_region
        %s79 = ssub.s32 %s13, 1
      $region12: #{tpu_custom_call.1} parent=5 // pred_fallthru
        _
      %p80 = scmp.lt.s32.totalorder %s13, 8
      // Predicated region
      $region13: #{tpu_custom_call.1} parent=5 // pred_check
        %p81 = pneg %p80
      $region14: #{tpu_custom_call.1} parent=5 // pred_check_branch
        %83 = sbr.rel (%p81) target = $region16
      $region15: #{tpu_custom_call.1} parent=5 // pred_region
        // Predicated region
        $region17: #{tpu_custom_call.1} parent=15 // pred_check
          %p84 = pneg %p33
        $region18: #{tpu_custom_call.1} parent=15 // pred_check_branch
          %86 = sbr.rel (%p84) target = $region20
        $region19: #{tpu_custom_call.1} parent=15 // pred_region
          %s87 = sand.u32 %s23, 1
          %s88 = scalar_lea.sflag [#allocation4], %s87
          %s89 = sand.u32 %s23, 1
          %s90 = smul.addr %s89, 32
          %s91 = scalar_lea.vmem [#allocation3], %s90
          %s92 = smul.u32 4, %s13
          %s94 = ssub.s32 512, 512
          %95 = vsyncadd %s88, %s94
          %s96 = smul.addr %s92, 128
          %s97 = scalar_lea.hbm %s0, %s96
          %s99 = sshll.u32 %s91, 4
          %s100 = int_to_ptr.vmem [resolvable:$true] %s99
          %102 = dma.hbm_to_vmem [thread:$0]  %s97, 512, %s100, %s88
        $region20: #{tpu_custom_call.1} parent=15 // pred_fallthru
          _
      $region16: #{tpu_custom_call.1} parent=5 // pred_fallthru
        _
      %p103 = scmp.le.s32.totalorder 1, %s13
      %p104 = scmp.lt.s32.totalorder %s13, 9
      %p105 = pnand %p103, %p104
      %p106 = pneg %p105
      // Predicated region
      $region21: #{tpu_custom_call.1} parent=5 // pred_check
        _
      $region22: #{tpu_custom_call.1} parent=5 // pred_check_branch
        %108 = sbr.rel (%p105) target = $region24
      $region23: #{tpu_custom_call.1} parent=5 // pred_region
        %s109 = ssub.s32 %s13, 1
        %s110 = sand.u32 %s26, 1
        %s111 = scalar_lea.sflag [#allocation4], %s110
        %s112 = sand.u32 %s26, 1
        %s113 = smul.addr %s112, 32
        %s114 = scalar_lea.vmem [#allocation3], %s113
        // Predicated region
        $region25: #{tpu_custom_call.1} parent=23 // pred_check
          %p115 = pneg %p39
        $region26: #{tpu_custom_call.1} parent=23 // pred_check_branch
          %117 = sbr.rel (%p115) target = $region28
        $region27: #{tpu_custom_call.1} parent=23 // pred_region
          %118 = dma.done %s111, 512
        $region28: #{tpu_custom_call.1} parent=23 // pred_fallthru
          _
        %s119 = sand.u32 %s26, 1
        %s120 = scalar_lea.sflag [#allocation4], %s119
        %s121 = sand.u32 %s26, 1
        %s122 = smul.addr %s121, 32
        %s123 = scalar_lea.vmem [#allocation3], %s122
        %p124 = pneg %p39
        %p125 = pneg %p36
        %p126 = pneg %p65
        %p127 = pneg %p62
        %s128 = sand.u32 %s52, 1
        %s129 = scalar_lea.sflag [#allocation5], %s128
        %s130 = sand.u32 %s52, 1
        %s131 = smul.addr %s130, 32
        %s132 = scalar_lea.vmem [#allocation6], %s131
        %s133 = smul.u32 4, %s18
        %s134 = smul.u32 4, %s18
        %v135 = vld [vmem:[%s114] sm:$0xff]
        %v136 = vld [vmem:[%s114 + $0x8] sm:$0xff]
        %137 = vxpose.xlu0.b32.start [1/16] %v135, 128
        %138 = vxpose.xlu0.b32.cont [2/16] 0.0, 128
        %139 = vxpose.xlu0.b32.cont [3/16] 0.0, 128
        %140 = vxpose.xlu0.b32.cont [4/16] 0.0, 128
        %141 = vxpose.xlu0.b32.cont [5/16] 0.0, 128
        %142 = vxpose.xlu0.b32.cont [6/16] 0.0, 128
        %143 = vxpose.xlu0.b32.cont [7/16] 0.0, 128
        %144 = vxpose.xlu0.b32.cont [8/16] 0.0, 128
        %145 = vxpose.xlu0.b32.cont [9/16] 0.0, 128
        %146 = vxpose.xlu0.b32.cont [10/16] 0.0, 128
        %147 = vxpose.xlu0.b32.cont [11/16] 0.0, 128
        %148 = vxpose.xlu0.b32.cont [12/16] 0.0, 128
        %149 = vxpose.xlu0.b32.cont [13/16] 0.0, 128
        %150 = vxpose.xlu0.b32.cont [14/16] 0.0, 128
        %151 = vxpose.xlu0.b32.cont [15/16] 0.0, 128
        %152 = vxpose.xlu0.b32.end [16/16] 0.0, 128
        %v153 = vpop.trf.xlu0
        %v154 = vpop.trf.xlu0
        %v155 = vpop.trf.xlu0
        %v156 = vpop.trf.xlu0
        %v157 = vpop.trf.xlu0
        %v158 = vpop.trf.xlu0
        %v159 = vpop.trf.xlu0
        %v160 = vpop.trf.xlu0
        %v161 = vpop.trf.xlu0
        %v162 = vpop.trf.xlu0
        %v163 = vpop.trf.xlu0
        %v164 = vpop.trf.xlu0
        %v165 = vpop.trf.xlu0
        %v166 = vpop.trf.xlu0
        %v167 = vpop.trf.xlu0
        %v168 = vpop.trf.xlu0
        %169 = vxpose.xlu0.b32.start [1/16] %v136, 128
        %170 = vxpose.xlu0.b32.cont [2/16] 0.0, 128
        %171 = vxpose.xlu0.b32.cont [3/16] 0.0, 128
        %172 = vxpose.xlu0.b32.cont [4/16] 0.0, 128
        %173 = vxpose.xlu0.b32.cont [5/16] 0.0, 128
        %174 = vxpose.xlu0.b32.cont [6/16] 0.0, 128
        %175 = vxpose.xlu0.b32.cont [7/16] 0.0, 128
        %176 = vxpose.xlu0.b32.cont [8/16] 0.0, 128
        %177 = vxpose.xlu0.b32.cont [9/16] 0.0, 128
        %178 = vxpose.xlu0.b32.cont [10/16] 0.0, 128
        %179 = vxpose.xlu0.b32.cont [11/16] 0.0, 128
        %180 = vxpose.xlu0.b32.cont [12/16] 0.0, 128
        %181 = vxpose.xlu0.b32.cont [13/16] 0.0, 128
        %182 = vxpose.xlu0.b32.cont [14/16] 0.0, 128
        %183 = vxpose.xlu0.b32.cont [15/16] 0.0, 128
        %184 = vxpose.xlu0.b32.end [16/16] 0.0, 128
        %v185 = vpop.trf.xlu0
        %v186 = vpop.trf.xlu0
        %v187 = vpop.trf.xlu0
        %v188 = vpop.trf.xlu0
        %v189 = vpop.trf.xlu0
        %v190 = vpop.trf.xlu0
        %v191 = vpop.trf.xlu0
        %v192 = vpop.trf.xlu0
        %v193 = vpop.trf.xlu0
        %v194 = vpop.trf.xlu0
        %v195 = vpop.trf.xlu0
        %v196 = vpop.trf.xlu0
        %v197 = vpop.trf.xlu0
        %v198 = vpop.trf.xlu0
        %v199 = vpop.trf.xlu0
        %v200 = vpop.trf.xlu0
        %vm201 = vcmask 64512
        %202 = vst.msk [vmem:[#allocation2] sm:$0xff] %vm201, %v153
        %203 = vst.msk [vmem:[#allocation2 + $0x8] sm:$0xff] %vm201, %v154
        %204 = vst.msk [vmem:[#allocation2 + $0x10] sm:$0xff] %vm201, %v155
        %205 = vst.msk [vmem:[#allocation2 + $0x18] sm:$0xff] %vm201, %v156
        %206 = vst.msk [vmem:[#allocation2 + $0x20] sm:$0xff] %vm201, %v157
        %207 = vst.msk [vmem:[#allocation2 + $0x28] sm:$0xff] %vm201, %v158
        %208 = vst.msk [vmem:[#allocation2 + $0x30] sm:$0xff] %vm201, %v159
        %209 = vst.msk [vmem:[#allocation2 + $0x38] sm:$0xff] %vm201, %v160
        %210 = vst.msk [vmem:[#allocation2 + $0x40] sm:$0xff] %vm201, %v161
        %211 = vst.msk [vmem:[#allocation2 + $0x48] sm:$0xff] %vm201, %v162
        %212 = vst.msk [vmem:[#allocation2 + $0x50] sm:$0xff] %vm201, %v163
        %213 = vst.msk [vmem:[#allocation2 + $0x58] sm:$0xff] %vm201, %v164
        %214 = vst.msk [vmem:[#allocation2 + $0x60] sm:$0xff] %vm201, %v165
        %215 = vst.msk [vmem:[#allocation2 + $0x68] sm:$0xff] %vm201, %v166
        %216 = vst.msk [vmem:[#allocation2 + $0x70] sm:$0xff] %vm201, %v167
        %217 = vst.msk [vmem:[#allocation2 + $0x78] sm:$0xff] %vm201, %v168
        %218 = vst.msk [vmem:[#allocation2 + $0x80] sm:$0xff] %vm201, %v185
        %219 = vst.msk [vmem:[#allocation2 + $0x88] sm:$0xff] %vm201, %v186
        %220 = vst.msk [vmem:[#allocation2 + $0x90] sm:$0xff] %vm201, %v187
        %221 = vst.msk [vmem:[#allocation2 + $0x98] sm:$0xff] %vm201, %v188
        %222 = vst.msk [vmem:[#allocation2 + $0xa0] sm:$0xff] %vm201, %v189
        %223 = vst.msk [vmem:[#allocation2 + $0xa8] sm:$0xff] %vm201, %v190
        %224 = vst.msk [vmem:[#allocation2 + $0xb0] sm:$0xff] %vm201, %v191
        %225 = vst.msk [vmem:[#allocation2 + $0xb8] sm:$0xff] %vm201, %v192
        %226 = vst.msk [vmem:[#allocation2 + $0xc0] sm:$0xff] %vm201, %v193
        %227 = vst.msk [vmem:[#allocation2 + $0xc8] sm:$0xff] %vm201, %v194
        %228 = vst.msk [vmem:[#allocation2 + $0xd0] sm:$0xff] %vm201, %v195
        %229 = vst.msk [vmem:[#allocation2 + $0xd8] sm:$0xff] %vm201, %v196
        %230 = vst.msk [vmem:[#allocation2 + $0xe0] sm:$0xff] %vm201, %v197
        %231 = vst.msk [vmem:[#allocation2 + $0xe8] sm:$0xff] %vm201, %v198
        %232 = vst.msk [vmem:[#allocation2 + $0xf0] sm:$0xff] %vm201, %v199
        %233 = vst.msk [vmem:[#allocation2 + $0xf8] sm:$0xff] %vm201, %v200
        %v234 = vld [vmem:[%s114 + $0x10] sm:$0xff]
        %v235 = vld [vmem:[%s114 + $0x18] sm:$0xff]
        %236 = vxpose.xlu0.b32.start [1/16] %v234, 128
        %237 = vxpose.xlu0.b32.cont [2/16] 0.0, 128
        %238 = vxpose.xlu0.b32.cont [3/16] 0.0, 128
        %239 = vxpose.xlu0.b32.cont [4/16] 0.0, 128
        %240 = vxpose.xlu0.b32.cont [5/16] 0.0, 128
        %241 = vxpose.xlu0.b32.cont [6/16] 0.0, 128
        %242 = vxpose.xlu0.b32.cont [7/16] 0.0, 128
        %243 = vxpose.xlu0.b32.cont [8/16] 0.0, 128
        %244 = vxpose.xlu0.b32.cont [9/16] 0.0, 128
        %245 = vxpose.xlu0.b32.cont [10/16] 0.0, 128
        %246 = vxpose.xlu0.b32.cont [11/16] 0.0, 128
        %247 = vxpose.xlu0.b32.cont [12/16] 0.0, 128
        %248 = vxpose.xlu0.b32.cont [13/16] 0.0, 128
        %249 = vxpose.xlu0.b32.cont [14/16] 0.0, 128
        %250 = vxpose.xlu0.b32.cont [15/16] 0.0, 128
        %251 = vxpose.xlu0.b32.end [16/16] 0.0, 128
        %v252 = vpop.trf.xlu0
        %v253 = vpop.trf.xlu0
        %v254 = vpop.trf.xlu0
        %v255 = vpop.trf.xlu0
        %v256 = vpop.trf.xlu0
        %v257 = vpop.trf.xlu0
        %v258 = vpop.trf.xlu0
        %v259 = vpop.trf.xlu0
        %v260 = vpop.trf.xlu0
        %v261 = vpop.trf.xlu0
        %v262 = vpop.trf.xlu0
        %v263 = vpop.trf.xlu0
        %v264 = vpop.trf.xlu0
        %v265 = vpop.trf.xlu0
        %v266 = vpop.trf.xlu0
        %v267 = vpop.trf.xlu0
        %268 = vxpose.xlu0.b32.start [1/16] %v235, 128
        %269 = vxpose.xlu0.b32.cont [2/16] 0.0, 128
        %270 = vxpose.xlu0.b32.cont [3/16] 0.0, 128
        %271 = vxpose.xlu0.b32.cont [4/16] 0.0, 128
        %272 = vxpose.xlu0.b32.cont [5/16] 0.0, 128
        %273 = vxpose.xlu0.b32.cont [6/16] 0.0, 128
        %274 = vxpose.xlu0.b32.cont [7/16] 0.0, 128
        %275 = vxpose.xlu0.b32.cont [8/16] 0.0, 128
        %276 = vxpose.xlu0.b32.cont [9/16] 0.0, 128
        %277 = vxpose.xlu0.b32.cont [10/16] 0.0, 128
        %278 = vxpose.xlu0.b32.cont [11/16] 0.0, 128
        %279 = vxpose.xlu0.b32.cont [12/16] 0.0, 128
        %280 = vxpose.xlu0.b32.cont [13/16] 0.0, 128
        %281 = vxpose.xlu0.b32.cont [14/16] 0.0, 128
        %282 = vxpose.xlu0.b32.cont [15/16] 0.0, 128
        %283 = vxpose.xlu0.b32.end [16/16] 0.0, 128
        %v284 = vpop.trf.xlu0
        %v285 = vpop.trf.xlu0
        %v286 = vpop.trf.xlu0
        %v287 = vpop.trf.xlu0
        %v288 = vpop.trf.xlu0
        %v289 = vpop.trf.xlu0
        %v290 = vpop.trf.xlu0
        %v291 = vpop.trf.xlu0
        %v292 = vpop.trf.xlu0
        %v293 = vpop.trf.xlu0
        %v294 = vpop.trf.xlu0
        %v295 = vpop.trf.xlu0
        %v296 = vpop.trf.xlu0
        %v297 = vpop.trf.xlu0
        %v298 = vpop.trf.xlu0
        %v299 = vpop.trf.xlu0
        %300 = vst.msk [vmem:[#allocation2 + $0x100] sm:$0xff] %vm201, %v252
        %301 = vst.msk [vmem:[#allocation2 + $0x108] sm:$0xff] %vm201, %v253
        %302 = vst.msk [vmem:[#allocation2 + $0x110] sm:$0xff] %vm201, %v254
        %303 = vst.msk [vmem:[#allocation2 + $0x118] sm:$0xff] %vm201, %v255
        %304 = vst.msk [vmem:[#allocation2 + $0x120] sm:$0xff] %vm201, %v256
        %305 = vst.msk [vmem:[#allocation2 + $0x128] sm:$0xff] %vm201, %v257
        %306 = vst.msk [vmem:[#allocation2 + $0x130] sm:$0xff] %vm201, %v258
        %307 = vst.msk [vmem:[#allocation2 + $0x138] sm:$0xff] %vm201, %v259
        %308 = vst.msk [vmem:[#allocation2 + $0x140] sm:$0xff] %vm201, %v260
        %309 = vst.msk [vmem:[#allocation2 + $0x148] sm:$0xff] %vm201, %v261
        %310 = vst.msk [vmem:[#allocation2 + $0x150] sm:$0xff] %vm201, %v262
        %311 = vst.msk [vmem:[#allocation2 + $0x158] sm:$0xff] %vm201, %v263
        %312 = vst.msk [vmem:[#allocation2 + $0x160] sm:$0xff] %vm201, %v264
        %313 = vst.msk [vmem:[#allocation2 + $0x168] sm:$0xff] %vm201, %v265
        %314 = vst.msk [vmem:[#allocation2 + $0x170] sm:$0xff] %vm201, %v266
        %315 = vst.msk [vmem:[#allocation2 + $0x178] sm:$0xff] %vm201, %v267
        %316 = vst.msk [vmem:[#allocation2 + $0x180] sm:$0xff] %vm201, %v284
        %317 = vst.msk [vmem:[#allocation2 + $0x188] sm:$0xff] %vm201, %v285
        %318 = vst.msk [vmem:[#allocation2 + $0x190] sm:$0xff] %vm201, %v286
        %319 = vst.msk [vmem:[#allocation2 + $0x198] sm:$0xff] %vm201, %v287
        %320 = vst.msk [vmem:[#allocation2 + $0x1a0] sm:$0xff] %vm201, %v288
        %321 = vst.msk [vmem:[#allocation2 + $0x1a8] sm:$0xff] %vm201, %v289
        %322 = vst.msk [vmem:[#allocation2 + $0x1b0] sm:$0xff] %vm201, %v290
        %323 = vst.msk [vmem:[#allocation2 + $0x1b8] sm:$0xff] %vm201, %v291
        %324 = vst.msk [vmem:[#allocation2 + $0x1c0] sm:$0xff] %vm201, %v292
        %325 = vst.msk [vmem:[#allocation2 + $0x1c8] sm:$0xff] %vm201, %v293
        %326 = vst.msk [vmem:[#allocation2 + $0x1d0] sm:$0xff] %vm201, %v294
        %327 = vst.msk [vmem:[#allocation2 + $0x1d8] sm:$0xff] %vm201, %v295
        %328 = vst.msk [vmem:[#allocation2 + $0x1e0] sm:$0xff] %vm201, %v296
        %329 = vst.msk [vmem:[#allocation2 + $0x1e8] sm:$0xff] %vm201, %v297
        %330 = vst.msk [vmem:[#allocation2 + $0x1f0] sm:$0xff] %vm201, %v298
        %331 = vst.msk [vmem:[#allocation2 + $0x1f8] sm:$0xff] %vm201, %v299
        %v332 = vld [vmem:[#allocation2] ss:$16 sm:$0x3]
        %v333 = vld [vmem:[#allocation2] ss:$16 sm:$0xc]
        %v334 = vor.u32 %v332, %v333
        %v335 = vld [vmem:[#allocation2] ss:$16 sm:$0x30]
        %v336 = vor.u32 %v334, %v335
        %v337 = vld [vmem:[#allocation2] ss:$16 sm:$0xc0]
        %v338 = vor.u32 %v336, %v337
        %s339 = scalar_lea.vmem [#allocation2], 128
        %v340 = vld [vmem:[%s339] ss:$16 sm:$0x3]
        %v341 = vld [vmem:[%s339] ss:$16 sm:$0xc]
        %v342 = vor.u32 %v340, %v341
        %v343 = vld [vmem:[%s339] ss:$16 sm:$0x30]
        %v344 = vor.u32 %v342, %v343
        %v345 = vld [vmem:[%s339] ss:$16 sm:$0xc0]
        %v346 = vor.u32 %v344, %v345
        %s347 = scalar_lea.vmem [#allocation2], 256
        %v348 = vld [vmem:[%s347] ss:$16 sm:$0x3]
        %v349 = vld [vmem:[%s347] ss:$16 sm:$0xc]
        %v350 = vor.u32 %v348, %v349
        %v351 = vld [vmem:[%s347] ss:$16 sm:$0x30]
        %v352 = vor.u32 %v350, %v351
        %v353 = vld [vmem:[%s347] ss:$16 sm:$0xc0]
        %v354 = vor.u32 %v352, %v353
        %s355 = scalar_lea.vmem [#allocation2], 384
        %v356 = vld [vmem:[%s355] ss:$16 sm:$0x3]
        %v357 = vld [vmem:[%s355] ss:$16 sm:$0xc]
        %v358 = vor.u32 %v356, %v357
        %v359 = vld [vmem:[%s355] ss:$16 sm:$0x30]
        %v360 = vor.u32 %v358, %v359
        %v361 = vld [vmem:[%s355] ss:$16 sm:$0xc0]
        %v362 = vor.u32 %v360, %v361
        %363 = vst.msk [vmem:[%s132] sm:$0xff] %vm201, %v338
        %364 = vst.msk [vmem:[%s132 + $0x8] sm:$0xff] %vm201, %v346
        %365 = vst.msk [vmem:[%s132 + $0x10] sm:$0xff] %vm201, %v354
        %366 = vst.msk [vmem:[%s132 + $0x18] sm:$0xff] %vm201, %v362
        %s367 = scalar_lea.vmem [#allocation2], 1
        %v368 = vld [vmem:[%s367] ss:$16 sm:$0x3]
        %v369 = vld [vmem:[%s367] ss:$16 sm:$0xc]
        %v370 = vor.u32 %v368, %v369
        %v371 = vld [vmem:[%s367] ss:$16 sm:$0x30]
        %v372 = vor.u32 %v370, %v371
        %v373 = vld [vmem:[%s367] ss:$16 sm:$0xc0]
        %v374 = vor.u32 %v372, %v373
        %s375 = scalar_lea.vmem [#allocation2], 129
        %v376 = vld [vmem:[%s375] ss:$16 sm:$0x3]
        %v377 = vld [vmem:[%s375] ss:$16 sm:$0xc]
        %v378 = vor.u32 %v376, %v377
        %v379 = vld [vmem:[%s375] ss:$16 sm:$0x30]
        %v380 = vor.u32 %v378, %v379
        %v381 = vld [vmem:[%s375] ss:$16 sm:$0xc0]
        %v382 = vor.u32 %v380, %v381
        %s383 = scalar_lea.vmem [#allocation2], 257
        %v384 = vld [vmem:[%s383] ss:$16 sm:$0x3]
        %v385 = vld [vmem:[%s383] ss:$16 sm:$0xc]
        %v386 = vor.u32 %v384, %v385
        %v387 = vld [vmem:[%s383] ss:$16 sm:$0x30]
        %v388 = vor.u32 %v386, %v387
        %v389 = vld [vmem:[%s383] ss:$16 sm:$0xc0]
        %v390 = vor.u32 %v388, %v389
        %s391 = scalar_lea.vmem [#allocation2], 385
        %v392 = vld [vmem:[%s391] ss:$16 sm:$0x3]
        %v393 = vld [vmem:[%s391] ss:$16 sm:$0xc]
        %v394 = vor.u32 %v392, %v393
        %v395 = vld [vmem:[%s391] ss:$16 sm:$0x30]
        %v396 = vor.u32 %v394, %v395
        %v397 = vld [vmem:[%s391] ss:$16 sm:$0xc0]
        %v398 = vor.u32 %v396, %v397
        %403 = vrot.lane.b32.xlu0 %v374, 8
        %v404 = vpop.permute.xlu0 %403
        %405 = vrot.lane.b32.xlu0 %v382, 8
        %v406 = vpop.permute.xlu0 %405
        %407 = vrot.lane.b32.xlu0 %v390, 8
        %v408 = vpop.permute.xlu0 %407
        %409 = vrot.lane.b32.xlu0 %v398, 8
        %v410 = vpop.permute.xlu0 %409
        %vm415 = vcmask 130112
        %416 = vst.msk [vmem:[%s132] sm:$0xff] %vm415, %v404
        %417 = vst.msk [vmem:[%s132 + $0x8] sm:$0xff] %vm415, %v406
        %418 = vst.msk [vmem:[%s132 + $0x10] sm:$0xff] %vm415, %v408
        %419 = vst.msk [vmem:[%s132 + $0x18] sm:$0xff] %vm415, %v410
        %s420 = scalar_lea.vmem [#allocation2], 2
        %v421 = vld [vmem:[%s420] ss:$16 sm:$0x3]
        %v422 = vld [vmem:[%s420] ss:$16 sm:$0xc]
        %v423 = vor.u32 %v421, %v422
        %v424 = vld [vmem:[%s420] ss:$16 sm:$0x30]
        %v425 = vor.u32 %v423, %v424
        %v426 = vld [vmem:[%s420] ss:$16 sm:$0xc0]
        %v427 = vor.u32 %v425, %v426
        %s428 = scalar_lea.vmem [#allocation2], 130
        %v429 = vld [vmem:[%s428] ss:$16 sm:$0x3]
        %v430 = vld [vmem:[%s428] ss:$16 sm:$0xc]
        %v431 = vor.u32 %v429, %v430
        %v432 = vld [vmem:[%s428] ss:$16 sm:$0x30]
        %v433 = vor.u32 %v431, %v432
        %v434 = vld [vmem:[%s428] ss:$16 sm:$0xc0]
        %v435 = vor.u32 %v433, %v434
        %s436 = scalar_lea.vmem [#allocation2], 258
        %v437 = vld [vmem:[%s436] ss:$16 sm:$0x3]
        %v438 = vld [vmem:[%s436] ss:$16 sm:$0xc]
        %v439 = vor.u32 %v437, %v438
        %v440 = vld [vmem:[%s436] ss:$16 sm:$0x30]
        %v441 = vor.u32 %v439, %v440
        %v442 = vld [vmem:[%s436] ss:$16 sm:$0xc0]
        %v443 = vor.u32 %v441, %v442
        %s444 = scalar_lea.vmem [#allocation2], 386
        %v445 = vld [vmem:[%s444] ss:$16 sm:$0x3]
        %v446 = vld [vmem:[%s444] ss:$16 sm:$0xc]
        %v447 = vor.u32 %v445, %v446
        %v448 = vld [vmem:[%s444] ss:$16 sm:$0x30]
        %v449 = vor.u32 %v447, %v448
        %v450 = vld [vmem:[%s444] ss:$16 sm:$0xc0]
        %v451 = vor.u32 %v449, %v450
        %456 = vrot.lane.b32.xlu0 %v427, 16
        %v457 = vpop.permute.xlu0 %456
        %458 = vrot.lane.b32.xlu0 %v435, 16
        %v459 = vpop.permute.xlu0 %458
        %460 = vrot.lane.b32.xlu0 %v443, 16
        %v461 = vpop.permute.xlu0 %460
        %462 = vrot.lane.b32.xlu0 %v451, 16
        %v463 = vpop.permute.xlu0 %462
        %vm468 = vcmask 195712
        %469 = vst.msk [vmem:[%s132] sm:$0xff] %vm468, %v457
        %470 = vst.msk [vmem:[%s132 + $0x8] sm:$0xff] %vm468, %v459
        %471 = vst.msk [vmem:[%s132 + $0x10] sm:$0xff] %vm468, %v461
        %472 = vst.msk [vmem:[%s132 + $0x18] sm:$0xff] %vm468, %v463
        %s473 = scalar_lea.vmem [#allocation2], 3
        %v474 = vld [vmem:[%s473] ss:$16 sm:$0x3]
        %v475 = vld [vmem:[%s473] ss:$16 sm:$0xc]
        %v476 = vor.u32 %v474, %v475
        %v477 = vld [vmem:[%s473] ss:$16 sm:$0x30]
        %v478 = vor.u32 %v476, %v477
        %v479 = vld [vmem:[%s473] ss:$16 sm:$0xc0]
        %v480 = vor.u32 %v478, %v479
        %s481 = scalar_lea.vmem [#allocation2], 131
        %v482 = vld [vmem:[%s481] ss:$16 sm:$0x3]
        %v483 = vld [vmem:[%s481] ss:$16 sm:$0xc]
        %v484 = vor.u32 %v482, %v483
        %v485 = vld [vmem:[%s481] ss:$16 sm:$0x30]
        %v486 = vor.u32 %v484, %v485
        %v487 = vld [vmem:[%s481] ss:$16 sm:$0xc0]
        %v488 = vor.u32 %v486, %v487
        %s489 = scalar_lea.vmem [#allocation2], 259
        %v490 = vld [vmem:[%s489] ss:$16 sm:$0x3]
        %v491 = vld [vmem:[%s489] ss:$16 sm:$0xc]
        %v492 = vor.u32 %v490, %v491
        %v493 = vld [vmem:[%s489] ss:$16 sm:$0x30]
        %v494 = vor.u32 %v492, %v493
        %v495 = vld [vmem:[%s489] ss:$16 sm:$0xc0]
        %v496 = vor.u32 %v494, %v495
        %s497 = scalar_lea.vmem [#allocation2], 387
        %v498 = vld [vmem:[%s497] ss:$16 sm:$0x3]
        %v499 = vld [vmem:[%s497] ss:$16 sm:$0xc]
        %v500 = vor.u32 %v498, %v499
        %v501 = vld [vmem:[%s497] ss:$16 sm:$0x30]
        %v502 = vor.u32 %v500, %v501
        %v503 = vld [vmem:[%s497] ss:$16 sm:$0xc0]
        %v504 = vor.u32 %v502, %v503
        %509 = vrot.lane.b32.xlu0 %v480, 24
        %v510 = vpop.permute.xlu0 %509
        %511 = vrot.lane.b32.xlu0 %v488, 24
        %v512 = vpop.permute.xlu0 %511
        %513 = vrot.lane.b32.xlu0 %v496, 24
        %v514 = vpop.permute.xlu0 %513
        %515 = vrot.lane.b32.xlu0 %v504, 24
        %v516 = vpop.permute.xlu0 %515
        %vm521 = vcmask 261312
        %522 = vst.msk [vmem:[%s132] sm:$0xff] %vm521, %v510
        %523 = vst.msk [vmem:[%s132 + $0x8] sm:$0xff] %vm521, %v512
        %524 = vst.msk [vmem:[%s132 + $0x10] sm:$0xff] %vm521, %v514
        %525 = vst.msk [vmem:[%s132 + $0x18] sm:$0xff] %vm521, %v516
        %s526 = scalar_lea.vmem [#allocation2], 4
        %v527 = vld [vmem:[%s526] ss:$16 sm:$0x3]
        %v528 = vld [vmem:[%s526] ss:$16 sm:$0xc]
        %v529 = vor.u32 %v527, %v528
        %v530 = vld [vmem:[%s526] ss:$16 sm:$0x30]
        %v531 = vor.u32 %v529, %v530
        %v532 = vld [vmem:[%s526] ss:$16 sm:$0xc0]
        %v533 = vor.u32 %v531, %v532
        %s534 = scalar_lea.vmem [#allocation2], 132
        %v535 = vld [vmem:[%s534] ss:$16 sm:$0x3]
        %v536 = vld [vmem:[%s534] ss:$16 sm:$0xc]
        %v537 = vor.u32 %v535, %v536
        %v538 = vld [vmem:[%s534] ss:$16 sm:$0x30]
        %v539 = vor.u32 %v537, %v538
        %v540 = vld [vmem:[%s534] ss:$16 sm:$0xc0]
        %v541 = vor.u32 %v539, %v540
        %s542 = scalar_lea.vmem [#allocation2], 260
        %v543 = vld [vmem:[%s542] ss:$16 sm:$0x3]
        %v544 = vld [vmem:[%s542] ss:$16 sm:$0xc]
        %v545 = vor.u32 %v543, %v544
        %v546 = vld [vmem:[%s542] ss:$16 sm:$0x30]
        %v547 = vor.u32 %v545, %v546
        %v548 = vld [vmem:[%s542] ss:$16 sm:$0xc0]
        %v549 = vor.u32 %v547, %v548
        %s550 = scalar_lea.vmem [#allocation2], 388
        %v551 = vld [vmem:[%s550] ss:$16 sm:$0x3]
        %v552 = vld [vmem:[%s550] ss:$16 sm:$0xc]
        %v553 = vor.u32 %v551, %v552
        %v554 = vld [vmem:[%s550] ss:$16 sm:$0x30]
        %v555 = vor.u32 %v553, %v554
        %v556 = vld [vmem:[%s550] ss:$16 sm:$0xc0]
        %v557 = vor.u32 %v555, %v556
        %562 = vrot.lane.b32.xlu0 %v533, 32
        %v563 = vpop.permute.xlu0 %562
        %564 = vrot.lane.b32.xlu0 %v541, 32
        %v565 = vpop.permute.xlu0 %564
        %566 = vrot.lane.b32.xlu0 %v549, 32
        %v567 = vpop.permute.xlu0 %566
        %568 = vrot.lane.b32.xlu0 %v557, 32
        %v569 = vpop.permute.xlu0 %568
        %vm574 = vcmask 326912
        %575 = vst.msk [vmem:[%s132] sm:$0xff] %vm574, %v563
        %576 = vst.msk [vmem:[%s132 + $0x8] sm:$0xff] %vm574, %v565
        %577 = vst.msk [vmem:[%s132 + $0x10] sm:$0xff] %vm574, %v567
        %578 = vst.msk [vmem:[%s132 + $0x18] sm:$0xff] %vm574, %v569
        %s579 = scalar_lea.vmem [#allocation2], 5
        %v580 = vld [vmem:[%s579] ss:$16 sm:$0x3]
        %v581 = vld [vmem:[%s579] ss:$16 sm:$0xc]
        %v582 = vor.u32 %v580, %v581
        %v583 = vld [vmem:[%s579] ss:$16 sm:$0x30]
        %v584 = vor.u32 %v582, %v583
        %v585 = vld [vmem:[%s579] ss:$16 sm:$0xc0]
        %v586 = vor.u32 %v584, %v585
        %s587 = scalar_lea.vmem [#allocation2], 133
        %v588 = vld [vmem:[%s587] ss:$16 sm:$0x3]
        %v589 = vld [vmem:[%s587] ss:$16 sm:$0xc]
        %v590 = vor.u32 %v588, %v589
        %v591 = vld [vmem:[%s587] ss:$16 sm:$0x30]
        %v592 = vor.u32 %v590, %v591
        %v593 = vld [vmem:[%s587] ss:$16 sm:$0xc0]
        %v594 = vor.u32 %v592, %v593
        %s595 = scalar_lea.vmem [#allocation2], 261
        %v596 = vld [vmem:[%s595] ss:$16 sm:$0x3]
        %v597 = vld [vmem:[%s595] ss:$16 sm:$0xc]
        %v598 = vor.u32 %v596, %v597
        %v599 = vld [vmem:[%s595] ss:$16 sm:$0x30]
        %v600 = vor.u32 %v598, %v599
        %v601 = vld [vmem:[%s595] ss:$16 sm:$0xc0]
        %v602 = vor.u32 %v600, %v601
        %s603 = scalar_lea.vmem [#allocation2], 389
        %v604 = vld [vmem:[%s603] ss:$16 sm:$0x3]
        %v605 = vld [vmem:[%s603] ss:$16 sm:$0xc]
        %v606 = vor.u32 %v604, %v605
        %v607 = vld [vmem:[%s603] ss:$16 sm:$0x30]
        %v608 = vor.u32 %v606, %v607
        %v609 = vld [vmem:[%s603] ss:$16 sm:$0xc0]
        %v610 = vor.u32 %v608, %v609
        %615 = vrot.lane.b32.xlu0 %v586, 40
        %v616 = vpop.permute.xlu0 %615
        %617 = vrot.lane.b32.xlu0 %v594, 40
        %v618 = vpop.permute.xlu0 %617
        %619 = vrot.lane.b32.xlu0 %v602, 40
        %v620 = vpop.permute.xlu0 %619
        %621 = vrot.lane.b32.xlu0 %v610, 40
        %v622 = vpop.permute.xlu0 %621
        %vm627 = vcmask 392512
        %628 = vst.msk [vmem:[%s132] sm:$0xff] %vm627, %v616
        %629 = vst.msk [vmem:[%s132 + $0x8] sm:$0xff] %vm627, %v618
        %630 = vst.msk [vmem:[%s132 + $0x10] sm:$0xff] %vm627, %v620
        %631 = vst.msk [vmem:[%s132 + $0x18] sm:$0xff] %vm627, %v622
        %s632 = scalar_lea.vmem [#allocation2], 6
        %v633 = vld [vmem:[%s632] ss:$16 sm:$0x3]
        %v634 = vld [vmem:[%s632] ss:$16 sm:$0xc]
        %v635 = vor.u32 %v633, %v634
        %v636 = vld [vmem:[%s632] ss:$16 sm:$0x30]
        %v637 = vor.u32 %v635, %v636
        %v638 = vld [vmem:[%s632] ss:$16 sm:$0xc0]
        %v639 = vor.u32 %v637, %v638
        %s640 = scalar_lea.vmem [#allocation2], 134
        %v641 = vld [vmem:[%s640] ss:$16 sm:$0x3]
        %v642 = vld [vmem:[%s640] ss:$16 sm:$0xc]
        %v643 = vor.u32 %v641, %v642
        %v644 = vld [vmem:[%s640] ss:$16 sm:$0x30]
        %v645 = vor.u32 %v643, %v644
        %v646 = vld [vmem:[%s640] ss:$16 sm:$0xc0]
        %v647 = vor.u32 %v645, %v646
        %s648 = scalar_lea.vmem [#allocation2], 262
        %v649 = vld [vmem:[%s648] ss:$16 sm:$0x3]
        %v650 = vld [vmem:[%s648] ss:$16 sm:$0xc]
        %v651 = vor.u32 %v649, %v650
        %v652 = vld [vmem:[%s648] ss:$16 sm:$0x30]
        %v653 = vor.u32 %v651, %v652
        %v654 = vld [vmem:[%s648] ss:$16 sm:$0xc0]
        %v655 = vor.u32 %v653, %v654
        %s656 = scalar_lea.vmem [#allocation2], 390
        %v657 = vld [vmem:[%s656] ss:$16 sm:$0x3]
        %v658 = vld [vmem:[%s656] ss:$16 sm:$0xc]
        %v659 = vor.u32 %v657, %v658
        %v660 = vld [vmem:[%s656] ss:$16 sm:$0x30]
        %v661 = vor.u32 %v659, %v660
        %v662 = vld [vmem:[%s656] ss:$16 sm:$0xc0]
        %v663 = vor.u32 %v661, %v662
        %668 = vrot.lane.b32.xlu0 %v639, 48
        %v669 = vpop.permute.xlu0 %668
        %670 = vrot.lane.b32.xlu0 %v647, 48
        %v671 = vpop.permute.xlu0 %670
        %672 = vrot.lane.b32.xlu0 %v655, 48
        %v673 = vpop.permute.xlu0 %672
        %674 = vrot.lane.b32.xlu0 %v663, 48
        %v675 = vpop.permute.xlu0 %674
        %vm680 = vcmask 458112
        %681 = vst.msk [vmem:[%s132] sm:$0xff] %vm680, %v669
        %682 = vst.msk [vmem:[%s132 + $0x8] sm:$0xff] %vm680, %v671
        %683 = vst.msk [vmem:[%s132 + $0x10] sm:$0xff] %vm680, %v673
        %684 = vst.msk [vmem:[%s132 + $0x18] sm:$0xff] %vm680, %v675
        %s685 = scalar_lea.vmem [#allocation2], 7
        %v686 = vld [vmem:[%s685] ss:$16 sm:$0x3]
        %v687 = vld [vmem:[%s685] ss:$16 sm:$0xc]
        %v688 = vor.u32 %v686, %v687
        %v689 = vld [vmem:[%s685] ss:$16 sm:$0x30]
        %v690 = vor.u32 %v688, %v689
        %v691 = vld [vmem:[%s685] ss:$16 sm:$0xc0]
        %v692 = vor.u32 %v690, %v691
        %s693 = scalar_lea.vmem [#allocation2], 135
        %v694 = vld [vmem:[%s693] ss:$16 sm:$0x3]
        %v695 = vld [vmem:[%s693] ss:$16 sm:$0xc]
        %v696 = vor.u32 %v694, %v695
        %v697 = vld [vmem:[%s693] ss:$16 sm:$0x30]
        %v698 = vor.u32 %v696, %v697
        %v699 = vld [vmem:[%s693] ss:$16 sm:$0xc0]
        %v700 = vor.u32 %v698, %v699
        %s701 = scalar_lea.vmem [#allocation2], 263
        %v702 = vld [vmem:[%s701] ss:$16 sm:$0x3]
        %v703 = vld [vmem:[%s701] ss:$16 sm:$0xc]
        %v704 = vor.u32 %v702, %v703
        %v705 = vld [vmem:[%s701] ss:$16 sm:$0x30]
        %v706 = vor.u32 %v704, %v705
        %v707 = vld [vmem:[%s701] ss:$16 sm:$0xc0]
        %v708 = vor.u32 %v706, %v707
        %s709 = scalar_lea.vmem [#allocation2], 391
        %v710 = vld [vmem:[%s709] ss:$16 sm:$0x3]
        %v711 = vld [vmem:[%s709] ss:$16 sm:$0xc]
        %v712 = vor.u32 %v710, %v711
        %v713 = vld [vmem:[%s709] ss:$16 sm:$0x30]
        %v714 = vor.u32 %v712, %v713
        %v715 = vld [vmem:[%s709] ss:$16 sm:$0xc0]
        %v716 = vor.u32 %v714, %v715
        %721 = vrot.lane.b32.xlu0 %v692, 56
        %v722 = vpop.permute.xlu0 %721
        %723 = vrot.lane.b32.xlu0 %v700, 56
        %v724 = vpop.permute.xlu0 %723
        %725 = vrot.lane.b32.xlu0 %v708, 56
        %v726 = vpop.permute.xlu0 %725
        %727 = vrot.lane.b32.xlu0 %v716, 56
        %v728 = vpop.permute.xlu0 %727
        %vm733 = vcmask 523712
        %734 = vst.msk [vmem:[%s132] sm:$0xff] %vm733, %v722
        %735 = vst.msk [vmem:[%s132 + $0x8] sm:$0xff] %vm733, %v724
        %736 = vst.msk [vmem:[%s132 + $0x10] sm:$0xff] %vm733, %v726
        %737 = vst.msk [vmem:[%s132 + $0x18] sm:$0xff] %vm733, %v728
        %s738 = scalar_lea.vmem [#allocation2], 8
        %v739 = vld [vmem:[%s738] ss:$16 sm:$0x3]
        %v740 = vld [vmem:[%s738] ss:$16 sm:$0xc]
        %v741 = vor.u32 %v739, %v740
        %v742 = vld [vmem:[%s738] ss:$16 sm:$0x30]
        %v743 = vor.u32 %v741, %v742
        %v744 = vld [vmem:[%s738] ss:$16 sm:$0xc0]
        %v745 = vor.u32 %v743, %v744
        %s746 = scalar_lea.vmem [#allocation2], 136
        %v747 = vld [vmem:[%s746] ss:$16 sm:$0x3]
        %v748 = vld [vmem:[%s746] ss:$16 sm:$0xc]
        %v749 = vor.u32 %v747, %v748
        %v750 = vld [vmem:[%s746] ss:$16 sm:$0x30]
        %v751 = vor.u32 %v749, %v750
        %v752 = vld [vmem:[%s746] ss:$16 sm:$0xc0]
        %v753 = vor.u32 %v751, %v752
        %s754 = scalar_lea.vmem [#allocation2], 264
        %v755 = vld [vmem:[%s754] ss:$16 sm:$0x3]
        %v756 = vld [vmem:[%s754] ss:$16 sm:$0xc]
        %v757 = vor.u32 %v755, %v756
        %v758 = vld [vmem:[%s754] ss:$16 sm:$0x30]
        %v759 = vor.u32 %v757, %v758
        %v760 = vld [vmem:[%s754] ss:$16 sm:$0xc0]
        %v761 = vor.u32 %v759, %v760
        %s762 = scalar_lea.vmem [#allocation2], 392
        %v763 = vld [vmem:[%s762] ss:$16 sm:$0x3]
        %v764 = vld [vmem:[%s762] ss:$16 sm:$0xc]
        %v765 = vor.u32 %v763, %v764
        %v766 = vld [vmem:[%s762] ss:$16 sm:$0x30]
        %v767 = vor.u32 %v765, %v766
        %v768 = vld [vmem:[%s762] ss:$16 sm:$0xc0]
        %v769 = vor.u32 %v767, %v768
        %774 = vrot.lane.b32.xlu0 %v745, 64
        %v775 = vpop.permute.xlu0 %774
        %776 = vrot.lane.b32.xlu0 %v753, 64
        %v777 = vpop.permute.xlu0 %776
        %778 = vrot.lane.b32.xlu0 %v761, 64
        %v779 = vpop.permute.xlu0 %778
        %780 = vrot.lane.b32.xlu0 %v769, 64
        %v781 = vpop.permute.xlu0 %780
        %vm786 = vcmask 589312
        %787 = vst.msk [vmem:[%s132] sm:$0xff] %vm786, %v775
        %788 = vst.msk [vmem:[%s132 + $0x8] sm:$0xff] %vm786, %v777
        %789 = vst.msk [vmem:[%s132 + $0x10] sm:$0xff] %vm786, %v779
        %790 = vst.msk [vmem:[%s132 + $0x18] sm:$0xff] %vm786, %v781
        %s791 = scalar_lea.vmem [#allocation2], 9
        %v792 = vld [vmem:[%s791] ss:$16 sm:$0x3]
        %v793 = vld [vmem:[%s791] ss:$16 sm:$0xc]
        %v794 = vor.u32 %v792, %v793
        %v795 = vld [vmem:[%s791] ss:$16 sm:$0x30]
        %v796 = vor.u32 %v794, %v795
        %v797 = vld [vmem:[%s791] ss:$16 sm:$0xc0]
        %v798 = vor.u32 %v796, %v797
        %s799 = scalar_lea.vmem [#allocation2], 137
        %v800 = vld [vmem:[%s799] ss:$16 sm:$0x3]
        %v801 = vld [vmem:[%s799] ss:$16 sm:$0xc]
        %v802 = vor.u32 %v800, %v801
        %v803 = vld [vmem:[%s799] ss:$16 sm:$0x30]
        %v804 = vor.u32 %v802, %v803
        %v805 = vld [vmem:[%s799] ss:$16 sm:$0xc0]
        %v806 = vor.u32 %v804, %v805
        %s807 = scalar_lea.vmem [#allocation2], 265
        %v808 = vld [vmem:[%s807] ss:$16 sm:$0x3]
        %v809 = vld [vmem:[%s807] ss:$16 sm:$0xc]
        %v810 = vor.u32 %v808, %v809
        %v811 = vld [vmem:[%s807] ss:$16 sm:$0x30]
        %v812 = vor.u32 %v810, %v811
        %v813 = vld [vmem:[%s807] ss:$16 sm:$0xc0]
        %v814 = vor.u32 %v812, %v813
        %s815 = scalar_lea.vmem [#allocation2], 393
        %v816 = vld [vmem:[%s815] ss:$16 sm:$0x3]
        %v817 = vld [vmem:[%s815] ss:$16 sm:$0xc]
        %v818 = vor.u32 %v816, %v817
        %v819 = vld [vmem:[%s815] ss:$16 sm:$0x30]
        %v820 = vor.u32 %v818, %v819
        %v821 = vld [vmem:[%s815] ss:$16 sm:$0xc0]
        %v822 = vor.u32 %v820, %v821
        %827 = vrot.lane.b32.xlu0 %v798, 72
        %v828 = vpop.permute.xlu0 %827
        %829 = vrot.lane.b32.xlu0 %v806, 72
        %v830 = vpop.permute.xlu0 %829
        %831 = vrot.lane.b32.xlu0 %v814, 72
        %v832 = vpop.permute.xlu0 %831
        %833 = vrot.lane.b32.xlu0 %v822, 72
        %v834 = vpop.permute.xlu0 %833
        %vm839 = vcmask 654912
        %840 = vst.msk [vmem:[%s132] sm:$0xff] %vm839, %v828
        %841 = vst.msk [vmem:[%s132 + $0x8] sm:$0xff] %vm839, %v830
        %842 = vst.msk [vmem:[%s132 + $0x10] sm:$0xff] %vm839, %v832
        %843 = vst.msk [vmem:[%s132 + $0x18] sm:$0xff] %vm839, %v834
        %s844 = scalar_lea.vmem [#allocation2], 10
        %v845 = vld [vmem:[%s844] ss:$16 sm:$0x3]
        %v846 = vld [vmem:[%s844] ss:$16 sm:$0xc]
        %v847 = vor.u32 %v845, %v846
        %v848 = vld [vmem:[%s844] ss:$16 sm:$0x30]
        %v849 = vor.u32 %v847, %v848
        %v850 = vld [vmem:[%s844] ss:$16 sm:$0xc0]
        %v851 = vor.u32 %v849, %v850
        %s852 = scalar_lea.vmem [#allocation2], 138
        %v853 = vld [vmem:[%s852] ss:$16 sm:$0x3]
        %v854 = vld [vmem:[%s852] ss:$16 sm:$0xc]
        %v855 = vor.u32 %v853, %v854
        %v856 = vld [vmem:[%s852] ss:$16 sm:$0x30]
        %v857 = vor.u32 %v855, %v856
        %v858 = vld [vmem:[%s852] ss:$16 sm:$0xc0]
        %v859 = vor.u32 %v857, %v858
        %s860 = scalar_lea.vmem [#allocation2], 266
        %v861 = vld [vmem:[%s860] ss:$16 sm:$0x3]
        %v862 = vld [vmem:[%s860] ss:$16 sm:$0xc]
        %v863 = vor.u32 %v861, %v862
        %v864 = vld [vmem:[%s860] ss:$16 sm:$0x30]
        %v865 = vor.u32 %v863, %v864
        %v866 = vld [vmem:[%s860] ss:$16 sm:$0xc0]
        %v867 = vor.u32 %v865, %v866
        %s868 = scalar_lea.vmem [#allocation2], 394
        %v869 = vld [vmem:[%s868] ss:$16 sm:$0x3]
        %v870 = vld [vmem:[%s868] ss:$16 sm:$0xc]
        %v871 = vor.u32 %v869, %v870
        %v872 = vld [vmem:[%s868] ss:$16 sm:$0x30]
        %v873 = vor.u32 %v871, %v872
        %v874 = vld [vmem:[%s868] ss:$16 sm:$0xc0]
        %v875 = vor.u32 %v873, %v874
        %880 = vrot.lane.b32.xlu0 %v851, 80
        %v881 = vpop.permute.xlu0 %880
        %882 = vrot.lane.b32.xlu0 %v859, 80
        %v883 = vpop.permute.xlu0 %882
        %884 = vrot.lane.b32.xlu0 %v867, 80
        %v885 = vpop.permute.xlu0 %884
        %886 = vrot.lane.b32.xlu0 %v875, 80
        %v887 = vpop.permute.xlu0 %886
        %vm892 = vcmask 720512
        %893 = vst.msk [vmem:[%s132] sm:$0xff] %vm892, %v881
        %894 = vst.msk [vmem:[%s132 + $0x8] sm:$0xff] %vm892, %v883
        %895 = vst.msk [vmem:[%s132 + $0x10] sm:$0xff] %vm892, %v885
        %896 = vst.msk [vmem:[%s132 + $0x18] sm:$0xff] %vm892, %v887
        %s897 = scalar_lea.vmem [#allocation2], 11
        %v898 = vld [vmem:[%s897] ss:$16 sm:$0x3]
        %v899 = vld [vmem:[%s897] ss:$16 sm:$0xc]
        %v900 = vor.u32 %v898, %v899
        %v901 = vld [vmem:[%s897] ss:$16 sm:$0x30]
        %v902 = vor.u32 %v900, %v901
        %v903 = vld [vmem:[%s897] ss:$16 sm:$0xc0]
        %v904 = vor.u32 %v902, %v903
        %s905 = scalar_lea.vmem [#allocation2], 139
        %v906 = vld [vmem:[%s905] ss:$16 sm:$0x3]
        %v907 = vld [vmem:[%s905] ss:$16 sm:$0xc]
        %v908 = vor.u32 %v906, %v907
        %v909 = vld [vmem:[%s905] ss:$16 sm:$0x30]
        %v910 = vor.u32 %v908, %v909
        %v911 = vld [vmem:[%s905] ss:$16 sm:$0xc0]
        %v912 = vor.u32 %v910, %v911
        %s913 = scalar_lea.vmem [#allocation2], 267
        %v914 = vld [vmem:[%s913] ss:$16 sm:$0x3]
        %v915 = vld [vmem:[%s913] ss:$16 sm:$0xc]
        %v916 = vor.u32 %v914, %v915
        %v917 = vld [vmem:[%s913] ss:$16 sm:$0x30]
        %v918 = vor.u32 %v916, %v917
        %v919 = vld [vmem:[%s913] ss:$16 sm:$0xc0]
        %v920 = vor.u32 %v918, %v919
        %s921 = scalar_lea.vmem [#allocation2], 395
        %v922 = vld [vmem:[%s921] ss:$16 sm:$0x3]
        %v923 = vld [vmem:[%s921] ss:$16 sm:$0xc]
        %v924 = vor.u32 %v922, %v923
        %v925 = vld [vmem:[%s921] ss:$16 sm:$0x30]
        %v926 = vor.u32 %v924, %v925
        %v927 = vld [vmem:[%s921] ss:$16 sm:$0xc0]
        %v928 = vor.u32 %v926, %v927
        %933 = vrot.lane.b32.xlu0 %v904, 88
        %v934 = vpop.permute.xlu0 %933
        %935 = vrot.lane.b32.xlu0 %v912, 88
        %v936 = vpop.permute.xlu0 %935
        %937 = vrot.lane.b32.xlu0 %v920, 88
        %v938 = vpop.permute.xlu0 %937
        %939 = vrot.lane.b32.xlu0 %v928, 88
        %v940 = vpop.permute.xlu0 %939
        %vm945 = vcmask 786112
        %946 = vst.msk [vmem:[%s132] sm:$0xff] %vm945, %v934
        %947 = vst.msk [vmem:[%s132 + $0x8] sm:$0xff] %vm945, %v936
        %948 = vst.msk [vmem:[%s132 + $0x10] sm:$0xff] %vm945, %v938
        %949 = vst.msk [vmem:[%s132 + $0x18] sm:$0xff] %vm945, %v940
        %s950 = scalar_lea.vmem [#allocation2], 12
        %v951 = vld [vmem:[%s950] ss:$16 sm:$0x3]
        %v952 = vld [vmem:[%s950] ss:$16 sm:$0xc]
        %v953 = vor.u32 %v951, %v952
        %v954 = vld [vmem:[%s950] ss:$16 sm:$0x30]
        %v955 = vor.u32 %v953, %v954
        %v956 = vld [vmem:[%s950] ss:$16 sm:$0xc0]
        %v957 = vor.u32 %v955, %v956
        %s958 = scalar_lea.vmem [#allocation2], 140
        %v959 = vld [vmem:[%s958] ss:$16 sm:$0x3]
        %v960 = vld [vmem:[%s958] ss:$16 sm:$0xc]
        %v961 = vor.u32 %v959, %v960
        %v962 = vld [vmem:[%s958] ss:$16 sm:$0x30]
        %v963 = vor.u32 %v961, %v962
        %v964 = vld [vmem:[%s958] ss:$16 sm:$0xc0]
        %v965 = vor.u32 %v963, %v964
        %s966 = scalar_lea.vmem [#allocation2], 268
        %v967 = vld [vmem:[%s966] ss:$16 sm:$0x3]
        %v968 = vld [vmem:[%s966] ss:$16 sm:$0xc]
        %v969 = vor.u32 %v967, %v968
        %v970 = vld [vmem:[%s966] ss:$16 sm:$0x30]
        %v971 = vor.u32 %v969, %v970
        %v972 = vld [vmem:[%s966] ss:$16 sm:$0xc0]
        %v973 = vor.u32 %v971, %v972
        %s974 = scalar_lea.vmem [#allocation2], 396
        %v975 = vld [vmem:[%s974] ss:$16 sm:$0x3]
        %v976 = vld [vmem:[%s974] ss:$16 sm:$0xc]
        %v977 = vor.u32 %v975, %v976
        %v978 = vld [vmem:[%s974] ss:$16 sm:$0x30]
        %v979 = vor.u32 %v977, %v978
        %v980 = vld [vmem:[%s974] ss:$16 sm:$0xc0]
        %v981 = vor.u32 %v979, %v980
        %986 = vrot.lane.b32.xlu0 %v957, 96
        %v987 = vpop.permute.xlu0 %986
        %988 = vrot.lane.b32.xlu0 %v965, 96
        %v989 = vpop.permute.xlu0 %988
        %990 = vrot.lane.b32.xlu0 %v973, 96
        %v991 = vpop.permute.xlu0 %990
        %992 = vrot.lane.b32.xlu0 %v981, 96
        %v993 = vpop.permute.xlu0 %992
        %vm998 = vcmask 851712
        %999 = vst.msk [vmem:[%s132] sm:$0xff] %vm998, %v987
        %1000 = vst.msk [vmem:[%s132 + $0x8] sm:$0xff] %vm998, %v989
        %1001 = vst.msk [vmem:[%s132 + $0x10] sm:$0xff] %vm998, %v991
        %1002 = vst.msk [vmem:[%s132 + $0x18] sm:$0xff] %vm998, %v993
        %s1003 = scalar_lea.vmem [#allocation2], 13
        %v1004 = vld [vmem:[%s1003] ss:$16 sm:$0x3]
        %v1005 = vld [vmem:[%s1003] ss:$16 sm:$0xc]
        %v1006 = vor.u32 %v1004, %v1005
        %v1007 = vld [vmem:[%s1003] ss:$16 sm:$0x30]
        %v1008 = vor.u32 %v1006, %v1007
        %v1009 = vld [vmem:[%s1003] ss:$16 sm:$0xc0]
        %v1010 = vor.u32 %v1008, %v1009
        %s1011 = scalar_lea.vmem [#allocation2], 141
        %v1012 = vld [vmem:[%s1011] ss:$16 sm:$0x3]
        %v1013 = vld [vmem:[%s1011] ss:$16 sm:$0xc]
        %v1014 = vor.u32 %v1012, %v1013
        %v1015 = vld [vmem:[%s1011] ss:$16 sm:$0x30]
        %v1016 = vor.u32 %v1014, %v1015
        %v1017 = vld [vmem:[%s1011] ss:$16 sm:$0xc0]
        %v1018 = vor.u32 %v1016, %v1017
        %s1019 = scalar_lea.vmem [#allocation2], 269
        %v1020 = vld [vmem:[%s1019] ss:$16 sm:$0x3]
        %v1021 = vld [vmem:[%s1019] ss:$16 sm:$0xc]
        %v1022 = vor.u32 %v1020, %v1021
        %v1023 = vld [vmem:[%s1019] ss:$16 sm:$0x30]
        %v1024 = vor.u32 %v1022, %v1023
        %v1025 = vld [vmem:[%s1019] ss:$16 sm:$0xc0]
        %v1026 = vor.u32 %v1024, %v1025
        %s1027 = scalar_lea.vmem [#allocation2], 397
        %v1028 = vld [vmem:[%s1027] ss:$16 sm:$0x3]
        %v1029 = vld [vmem:[%s1027] ss:$16 sm:$0xc]
        %v1030 = vor.u32 %v1028, %v1029
        %v1031 = vld [vmem:[%s1027] ss:$16 sm:$0x30]
        %v1032 = vor.u32 %v1030, %v1031
        %v1033 = vld [vmem:[%s1027] ss:$16 sm:$0xc0]
        %v1034 = vor.u32 %v1032, %v1033
        %1039 = vrot.lane.b32.xlu0 %v1010, 104
        %v1040 = vpop.permute.xlu0 %1039
        %1041 = vrot.lane.b32.xlu0 %v1018, 104
        %v1042 = vpop.permute.xlu0 %1041
        %1043 = vrot.lane.b32.xlu0 %v1026, 104
        %v1044 = vpop.permute.xlu0 %1043
        %1045 = vrot.lane.b32.xlu0 %v1034, 104
        %v1046 = vpop.permute.xlu0 %1045
        %vm1051 = vcmask 917312
        %1052 = vst.msk [vmem:[%s132] sm:$0xff] %vm1051, %v1040
        %1053 = vst.msk [vmem:[%s132 + $0x8] sm:$0xff] %vm1051, %v1042
        %1054 = vst.msk [vmem:[%s132 + $0x10] sm:$0xff] %vm1051, %v1044
        %1055 = vst.msk [vmem:[%s132 + $0x18] sm:$0xff] %vm1051, %v1046
        %s1056 = scalar_lea.vmem [#allocation2], 14
        %v1057 = vld [vmem:[%s1056] ss:$16 sm:$0x3]
        %v1058 = vld [vmem:[%s1056] ss:$16 sm:$0xc]
        %v1059 = vor.u32 %v1057, %v1058
        %v1060 = vld [vmem:[%s1056] ss:$16 sm:$0x30]
        %v1061 = vor.u32 %v1059, %v1060
        %v1062 = vld [vmem:[%s1056] ss:$16 sm:$0xc0]
        %v1063 = vor.u32 %v1061, %v1062
        %s1064 = scalar_lea.vmem [#allocation2], 142
        %v1065 = vld [vmem:[%s1064] ss:$16 sm:$0x3]
        %v1066 = vld [vmem:[%s1064] ss:$16 sm:$0xc]
        %v1067 = vor.u32 %v1065, %v1066
        %v1068 = vld [vmem:[%s1064] ss:$16 sm:$0x30]
        %v1069 = vor.u32 %v1067, %v1068
        %v1070 = vld [vmem:[%s1064] ss:$16 sm:$0xc0]
        %v1071 = vor.u32 %v1069, %v1070
        %s1072 = scalar_lea.vmem [#allocation2], 270
        %v1073 = vld [vmem:[%s1072] ss:$16 sm:$0x3]
        %v1074 = vld [vmem:[%s1072] ss:$16 sm:$0xc]
        %v1075 = vor.u32 %v1073, %v1074
        %v1076 = vld [vmem:[%s1072] ss:$16 sm:$0x30]
        %v1077 = vor.u32 %v1075, %v1076
        %v1078 = vld [vmem:[%s1072] ss:$16 sm:$0xc0]
        %v1079 = vor.u32 %v1077, %v1078
        %s1080 = scalar_lea.vmem [#allocation2], 398
        %v1081 = vld [vmem:[%s1080] ss:$16 sm:$0x3]
        %v1082 = vld [vmem:[%s1080] ss:$16 sm:$0xc]
        %v1083 = vor.u32 %v1081, %v1082
        %v1084 = vld [vmem:[%s1080] ss:$16 sm:$0x30]
        %v1085 = vor.u32 %v1083, %v1084
        %v1086 = vld [vmem:[%s1080] ss:$16 sm:$0xc0]
        %v1087 = vor.u32 %v1085, %v1086
        %1092 = vrot.lane.b32.xlu0 %v1063, 112
        %v1093 = vpop.permute.xlu0 %1092
        %1094 = vrot.lane.b32.xlu0 %v1071, 112
        %v1095 = vpop.permute.xlu0 %1094
        %1096 = vrot.lane.b32.xlu0 %v1079, 112
        %v1097 = vpop.permute.xlu0 %1096
        %1098 = vrot.lane.b32.xlu0 %v1087, 112
        %v1099 = vpop.permute.xlu0 %1098
        %vm1104 = vcmask 982912
        %1105 = vst.msk [vmem:[%s132] sm:$0xff] %vm1104, %v1093
        %1106 = vst.msk [vmem:[%s132 + $0x8] sm:$0xff] %vm1104, %v1095
        %1107 = vst.msk [vmem:[%s132 + $0x10] sm:$0xff] %vm1104, %v1097
        %1108 = vst.msk [vmem:[%s132 + $0x18] sm:$0xff] %vm1104, %v1099
        %s1109 = scalar_lea.vmem [#allocation2], 15
        %v1110 = vld [vmem:[%s1109] ss:$16 sm:$0x3]
        %v1111 = vld [vmem:[%s1109] ss:$16 sm:$0xc]
        %v1112 = vor.u32 %v1110, %v1111
        %v1113 = vld [vmem:[%s1109] ss:$16 sm:$0x30]
        %v1114 = vor.u32 %v1112, %v1113
        %v1115 = vld [vmem:[%s1109] ss:$16 sm:$0xc0]
        %v1116 = vor.u32 %v1114, %v1115
        %s1117 = scalar_lea.vmem [#allocation2], 143
        %v1118 = vld [vmem:[%s1117] ss:$16 sm:$0x3]
        %v1119 = vld [vmem:[%s1117] ss:$16 sm:$0xc]
        %v1120 = vor.u32 %v1118, %v1119
        %v1121 = vld [vmem:[%s1117] ss:$16 sm:$0x30]
        %v1122 = vor.u32 %v1120, %v1121
        %v1123 = vld [vmem:[%s1117] ss:$16 sm:$0xc0]
        %v1124 = vor.u32 %v1122, %v1123
        %s1125 = scalar_lea.vmem [#allocation2], 271
        %v1126 = vld [vmem:[%s1125] ss:$16 sm:$0x3]
        %v1127 = vld [vmem:[%s1125] ss:$16 sm:$0xc]
        %v1128 = vor.u32 %v1126, %v1127
        %v1129 = vld [vmem:[%s1125] ss:$16 sm:$0x30]
        %v1130 = vor.u32 %v1128, %v1129
        %v1131 = vld [vmem:[%s1125] ss:$16 sm:$0xc0]
        %v1132 = vor.u32 %v1130, %v1131
        %s1133 = scalar_lea.vmem [#allocation2], 399
        %v1134 = vld [vmem:[%s1133] ss:$16 sm:$0x3]
        %v1135 = vld [vmem:[%s1133] ss:$16 sm:$0xc]
        %v1136 = vor.u32 %v1134, %v1135
        %v1137 = vld [vmem:[%s1133] ss:$16 sm:$0x30]
        %v1138 = vor.u32 %v1136, %v1137
        %v1139 = vld [vmem:[%s1133] ss:$16 sm:$0xc0]
        %v1140 = vor.u32 %v1138, %v1139
        %1145 = vrot.lane.b32.xlu0 %v1116, 120
        %v1146 = vpop.permute.xlu0 %1145
        %1147 = vrot.lane.b32.xlu0 %v1124, 120
        %v1148 = vpop.permute.xlu0 %1147
        %1149 = vrot.lane.b32.xlu0 %v1132, 120
        %v1150 = vpop.permute.xlu0 %1149
        %1151 = vrot.lane.b32.xlu0 %v1140, 120
        %v1152 = vpop.permute.xlu0 %1151
        %vm1157 = vcmask 1048512
        %1158 = vst.msk [vmem:[%s132] sm:$0xff] %vm1157, %v1146
        %1159 = vst.msk [vmem:[%s132 + $0x8] sm:$0xff] %vm1157, %v1148
        %1160 = vst.msk [vmem:[%s132 + $0x10] sm:$0xff] %vm1157, %v1150
        %1161 = vst.msk [vmem:[%s132 + $0x18] sm:$0xff] %vm1157, %v1152
        %s1162 = sand.u32 %s52, 1
        %s1163 = scalar_lea.sflag [#allocation5], %s1162
        %s1164 = sand.u32 %s52, 1
        %s1165 = smul.addr %s1164, 32
        %s1166 = scalar_lea.vmem [#allocation6], %s1165
        // Predicated region
        $region29: #{tpu_custom_call.1} parent=23 // pred_check
          %p1167 = pneg %p62
        $region30: #{tpu_custom_call.1} parent=23 // pred_check_branch
          %1169 = sbr.rel (%p1167) target = $region32
        $region31: #{tpu_custom_call.1} parent=23 // pred_region
          %s1170 = smul.u32 4, %s18
          %s1172 = ssub.s32 512, 512
          %1173 = vsyncadd %s1163, %s1172
          %s1174 = smul.addr %s1170, 128
          %s1175 = scalar_lea.hbm %s1, %s1174
          %s1176 = sshll.u32 %s1166, 4
          %s1177 = int_to_ptr.vmem [resolvable:$true] %s1176
          %1182 = dma.vmem_to_hbm [thread:$0]  %s1177, 512, %s1175, %s1163, 128, 128, 8
        $region32: #{tpu_custom_call.1} parent=23 // pred_fallthru
          _
      $region24: #{tpu_custom_call.1} parent=5 // pred_fallthru
        _
      %p1183 = scmp.le.s32.totalorder 2, %s13
      // Predicated region
      $region33: #{tpu_custom_call.1} parent=5 // pred_check
        %p1184 = pneg %p1183
      $region34: #{tpu_custom_call.1} parent=5 // pred_check_branch
        %1186 = sbr.rel (%p1184) target = $region36
      $region35: #{tpu_custom_call.1} parent=5 // pred_region
        %s1187 = ssub.s32 %s13, 2
        // Predicated region
        $region37: #{tpu_custom_call.1} parent=35 // pred_check
          %p1188 = pneg %p68
        $region38: #{tpu_custom_call.1} parent=35 // pred_check_branch
          %1190 = sbr.rel (%p1188) target = $region40
        $region39: #{tpu_custom_call.1} parent=35 // pred_region
          %s1191 = sand.u32 %s53, 1
          %s1192 = scalar_lea.sflag [#allocation5], %s1191
          %s1193 = sand.u32 %s53, 1
          %s1194 = smul.addr %s1193, 32
          %s1195 = scalar_lea.vmem [#allocation6], %s1194
          %1196 = dma.done %s1192, 512
        $region40: #{tpu_custom_call.1} parent=35 // pred_fallthru
          _
      $region36: #{tpu_custom_call.1} parent=5 // pred_fallthru
        _
    $region6: #{tpu_custom_call.1} parent=1 // loop_footer
      %s17 = sadd.s32 1, %s13
    $region7: #{tpu_custom_call.1} parent=1 // loop_footer_branch
      %12 = sbr.rel target = $region3
    $region8: #{tpu_custom_call.1} parent=1 // loop_exit
      _
    %1197 = vsyncpa [#allocation4], 1
    %s1198 = scalar_lea.sflag [#allocation4], 1
    %1199 = vsyncpa %s1198, 1
    %1200 = vsyncpa [#allocation5], 1
    %s1201 = scalar_lea.sflag [#allocation5], 1
    %1202 = vsyncpa %s1201, 1

// kernel: tpu_custom_call.1
$region0: #{tpu_custom_call.1}
  #allocation0 [shape = 'u32[]', space=smem, size = 0x4, offset = 0x4, fixed_abs, tag = 'smem constant byte address 0x4 - core index']
  #allocation1 [shape = 'u32[144,128]{1,0:T(1,128)}', space=vmem, size = 0x12000, scoped, tag = 'internal scratch']
  %s0 = inlined_call_operand.hbm [shape: f32[8,4096], index: 0, kind: input, shape index: {}]
  %s1 = inlined_call_operand.vmem [shape: f32[4096,8], index: 1, kind: output, shape index: {}]
  %s2 = sld [smem:[#allocation0]]
  $region18: #{tpu_custom_call.1} parent=0
    _
  %s4 = ssub.s32 1, %s2
  %s5 = scalar_select 0, %s4, %s2
  $region1: #{tpu_custom_call.1} parent=0
    #allocation2 [shape = 'u8[131072]{0}', space=vmem, size = 0x20000, scoped, tag = 'input window, operand 0, single buffered']
    #allocation3 [shape = 's32[1]{0}', space=sflag, size = 0x4, scoped, tag = 'scoped memory for tpu_custom_call.1']
    %6 = vsyncpa [#allocation3], 0
    // Predicated region
    $region2: #{tpu_custom_call.1} parent=1 // pred_check
      _
    $region3: #{tpu_custom_call.1} parent=1 // pred_check_branch
      %8 = sbr.rel (0) target = $region5
    $region4: #{tpu_custom_call.1} parent=1 // pred_region
      %s10 = ssub.s32 4096, 4096
      %11 = vsyncadd [#allocation3], %s10
      %s13 = sshll.u32 [#allocation2], 4
      %s14 = int_to_ptr.vmem [resolvable:$true] %s13
      %16 = dma.hbm_to_vmem [thread:$0]  %s0, 4096, %s14, [#allocation3]
    $region5: #{tpu_custom_call.1} parent=1 // pred_fallthru
      _
    // Predicated region
    $region6: #{tpu_custom_call.1} parent=1 // pred_check
      _
    $region7: #{tpu_custom_call.1} parent=1 // pred_check_branch
      %18 = sbr.rel (0) target = $region9
    $region8: #{tpu_custom_call.1} parent=1 // pred_region
      %19 = dma.done [#allocation3], 4096
    $region9: #{tpu_custom_call.1} parent=1 // pred_fallthru
      _
    %v20 = vld [vmem:[#allocation2] sm:$0xff]
    %v21 = vld [vmem:[#allocation2 + $0x8] sm:$0xff]
    %22 = vxpose.xlu0.b32.start [1/16] %v20, 128
    %23 = vxpose.xlu0.b32.cont [2/16] 0.0, 128
    %24 = vxpose.xlu0.b32.cont [3/16] 0.0, 128
    %25 = vxpose.xlu0.b32.cont [4/16] 0.0, 128
    %26 = vxpose.xlu0.b32.cont [5/16] 0.0, 128
    %27 = vxpose.xlu0.b32.cont [6/16] 0.0, 128
    %28 = vxpose.xlu0.b32.cont [7/16] 0.0, 128
    %29 = vxpose.xlu0.b32.cont [8/16] 0.0, 128
    %30 = vxpose.xlu0.b32.cont [9/16] 0.0, 128
    %31 = vxpose.xlu0.b32.cont [10/16] 0.0, 128
    %32 = vxpose.xlu0.b32.cont [11/16] 0.0, 128
    %33 = vxpose.xlu0.b32.cont [12/16] 0.0, 128
    %34 = vxpose.xlu0.b32.cont [13/16] 0.0, 128
    %35 = vxpose.xlu0.b32.cont [14/16] 0.0, 128
    %36 = vxpose.xlu0.b32.cont [15/16] 0.0, 128
    %37 = vxpose.xlu0.b32.end [16/16] 0.0, 128
    %v38 = vpop.trf.xlu0
    %v39 = vpop.trf.xlu0
    %v40 = vpop.trf.xlu0
    %v41 = vpop.trf.xlu0
    %v42 = vpop.trf.xlu0
    %v43 = vpop.trf.xlu0
    %v44 = vpop.trf.xlu0
    %v45 = vpop.trf.xlu0
    %v46 = vpop.trf.xlu0
    %v47 = vpop.trf.xlu0
    %v48 = vpop.trf.xlu0
    %v49 = vpop.trf.xlu0
    %v50 = vpop.trf.xlu0
    %v51 = vpop.trf.xlu0
    %v52 = vpop.trf.xlu0
    %v53 = vpop.trf.xlu0
    %54 = vxpose.xlu0.b32.start [1/16] %v21, 128
    %55 = vxpose.xlu0.b32.cont [2/16] 0.0, 128
    %56 = vxpose.xlu0.b32.cont [3/16] 0.0, 128
    %57 = vxpose.xlu0.b32.cont [4/16] 0.0, 128
    %58 = vxpose.xlu0.b32.cont [5/16] 0.0, 128
    %59 = vxpose.xlu0.b32.cont [6/16] 0.0, 128
    %60 = vxpose.xlu0.b32.cont [7/16] 0.0, 128
    %61 = vxpose.xlu0.b32.cont [8/16] 0.0, 128
    %62 = vxpose.xlu0.b32.cont [9/16] 0.0, 128
    %63 = vxpose.xlu0.b32.cont [10/16] 0.0, 128
    %64 = vxpose.xlu0.b32.cont [11/16] 0.0, 128
    %65 = vxpose.xlu0.b32.cont [12/16] 0.0, 128
    %66 = vxpose.xlu0.b32.cont [13/16] 0.0, 128
    %67 = vxpose.xlu0.b32.cont [14/16] 0.0, 128
    %68 = vxpose.xlu0.b32.cont [15/16] 0.0, 128
    %69 = vxpose.xlu0.b32.end [16/16] 0.0, 128
    %v70 = vpop.trf.xlu0
    %v71 = vpop.trf.xlu0
    %v72 = vpop.trf.xlu0
    %v73 = vpop.trf.xlu0
    %v74 = vpop.trf.xlu0
    %v75 = vpop.trf.xlu0
    %v76 = vpop.trf.xlu0
    %v77 = vpop.trf.xlu0
    %v78 = vpop.trf.xlu0
    %v79 = vpop.trf.xlu0
    %v80 = vpop.trf.xlu0
    %v81 = vpop.trf.xlu0
    %v82 = vpop.trf.xlu0
    %v83 = vpop.trf.xlu0
    %v84 = vpop.trf.xlu0
    %v85 = vpop.trf.xlu0
    %vm86 = vcmask 64512
    %87 = vst.msk [vmem:[%s1] sm:$0xff] %vm86, %v38
    %88 = vst.msk [vmem:[%s1 + $0x8] sm:$0xff] %vm86, %v39
    %89 = vst.msk [vmem:[%s1 + $0x10] sm:$0xff] %vm86, %v40
    %90 = vst.msk [vmem:[%s1 + $0x18] sm:$0xff] %vm86, %v41
    %91 = vst.msk [vmem:[%s1 + $0x20] sm:$0xff] %vm86, %v42
    %92 = vst.msk [vmem:[%s1 + $0x28] sm:$0xff] %vm86, %v43
    %93 = vst.msk [vmem:[%s1 + $0x30] sm:$0xff] %vm86, %v44
    %94 = vst.msk [vmem:[%s1 + $0x38] sm:$0xff] %vm86, %v45
    %95 = vst.msk [vmem:[%s1 + $0x40] sm:$0xff] %vm86, %v46
    %96 = vst.msk [vmem:[%s1 + $0x48] sm:$0xff] %vm86, %v47
    %97 = vst.msk [vmem:[%s1 + $0x50] sm:$0xff] %vm86, %v48
    %98 = vst.msk [vmem:[%s1 + $0x58] sm:$0xff] %vm86, %v49
    %99 = vst.msk [vmem:[%s1 + $0x60] sm:$0xff] %vm86, %v50
    %100 = vst.msk [vmem:[%s1 + $0x68] sm:$0xff] %vm86, %v51
    %101 = vst.msk [vmem:[%s1 + $0x70] sm:$0xff] %vm86, %v52
    %102 = vst.msk [vmem:[%s1 + $0x78] sm:$0xff] %vm86, %v53
    %103 = vst.msk [vmem:[%s1 + $0x80] sm:$0xff] %vm86, %v70
    %104 = vst.msk [vmem:[%s1 + $0x88] sm:$0xff] %vm86, %v71
    %105 = vst.msk [vmem:[%s1 + $0x90] sm:$0xff] %vm86, %v72
    %106 = vst.msk [vmem:[%s1 + $0x98] sm:$0xff] %vm86, %v73
    %107 = vst.msk [vmem:[%s1 + $0xa0] sm:$0xff] %vm86, %v74
    %108 = vst.msk [vmem:[%s1 + $0xa8] sm:$0xff] %vm86, %v75
    %109 = vst.msk [vmem:[%s1 + $0xb0] sm:$0xff] %vm86, %v76
    %110 = vst.msk [vmem:[%s1 + $0xb8] sm:$0xff] %vm86, %v77
    %111 = vst.msk [vmem:[%s1 + $0xc0] sm:$0xff] %vm86, %v78
    %112 = vst.msk [vmem:[%s1 + $0xc8] sm:$0xff] %vm86, %v79
    %113 = vst.msk [vmem:[%s1 + $0xd0] sm:$0xff] %vm86, %v80
    %114 = vst.msk [vmem:[%s1 + $0xd8] sm:$0xff] %vm86, %v81
    %115 = vst.msk [vmem:[%s1 + $0xe0] sm:$0xff] %vm86, %v82
    %116 = vst.msk [vmem:[%s1 + $0xe8] sm:$0xff] %vm86, %v83
    %117 = vst.msk [vmem:[%s1 + $0xf0] sm:$0xff] %vm86, %v84
    %118 = vst.msk [vmem:[%s1 + $0xf8] sm:$0xff] %vm86, %v85
    %v119 = vld [vmem:[#allocation2 + $0x10] sm:$0xff]
    %v120 = vld [vmem:[#allocation2 + $0x18] sm:$0xff]
    %121 = vxpose.xlu0.b32.start [1/16] %v119, 128
    %122 = vxpose.xlu0.b32.cont [2/16] 0.0, 128
    %123 = vxpose.xlu0.b32.cont [3/16] 0.0, 128
    %124 = vxpose.xlu0.b32.cont [4/16] 0.0, 128
    %125 = vxpose.xlu0.b32.cont [5/16] 0.0, 128
    %126 = vxpose.xlu0.b32.cont [6/16] 0.0, 128
    %127 = vxpose.xlu0.b32.cont [7/16] 0.0, 128
    %128 = vxpose.xlu0.b32.cont [8/16] 0.0, 128
    %129 = vxpose.xlu0.b32.cont [9/16] 0.0, 128
    %130 = vxpose.xlu0.b32.cont [10/16] 0.0, 128
    %131 = vxpose.xlu0.b32.cont [11/16] 0.0, 128
    %132 = vxpose.xlu0.b32.cont [12/16] 0.0, 128
    %133 = vxpose.xlu0.b32.cont [13/16] 0.0, 128
    %134 = vxpose.xlu0.b32.cont [14/16] 0.0, 128
    %135 = vxpose.xlu0.b32.cont [15/16] 0.0, 128
    %136 = vxpose.xlu0.b32.end [16/16] 0.0, 128
    %v137 = vpop.trf.xlu0
    %v138 = vpop.trf.xlu0
    %v139 = vpop.trf.xlu0
    %v140 = vpop.trf.xlu0
    %v141 = vpop.trf.xlu0
    %v142 = vpop.trf.xlu0
    %v143 = vpop.trf.xlu0
    %v144 = vpop.trf.xlu0
    %v145 = vpop.trf.xlu0
    %v146 = vpop.trf.xlu0
    %v147 = vpop.trf.xlu0
    %v148 = vpop.trf.xlu0
    %v149 = vpop.trf.xlu0
    %v150 = vpop.trf.xlu0
    %v151 = vpop.trf.xlu0
    %v152 = vpop.trf.xlu0
    %153 = vxpose.xlu0.b32.start [1/16] %v120, 128
    %154 = vxpose.xlu0.b32.cont [2/16] 0.0, 128
    %155 = vxpose.xlu0.b32.cont [3/16] 0.0, 128
    %156 = vxpose.xlu0.b32.cont [4/16] 0.0, 128
    %157 = vxpose.xlu0.b32.cont [5/16] 0.0, 128
    %158 = vxpose.xlu0.b32.cont [6/16] 0.0, 128
    %159 = vxpose.xlu0.b32.cont [7/16] 0.0, 128
    %160 = vxpose.xlu0.b32.cont [8/16] 0.0, 128
    %161 = vxpose.xlu0.b32.cont [9/16] 0.0, 128
    %162 = vxpose.xlu0.b32.cont [10/16] 0.0, 128
    %163 = vxpose.xlu0.b32.cont [11/16] 0.0, 128
    %164 = vxpose.xlu0.b32.cont [12/16] 0.0, 128
    %165 = vxpose.xlu0.b32.cont [13/16] 0.0, 128
    %166 = vxpose.xlu0.b32.cont [14/16] 0.0, 128
    %167 = vxpose.xlu0.b32.cont [15/16] 0.0, 128
    %168 = vxpose.xlu0.b32.end [16/16] 0.0, 128
    %v169 = vpop.trf.xlu0
    %v170 = vpop.trf.xlu0
    %v171 = vpop.trf.xlu0
    %v172 = vpop.trf.xlu0
    %v173 = vpop.trf.xlu0
    %v174 = vpop.trf.xlu0
    %v175 = vpop.trf.xlu0
    %v176 = vpop.trf.xlu0
    %v177 = vpop.trf.xlu0
    %v178 = vpop.trf.xlu0
    %v179 = vpop.trf.xlu0
    %v180 = vpop.trf.xlu0
    %v181 = vpop.trf.xlu0
    %v182 = vpop.trf.xlu0
    %v183 = vpop.trf.xlu0
    %v184 = vpop.trf.xlu0
    %185 = vst.msk [vmem:[%s1 + $0x100] sm:$0xff] %vm86, %v137
    %186 = vst.msk [vmem:[%s1 + $0x108] sm:$0xff] %vm86, %v138
    %187 = vst.msk [vmem:[%s1 + $0x110] sm:$0xff] %vm86, %v139
    %188 = vst.msk [vmem:[%s1 + $0x118] sm:$0xff] %vm86, %v140
    %189 = vst.msk [vmem:[%s1 + $0x120] sm:$0xff] %vm86, %v141
    %190 = vst.msk [vmem:[%s1 + $0x128] sm:$0xff] %vm86, %v142
    %191 = vst.msk [vmem:[%s1 + $0x130] sm:$0xff] %vm86, %v143
    %192 = vst.msk [vmem:[%s1 + $0x138] sm:$0xff] %vm86, %v144
    %193 = vst.msk [vmem:[%s1 + $0x140] sm:$0xff] %vm86, %v145
    %194 = vst.msk [vmem:[%s1 + $0x148] sm:$0xff] %vm86, %v146
    %195 = vst.msk [vmem:[%s1 + $0x150] sm:$0xff] %vm86, %v147
    %196 = vst.msk [vmem:[%s1 + $0x158] sm:$0xff] %vm86, %v148
    %197 = vst.msk [vmem:[%s1 + $0x160] sm:$0xff] %vm86, %v149
    %198 = vst.msk [vmem:[%s1 + $0x168] sm:$0xff] %vm86, %v150
    %199 = vst.msk [vmem:[%s1 + $0x170] sm:$0xff] %vm86, %v151
    %200 = vst.msk [vmem:[%s1 + $0x178] sm:$0xff] %vm86, %v152
    %201 = vst.msk [vmem:[%s1 + $0x180] sm:$0xff] %vm86, %v169
    %202 = vst.msk [vmem:[%s1 + $0x188] sm:$0xff] %vm86, %v170
    %203 = vst.msk [vmem:[%s1 + $0x190] sm:$0xff] %vm86, %v171
    %204 = vst.msk [vmem:[%s1 + $0x198] sm:$0xff] %vm86, %v172
    %205 = vst.msk [vmem:[%s1 + $0x1a0] sm:$0xff] %vm86, %v173
    %206 = vst.msk [vmem:[%s1 + $0x1a8] sm:$0xff] %vm86, %v174
    %207 = vst.msk [vmem:[%s1 + $0x1b0] sm:$0xff] %vm86, %v175
    %208 = vst.msk [vmem:[%s1 + $0x1b8] sm:$0xff] %vm86, %v176
    %209 = vst.msk [vmem:[%s1 + $0x1c0] sm:$0xff] %vm86, %v177
    %210 = vst.msk [vmem:[%s1 + $0x1c8] sm:$0xff] %vm86, %v178
    %211 = vst.msk [vmem:[%s1 + $0x1d0] sm:$0xff] %vm86, %v179
    %212 = vst.msk [vmem:[%s1 + $0x1d8] sm:$0xff] %vm86, %v180
    %213 = vst.msk [vmem:[%s1 + $0x1e0] sm:$0xff] %vm86, %v181
    %214 = vst.msk [vmem:[%s1 + $0x1e8] sm:$0xff] %vm86, %v182
    %215 = vst.msk [vmem:[%s1 + $0x1f0] sm:$0xff] %vm86, %v183
    %216 = vst.msk [vmem:[%s1 + $0x1f8] sm:$0xff] %vm86, %v184
    %v217 = vld [vmem:[#allocation2 + $0x20] sm:$0xff]
    %v218 = vld [vmem:[#allocation2 + $0x28] sm:$0xff]
    %219 = vxpose.xlu0.b32.start [1/16] %v217, 128
    %220 = vxpose.xlu0.b32.cont [2/16] 0.0, 128
    %221 = vxpose.xlu0.b32.cont [3/16] 0.0, 128
    %222 = vxpose.xlu0.b32.cont [4/16] 0.0, 128
    %223 = vxpose.xlu0.b32.cont [5/16] 0.0, 128
    %224 = vxpose.xlu0.b32.cont [6/16] 0.0, 128
    %225 = vxpose.xlu0.b32.cont [7/16] 0.0, 128
    %226 = vxpose.xlu0.b32.cont [8/16] 0.0, 128
    %227 = vxpose.xlu0.b32.cont [9/16] 0.0, 128
    %228 = vxpose.xlu0.b32.cont [10/16] 0.0, 128
    %229 = vxpose.xlu0.b32.cont [11/16] 0.0, 128
    %230 = vxpose.xlu0.b32.cont [12/16] 0.0, 128
    %231 = vxpose.xlu0.b32.cont [13/16] 0.0, 128
    %232 = vxpose.xlu0.b32.cont [14/16] 0.0, 128
    %233 = vxpose.xlu0.b32.cont [15/16] 0.0, 128
    %234 = vxpose.xlu0.b32.end [16/16] 0.0, 128
    %v235 = vpop.trf.xlu0
    %v236 = vpop.trf.xlu0
    %v237 = vpop.trf.xlu0
    %v238 = vpop.trf.xlu0
    %v239 = vpop.trf.xlu0
    %v240 = vpop.trf.xlu0
    %v241 = vpop.trf.xlu0
    %v242 = vpop.trf.xlu0
    %v243 = vpop.trf.xlu0
    %v244 = vpop.trf.xlu0
    %v245 = vpop.trf.xlu0
    %v246 = vpop.trf.xlu0
    %v247 = vpop.trf.xlu0
    %v248 = vpop.trf.xlu0
    %v249 = vpop.trf.xlu0
    %v250 = vpop.trf.xlu0
    %251 = vxpose.xlu0.b32.start [1/16] %v218, 128
    %252 = vxpose.xlu0.b32.cont [2/16] 0.0, 128
    %253 = vxpose.xlu0.b32.cont [3/16] 0.0, 128
    %254 = vxpose.xlu0.b32.cont [4/16] 0.0, 128
    %255 = vxpose.xlu0.b32.cont [5/16] 0.0, 128
    %256 = vxpose.xlu0.b32.cont [6/16] 0.0, 128
    %257 = vxpose.xlu0.b32.cont [7/16] 0.0, 128
    %258 = vxpose.xlu0.b32.cont [8/16] 0.0, 128
    %259 = vxpose.xlu0.b32.cont [9/16] 0.0, 128
    %260 = vxpose.xlu0.b32.cont [10/16] 0.0, 128
    %261 = vxpose.xlu0.b32.cont [11/16] 0.0, 128
    %262 = vxpose.xlu0.b32.cont [12/16] 0.0, 128
    %263 = vxpose.xlu0.b32.cont [13/16] 0.0, 128
    %264 = vxpose.xlu0.b32.cont [14/16] 0.0, 128
    %265 = vxpose.xlu0.b32.cont [15/16] 0.0, 128
    %266 = vxpose.xlu0.b32.end [16/16] 0.0, 128
    %v267 = vpop.trf.xlu0
    %v268 = vpop.trf.xlu0
    %v269 = vpop.trf.xlu0
    %v270 = vpop.trf.xlu0
    %v271 = vpop.trf.xlu0
    %v272 = vpop.trf.xlu0
    %v273 = vpop.trf.xlu0
    %v274 = vpop.trf.xlu0
    %v275 = vpop.trf.xlu0
    %v276 = vpop.trf.xlu0
    %v277 = vpop.trf.xlu0
    %v278 = vpop.trf.xlu0
    %v279 = vpop.trf.xlu0
    %v280 = vpop.trf.xlu0
    %v281 = vpop.trf.xlu0
    %v282 = vpop.trf.xlu0
    %283 = vst.msk [vmem:[%s1 + $0x200] sm:$0xff] %vm86, %v235
    %284 = vst.msk [vmem:[%s1 + $0x208] sm:$0xff] %vm86, %v236
    %285 = vst.msk [vmem:[%s1 + $0x210] sm:$0xff] %vm86, %v237
    %286 = vst.msk [vmem:[%s1 + $0x218] sm:$0xff] %vm86, %v238
    %287 = vst.msk [vmem:[%s1 + $0x220] sm:$0xff] %vm86, %v239
    %288 = vst.msk [vmem:[%s1 + $0x228] sm:$0xff] %vm86, %v240
    %289 = vst.msk [vmem:[%s1 + $0x230] sm:$0xff] %vm86, %v241
    %290 = vst.msk [vmem:[%s1 + $0x238] sm:$0xff] %vm86, %v242
    %291 = vst.msk [vmem:[%s1 + $0x240] sm:$0xff] %vm86, %v243
    %292 = vst.msk [vmem:[%s1 + $0x248] sm:$0xff] %vm86, %v244
    %293 = vst.msk [vmem:[%s1 + $0x250] sm:$0xff] %vm86, %v245
    %294 = vst.msk [vmem:[%s1 + $0x258] sm:$0xff] %vm86, %v246
    %295 = vst.msk [vmem:[%s1 + $0x260] sm:$0xff] %vm86, %v247
    %296 = vst.msk [vmem:[%s1 + $0x268] sm:$0xff] %vm86, %v248
    %297 = vst.msk [vmem:[%s1 + $0x270] sm:$0xff] %vm86, %v249
    %298 = vst.msk [vmem:[%s1 + $0x278] sm:$0xff] %vm86, %v250
    %299 = vst.msk [vmem:[%s1 + $0x280] sm:$0xff] %vm86, %v267
    %300 = vst.msk [vmem:[%s1 + $0x288] sm:$0xff] %vm86, %v268
    %301 = vst.msk [vmem:[%s1 + $0x290] sm:$0xff] %vm86, %v269
    %302 = vst.msk [vmem:[%s1 + $0x298] sm:$0xff] %vm86, %v270
    %303 = vst.msk [vmem:[%s1 + $0x2a0] sm:$0xff] %vm86, %v271
    %304 = vst.msk [vmem:[%s1 + $0x2a8] sm:$0xff] %vm86, %v272
    %305 = vst.msk [vmem:[%s1 + $0x2b0] sm:$0xff] %vm86, %v273
    %306 = vst.msk [vmem:[%s1 + $0x2b8] sm:$0xff] %vm86, %v274
    %307 = vst.msk [vmem:[%s1 + $0x2c0] sm:$0xff] %vm86, %v275
    %308 = vst.msk [vmem:[%s1 + $0x2c8] sm:$0xff] %vm86, %v276
    %309 = vst.msk [vmem:[%s1 + $0x2d0] sm:$0xff] %vm86, %v277
    %310 = vst.msk [vmem:[%s1 + $0x2d8] sm:$0xff] %vm86, %v278
    %311 = vst.msk [vmem:[%s1 + $0x2e0] sm:$0xff] %vm86, %v279
    %312 = vst.msk [vmem:[%s1 + $0x2e8] sm:$0xff] %vm86, %v280
    %313 = vst.msk [vmem:[%s1 + $0x2f0] sm:$0xff] %vm86, %v281
    %314 = vst.msk [vmem:[%s1 + $0x2f8] sm:$0xff] %vm86, %v282
    %v315 = vld [vmem:[#allocation2 + $0x30] sm:$0xff]
    %v316 = vld [vmem:[#allocation2 + $0x38] sm:$0xff]
    %317 = vxpose.xlu0.b32.start [1/16] %v315, 128
    %318 = vxpose.xlu0.b32.cont [2/16] 0.0, 128
    %319 = vxpose.xlu0.b32.cont [3/16] 0.0, 128
    %320 = vxpose.xlu0.b32.cont [4/16] 0.0, 128
    %321 = vxpose.xlu0.b32.cont [5/16] 0.0, 128
    %322 = vxpose.xlu0.b32.cont [6/16] 0.0, 128
    %323 = vxpose.xlu0.b32.cont [7/16] 0.0, 128
    %324 = vxpose.xlu0.b32.cont [8/16] 0.0, 128
    %325 = vxpose.xlu0.b32.cont [9/16] 0.0, 128
    %326 = vxpose.xlu0.b32.cont [10/16] 0.0, 128
    %327 = vxpose.xlu0.b32.cont [11/16] 0.0, 128
    %328 = vxpose.xlu0.b32.cont [12/16] 0.0, 128
    %329 = vxpose.xlu0.b32.cont [13/16] 0.0, 128
    %330 = vxpose.xlu0.b32.cont [14/16] 0.0, 128
    %331 = vxpose.xlu0.b32.cont [15/16] 0.0, 128
    %332 = vxpose.xlu0.b32.end [16/16] 0.0, 128
    %v333 = vpop.trf.xlu0
    %v334 = vpop.trf.xlu0
    %v335 = vpop.trf.xlu0
    %v336 = vpop.trf.xlu0
    %v337 = vpop.trf.xlu0
    %v338 = vpop.trf.xlu0
    %v339 = vpop.trf.xlu0
    %v340 = vpop.trf.xlu0
    %v341 = vpop.trf.xlu0
    %v342 = vpop.trf.xlu0
    %v343 = vpop.trf.xlu0
    %v344 = vpop.trf.xlu0
    %v345 = vpop.trf.xlu0
    %v346 = vpop.trf.xlu0
    %v347 = vpop.trf.xlu0
    %v348 = vpop.trf.xlu0
    %349 = vxpose.xlu0.b32.start [1/16] %v316, 128
    %350 = vxpose.xlu0.b32.cont [2/16] 0.0, 128
    %351 = vxpose.xlu0.b32.cont [3/16] 0.0, 128
    %352 = vxpose.xlu0.b32.cont [4/16] 0.0, 128
    %353 = vxpose.xlu0.b32.cont [5/16] 0.0, 128
    %354 = vxpose.xlu0.b32.cont [6/16] 0.0, 128
    %355 = vxpose.xlu0.b32.cont [7/16] 0.0, 128
    %356 = vxpose.xlu0.b32.cont [8/16] 0.0, 128
    %357 = vxpose.xlu0.b32.cont [9/16] 0.0, 128
    %358 = vxpose.xlu0.b32.cont [10/16] 0.0, 128
    %359 = vxpose.xlu0.b32.cont [11/16] 0.0, 128
    %360 = vxpose.xlu0.b32.cont [12/16] 0.0, 128
    %361 = vxpose.xlu0.b32.cont [13/16] 0.0, 128
    %362 = vxpose.xlu0.b32.cont [14/16] 0.0, 128
    %363 = vxpose.xlu0.b32.cont [15/16] 0.0, 128
    %364 = vxpose.xlu0.b32.end [16/16] 0.0, 128
    %v365 = vpop.trf.xlu0
    %v366 = vpop.trf.xlu0
    %v367 = vpop.trf.xlu0
    %v368 = vpop.trf.xlu0
    %v369 = vpop.trf.xlu0
    %v370 = vpop.trf.xlu0
    %v371 = vpop.trf.xlu0
    %v372 = vpop.trf.xlu0
    %v373 = vpop.trf.xlu0
    %v374 = vpop.trf.xlu0
    %v375 = vpop.trf.xlu0
    %v376 = vpop.trf.xlu0
    %v377 = vpop.trf.xlu0
    %v378 = vpop.trf.xlu0
    %v379 = vpop.trf.xlu0
    %v380 = vpop.trf.xlu0
    %381 = vst.msk [vmem:[%s1 + $0x300] sm:$0xff] %vm86, %v333
    %382 = vst.msk [vmem:[%s1 + $0x308] sm:$0xff] %vm86, %v334
    %383 = vst.msk [vmem:[%s1 + $0x310] sm:$0xff] %vm86, %v335
    %384 = vst.msk [vmem:[%s1 + $0x318] sm:$0xff] %vm86, %v336
    %385 = vst.msk [vmem:[%s1 + $0x320] sm:$0xff] %vm86, %v337
    %386 = vst.msk [vmem:[%s1 + $0x328] sm:$0xff] %vm86, %v338
    %387 = vst.msk [vmem:[%s1 + $0x330] sm:$0xff] %vm86, %v339
    %388 = vst.msk [vmem:[%s1 + $0x338] sm:$0xff] %vm86, %v340
    %389 = vst.msk [vmem:[%s1 + $0x340] sm:$0xff] %vm86, %v341
    %390 = vst.msk [vmem:[%s1 + $0x348] sm:$0xff] %vm86, %v342
    %391 = vst.msk [vmem:[%s1 + $0x350] sm:$0xff] %vm86, %v343
    %392 = vst.msk [vmem:[%s1 + $0x358] sm:$0xff] %vm86, %v344
    %393 = vst.msk [vmem:[%s1 + $0x360] sm:$0xff] %vm86, %v345
    %394 = vst.msk [vmem:[%s1 + $0x368] sm:$0xff] %vm86, %v346
    %395 = vst.msk [vmem:[%s1 + $0x370] sm:$0xff] %vm86, %v347
    %396 = vst.msk [vmem:[%s1 + $0x378] sm:$0xff] %vm86, %v348
    %397 = vst.msk [vmem:[%s1 + $0x380] sm:$0xff] %vm86, %v365
    %398 = vst.msk [vmem:[%s1 + $0x388] sm:$0xff] %vm86, %v366
    %399 = vst.msk [vmem:[%s1 + $0x390] sm:$0xff] %vm86, %v367
    %400 = vst.msk [vmem:[%s1 + $0x398] sm:$0xff] %vm86, %v368
    %401 = vst.msk [vmem:[%s1 + $0x3a0] sm:$0xff] %vm86, %v369
    %402 = vst.msk [vmem:[%s1 + $0x3a8] sm:$0xff] %vm86, %v370
    %403 = vst.msk [vmem:[%s1 + $0x3b0] sm:$0xff] %vm86, %v371
    %404 = vst.msk [vmem:[%s1 + $0x3b8] sm:$0xff] %vm86, %v372
    %405 = vst.msk [vmem:[%s1 + $0x3c0] sm:$0xff] %vm86, %v373
    %406 = vst.msk [vmem:[%s1 + $0x3c8] sm:$0xff] %vm86, %v374
    %407 = vst.msk [vmem:[%s1 + $0x3d0] sm:$0xff] %vm86, %v375
    %408 = vst.msk [vmem:[%s1 + $0x3d8] sm:$0xff] %vm86, %v376
    %409 = vst.msk [vmem:[%s1 + $0x3e0] sm:$0xff] %vm86, %v377
    %410 = vst.msk [vmem:[%s1 + $0x3e8] sm:$0xff] %vm86, %v378
    %411 = vst.msk [vmem:[%s1 + $0x3f0] sm:$0xff] %vm86, %v379
    %412 = vst.msk [vmem:[%s1 + $0x3f8] sm:$0xff] %vm86, %v380
    %v413 = vld [vmem:[#allocation2 + $0x40] sm:$0xff]
    %v414 = vld [vmem:[#allocation2 + $0x48] sm:$0xff]
    %415 = vxpose.xlu0.b32.start [1/16] %v413, 128
    %416 = vxpose.xlu0.b32.cont [2/16] 0.0, 128
    %417 = vxpose.xlu0.b32.cont [3/16] 0.0, 128
    %418 = vxpose.xlu0.b32.cont [4/16] 0.0, 128
    %419 = vxpose.xlu0.b32.cont [5/16] 0.0, 128
    %420 = vxpose.xlu0.b32.cont [6/16] 0.0, 128
    %421 = vxpose.xlu0.b32.cont [7/16] 0.0, 128
    %422 = vxpose.xlu0.b32.cont [8/16] 0.0, 128
    %423 = vxpose.xlu0.b32.cont [9/16] 0.0, 128
    %424 = vxpose.xlu0.b32.cont [10/16] 0.0, 128
    %425 = vxpose.xlu0.b32.cont [11/16] 0.0, 128
    %426 = vxpose.xlu0.b32.cont [12/16] 0.0, 128
    %427 = vxpose.xlu0.b32.cont [13/16] 0.0, 128
    %428 = vxpose.xlu0.b32.cont [14/16] 0.0, 128
    %429 = vxpose.xlu0.b32.cont [15/16] 0.0, 128
    %430 = vxpose.xlu0.b32.end [16/16] 0.0, 128
    %v431 = vpop.trf.xlu0
    %v432 = vpop.trf.xlu0
    %v433 = vpop.trf.xlu0
    %v434 = vpop.trf.xlu0
    %v435 = vpop.trf.xlu0
    %v436 = vpop.trf.xlu0
    %v437 = vpop.trf.xlu0
    %v438 = vpop.trf.xlu0
    %v439 = vpop.trf.xlu0
    %v440 = vpop.trf.xlu0
    %v441 = vpop.trf.xlu0
    %v442 = vpop.trf.xlu0
    %v443 = vpop.trf.xlu0
    %v444 = vpop.trf.xlu0
    %v445 = vpop.trf.xlu0
    %v446 = vpop.trf.xlu0
    %447 = vxpose.xlu0.b32.start [1/16] %v414, 128
    %448 = vxpose.xlu0.b32.cont [2/16] 0.0, 128
    %449 = vxpose.xlu0.b32.cont [3/16] 0.0, 128
    %450 = vxpose.xlu0.b32.cont [4/16] 0.0, 128
    %451 = vxpose.xlu0.b32.cont [5/16] 0.0, 128
    %452 = vxpose.xlu0.b32.cont [6/16] 0.0, 128
    %453 = vxpose.xlu0.b32.cont [7/16] 0.0, 128
    %454 = vxpose.xlu0.b32.cont [8/16] 0.0, 128
    %455 = vxpose.xlu0.b32.cont [9/16] 0.0, 128
    %456 = vxpose.xlu0.b32.cont [10/16] 0.0, 128
    %457 = vxpose.xlu0.b32.cont [11/16] 0.0, 128
    %458 = vxpose.xlu0.b32.cont [12/16] 0.0, 128
    %459 = vxpose.xlu0.b32.cont [13/16] 0.0, 128
    %460 = vxpose.xlu0.b32.cont [14/16] 0.0, 128
    %461 = vxpose.xlu0.b32.cont [15/16] 0.0, 128
    %462 = vxpose.xlu0.b32.end [16/16] 0.0, 128
    %v463 = vpop.trf.xlu0
    %v464 = vpop.trf.xlu0
    %v465 = vpop.trf.xlu0
    %v466 = vpop.trf.xlu0
    %v467 = vpop.trf.xlu0
    %v468 = vpop.trf.xlu0
    %v469 = vpop.trf.xlu0
    %v470 = vpop.trf.xlu0
    %v471 = vpop.trf.xlu0
    %v472 = vpop.trf.xlu0
    %v473 = vpop.trf.xlu0
    %v474 = vpop.trf.xlu0
    %v475 = vpop.trf.xlu0
    %v476 = vpop.trf.xlu0
    %v477 = vpop.trf.xlu0
    %v478 = vpop.trf.xlu0
    %479 = vst.msk [vmem:[%s1 + $0x400] sm:$0xff] %vm86, %v431
    %480 = vst.msk [vmem:[%s1 + $0x408] sm:$0xff] %vm86, %v432
    %481 = vst.msk [vmem:[%s1 + $0x410] sm:$0xff] %vm86, %v433
    %482 = vst.msk [vmem:[%s1 + $0x418] sm:$0xff] %vm86, %v434
    %483 = vst.msk [vmem:[%s1 + $0x420] sm:$0xff] %vm86, %v435
    %484 = vst.msk [vmem:[%s1 + $0x428] sm:$0xff] %vm86, %v436
    %485 = vst.msk [vmem:[%s1 + $0x430] sm:$0xff] %vm86, %v437
    %486 = vst.msk [vmem:[%s1 + $0x438] sm:$0xff] %vm86, %v438
    %487 = vst.msk [vmem:[%s1 + $0x440] sm:$0xff] %vm86, %v439
    %488 = vst.msk [vmem:[%s1 + $0x448] sm:$0xff] %vm86, %v440
    %489 = vst.msk [vmem:[%s1 + $0x450] sm:$0xff] %vm86, %v441
    %490 = vst.msk [vmem:[%s1 + $0x458] sm:$0xff] %vm86, %v442
    %491 = vst.msk [vmem:[%s1 + $0x460] sm:$0xff] %vm86, %v443
    %492 = vst.msk [vmem:[%s1 + $0x468] sm:$0xff] %vm86, %v444
    %493 = vst.msk [vmem:[%s1 + $0x470] sm:$0xff] %vm86, %v445
    %494 = vst.msk [vmem:[%s1 + $0x478] sm:$0xff] %vm86, %v446
    %495 = vst.msk [vmem:[%s1 + $0x480] sm:$0xff] %vm86, %v463
    %496 = vst.msk [vmem:[%s1 + $0x488] sm:$0xff] %vm86, %v464
    %497 = vst.msk [vmem:[%s1 + $0x490] sm:$0xff] %vm86, %v465
    %498 = vst.msk [vmem:[%s1 + $0x498] sm:$0xff] %vm86, %v466
    %499 = vst.msk [vmem:[%s1 + $0x4a0] sm:$0xff] %vm86, %v467
    %500 = vst.msk [vmem:[%s1 + $0x4a8] sm:$0xff] %vm86, %v468
    %501 = vst.msk [vmem:[%s1 + $0x4b0] sm:$0xff] %vm86, %v469
    %502 = vst.msk [vmem:[%s1 + $0x4b8] sm:$0xff] %vm86, %v470
    %503 = vst.msk [vmem:[%s1 + $0x4c0] sm:$0xff] %vm86, %v471
    %504 = vst.msk [vmem:[%s1 + $0x4c8] sm:$0xff] %vm86, %v472
    %505 = vst.msk [vmem:[%s1 + $0x4d0] sm:$0xff] %vm86, %v473
    %506 = vst.msk [vmem:[%s1 + $0x4d8] sm:$0xff] %vm86, %v474
    %507 = vst.msk [vmem:[%s1 + $0x4e0] sm:$0xff] %vm86, %v475
    %508 = vst.msk [vmem:[%s1 + $0x4e8] sm:$0xff] %vm86, %v476
    %509 = vst.msk [vmem:[%s1 + $0x4f0] sm:$0xff] %vm86, %v477
    %510 = vst.msk [vmem:[%s1 + $0x4f8] sm:$0xff] %vm86, %v478
    %v511 = vld [vmem:[#allocation2 + $0x50] sm:$0xff]
    %v512 = vld [vmem:[#allocation2 + $0x58] sm:$0xff]
    %513 = vxpose.xlu0.b32.start [1/16] %v511, 128
    %514 = vxpose.xlu0.b32.cont [2/16] 0.0, 128
    %515 = vxpose.xlu0.b32.cont [3/16] 0.0, 128
    %516 = vxpose.xlu0.b32.cont [4/16] 0.0, 128
    %517 = vxpose.xlu0.b32.cont [5/16] 0.0, 128
    %518 = vxpose.xlu0.b32.cont [6/16] 0.0, 128
    %519 = vxpose.xlu0.b32.cont [7/16] 0.0, 128
    %520 = vxpose.xlu0.b32.cont [8/16] 0.0, 128
    %521 = vxpose.xlu0.b32.cont [9/16] 0.0, 128
    %522 = vxpose.xlu0.b32.cont [10/16] 0.0, 128
    %523 = vxpose.xlu0.b32.cont [11/16] 0.0, 128
    %524 = vxpose.xlu0.b32.cont [12/16] 0.0, 128
    %525 = vxpose.xlu0.b32.cont [13/16] 0.0, 128
    %526 = vxpose.xlu0.b32.cont [14/16] 0.0, 128
    %527 = vxpose.xlu0.b32.cont [15/16] 0.0, 128
    %528 = vxpose.xlu0.b32.end [16/16] 0.0, 128
    %v529 = vpop.trf.xlu0
    %v530 = vpop.trf.xlu0
    %v531 = vpop.trf.xlu0
    %v532 = vpop.trf.xlu0
    %v533 = vpop.trf.xlu0
    %v534 = vpop.trf.xlu0
    %v535 = vpop.trf.xlu0
    %v536 = vpop.trf.xlu0
    %v537 = vpop.trf.xlu0
    %v538 = vpop.trf.xlu0
    %v539 = vpop.trf.xlu0
    %v540 = vpop.trf.xlu0
    %v541 = vpop.trf.xlu0
    %v542 = vpop.trf.xlu0
    %v543 = vpop.trf.xlu0
    %v544 = vpop.trf.xlu0
    %545 = vxpose.xlu0.b32.start [1/16] %v512, 128
    %546 = vxpose.xlu0.b32.cont [2/16] 0.0, 128
    %547 = vxpose.xlu0.b32.cont [3/16] 0.0, 128
    %548 = vxpose.xlu0.b32.cont [4/16] 0.0, 128
    %549 = vxpose.xlu0.b32.cont [5/16] 0.0, 128
    %550 = vxpose.xlu0.b32.cont [6/16] 0.0, 128
    %551 = vxpose.xlu0.b32.cont [7/16] 0.0, 128
    %552 = vxpose.xlu0.b32.cont [8/16] 0.0, 128
    %553 = vxpose.xlu0.b32.cont [9/16] 0.0, 128
    %554 = vxpose.xlu0.b32.cont [10/16] 0.0, 128
    %555 = vxpose.xlu0.b32.cont [11/16] 0.0, 128
    %556 = vxpose.xlu0.b32.cont [12/16] 0.0, 128
    %557 = vxpose.xlu0.b32.cont [13/16] 0.0, 128
    %558 = vxpose.xlu0.b32.cont [14/16] 0.0, 128
    %559 = vxpose.xlu0.b32.cont [15/16] 0.0, 128
    %560 = vxpose.xlu0.b32.end [16/16] 0.0, 128
    %v561 = vpop.trf.xlu0
    %v562 = vpop.trf.xlu0
    %v563 = vpop.trf.xlu0
    %v564 = vpop.trf.xlu0
    %v565 = vpop.trf.xlu0
    %v566 = vpop.trf.xlu0
    %v567 = vpop.trf.xlu0
    %v568 = vpop.trf.xlu0
    %v569 = vpop.trf.xlu0
    %v570 = vpop.trf.xlu0
    %v571 = vpop.trf.xlu0
    %v572 = vpop.trf.xlu0
    %v573 = vpop.trf.xlu0
    %v574 = vpop.trf.xlu0
    %v575 = vpop.trf.xlu0
    %v576 = vpop.trf.xlu0
    %577 = vst.msk [vmem:[%s1 + $0x500] sm:$0xff] %vm86, %v529
    %578 = vst.msk [vmem:[%s1 + $0x508] sm:$0xff] %vm86, %v530
    %579 = vst.msk [vmem:[%s1 + $0x510] sm:$0xff] %vm86, %v531
    %580 = vst.msk [vmem:[%s1 + $0x518] sm:$0xff] %vm86, %v532
    %581 = vst.msk [vmem:[%s1 + $0x520] sm:$0xff] %vm86, %v533
    %582 = vst.msk [vmem:[%s1 + $0x528] sm:$0xff] %vm86, %v534
    %583 = vst.msk [vmem:[%s1 + $0x530] sm:$0xff] %vm86, %v535
    %584 = vst.msk [vmem:[%s1 + $0x538] sm:$0xff] %vm86, %v536
    %585 = vst.msk [vmem:[%s1 + $0x540] sm:$0xff] %vm86, %v537
    %586 = vst.msk [vmem:[%s1 + $0x548] sm:$0xff] %vm86, %v538
    %587 = vst.msk [vmem:[%s1 + $0x550] sm:$0xff] %vm86, %v539
    %588 = vst.msk [vmem:[%s1 + $0x558] sm:$0xff] %vm86, %v540
    %589 = vst.msk [vmem:[%s1 + $0x560] sm:$0xff] %vm86, %v541
    %590 = vst.msk [vmem:[%s1 + $0x568] sm:$0xff] %vm86, %v542
    %591 = vst.msk [vmem:[%s1 + $0x570] sm:$0xff] %vm86, %v543
    %592 = vst.msk [vmem:[%s1 + $0x578] sm:$0xff] %vm86, %v544
    %593 = vst.msk [vmem:[%s1 + $0x580] sm:$0xff] %vm86, %v561
    %594 = vst.msk [vmem:[%s1 + $0x588] sm:$0xff] %vm86, %v562
    %595 = vst.msk [vmem:[%s1 + $0x590] sm:$0xff] %vm86, %v563
    %596 = vst.msk [vmem:[%s1 + $0x598] sm:$0xff] %vm86, %v564
    %597 = vst.msk [vmem:[%s1 + $0x5a0] sm:$0xff] %vm86, %v565
    %598 = vst.msk [vmem:[%s1 + $0x5a8] sm:$0xff] %vm86, %v566
    %599 = vst.msk [vmem:[%s1 + $0x5b0] sm:$0xff] %vm86, %v567
    %600 = vst.msk [vmem:[%s1 + $0x5b8] sm:$0xff] %vm86, %v568
    %601 = vst.msk [vmem:[%s1 + $0x5c0] sm:$0xff] %vm86, %v569
    %602 = vst.msk [vmem:[%s1 + $0x5c8] sm:$0xff] %vm86, %v570
    %603 = vst.msk [vmem:[%s1 + $0x5d0] sm:$0xff] %vm86, %v571
    %604 = vst.msk [vmem:[%s1 + $0x5d8] sm:$0xff] %vm86, %v572
    %605 = vst.msk [vmem:[%s1 + $0x5e0] sm:$0xff] %vm86, %v573
    %606 = vst.msk [vmem:[%s1 + $0x5e8] sm:$0xff] %vm86, %v574
    %607 = vst.msk [vmem:[%s1 + $0x5f0] sm:$0xff] %vm86, %v575
    %608 = vst.msk [vmem:[%s1 + $0x5f8] sm:$0xff] %vm86, %v576
    %v609 = vld [vmem:[#allocation2 + $0x60] sm:$0xff]
    %v610 = vld [vmem:[#allocation2 + $0x68] sm:$0xff]
    %611 = vxpose.xlu0.b32.start [1/16] %v609, 128
    %612 = vxpose.xlu0.b32.cont [2/16] 0.0, 128
    %613 = vxpose.xlu0.b32.cont [3/16] 0.0, 128
    %614 = vxpose.xlu0.b32.cont [4/16] 0.0, 128
    %615 = vxpose.xlu0.b32.cont [5/16] 0.0, 128
    %616 = vxpose.xlu0.b32.cont [6/16] 0.0, 128
    %617 = vxpose.xlu0.b32.cont [7/16] 0.0, 128
    %618 = vxpose.xlu0.b32.cont [8/16] 0.0, 128
    %619 = vxpose.xlu0.b32.cont [9/16] 0.0, 128
    %620 = vxpose.xlu0.b32.cont [10/16] 0.0, 128
    %621 = vxpose.xlu0.b32.cont [11/16] 0.0, 128
    %622 = vxpose.xlu0.b32.cont [12/16] 0.0, 128
    %623 = vxpose.xlu0.b32.cont [13/16] 0.0, 128
    %624 = vxpose.xlu0.b32.cont [14/16] 0.0, 128
    %625 = vxpose.xlu0.b32.cont [15/16] 0.0, 128
    %626 = vxpose.xlu0.b32.end [16/16] 0.0, 128
    %v627 = vpop.trf.xlu0
    %v628 = vpop.trf.xlu0
    %v629 = vpop.trf.xlu0
    %v630 = vpop.trf.xlu0
    %v631 = vpop.trf.xlu0
    %v632 = vpop.trf.xlu0
    %v633 = vpop.trf.xlu0
    %v634 = vpop.trf.xlu0
    %v635 = vpop.trf.xlu0
    %v636 = vpop.trf.xlu0
    %v637 = vpop.trf.xlu0
    %v638 = vpop.trf.xlu0
    %v639 = vpop.trf.xlu0
    %v640 = vpop.trf.xlu0
    %v641 = vpop.trf.xlu0
    %v642 = vpop.trf.xlu0
    %643 = vxpose.xlu0.b32.start [1/16] %v610, 128
    %644 = vxpose.xlu0.b32.cont [2/16] 0.0, 128
    %645 = vxpose.xlu0.b32.cont [3/16] 0.0, 128
    %646 = vxpose.xlu0.b32.cont [4/16] 0.0, 128
    %647 = vxpose.xlu0.b32.cont [5/16] 0.0, 128
    %648 = vxpose.xlu0.b32.cont [6/16] 0.0, 128
    %649 = vxpose.xlu0.b32.cont [7/16] 0.0, 128
    %650 = vxpose.xlu0.b32.cont [8/16] 0.0, 128
    %651 = vxpose.xlu0.b32.cont [9/16] 0.0, 128
    %652 = vxpose.xlu0.b32.cont [10/16] 0.0, 128
    %653 = vxpose.xlu0.b32.cont [11/16] 0.0, 128
    %654 = vxpose.xlu0.b32.cont [12/16] 0.0, 128
    %655 = vxpose.xlu0.b32.cont [13/16] 0.0, 128
    %656 = vxpose.xlu0.b32.cont [14/16] 0.0, 128
    %657 = vxpose.xlu0.b32.cont [15/16] 0.0, 128
    %658 = vxpose.xlu0.b32.end [16/16] 0.0, 128
    %v659 = vpop.trf.xlu0
    %v660 = vpop.trf.xlu0
    %v661 = vpop.trf.xlu0
    %v662 = vpop.trf.xlu0
    %v663 = vpop.trf.xlu0
    %v664 = vpop.trf.xlu0
    %v665 = vpop.trf.xlu0
    %v666 = vpop.trf.xlu0
    %v667 = vpop.trf.xlu0
    %v668 = vpop.trf.xlu0
    %v669 = vpop.trf.xlu0
    %v670 = vpop.trf.xlu0
    %v671 = vpop.trf.xlu0
    %v672 = vpop.trf.xlu0
    %v673 = vpop.trf.xlu0
    %v674 = vpop.trf.xlu0
    %675 = vst.msk [vmem:[%s1 + $0x600] sm:$0xff] %vm86, %v627
    %676 = vst.msk [vmem:[%s1 + $0x608] sm:$0xff] %vm86, %v628
    %677 = vst.msk [vmem:[%s1 + $0x610] sm:$0xff] %vm86, %v629
    %678 = vst.msk [vmem:[%s1 + $0x618] sm:$0xff] %vm86, %v630
    %679 = vst.msk [vmem:[%s1 + $0x620] sm:$0xff] %vm86, %v631
    %680 = vst.msk [vmem:[%s1 + $0x628] sm:$0xff] %vm86, %v632
    %681 = vst.msk [vmem:[%s1 + $0x630] sm:$0xff] %vm86, %v633
    %682 = vst.msk [vmem:[%s1 + $0x638] sm:$0xff] %vm86, %v634
    %683 = vst.msk [vmem:[%s1 + $0x640] sm:$0xff] %vm86, %v635
    %684 = vst.msk [vmem:[%s1 + $0x648] sm:$0xff] %vm86, %v636
    %685 = vst.msk [vmem:[%s1 + $0x650] sm:$0xff] %vm86, %v637
    %686 = vst.msk [vmem:[%s1 + $0x658] sm:$0xff] %vm86, %v638
    %687 = vst.msk [vmem:[%s1 + $0x660] sm:$0xff] %vm86, %v639
    %688 = vst.msk [vmem:[%s1 + $0x668] sm:$0xff] %vm86, %v640
    %689 = vst.msk [vmem:[%s1 + $0x670] sm:$0xff] %vm86, %v641
    %690 = vst.msk [vmem:[%s1 + $0x678] sm:$0xff] %vm86, %v642
    %691 = vst.msk [vmem:[%s1 + $0x680] sm:$0xff] %vm86, %v659
    %692 = vst.msk [vmem:[%s1 + $0x688] sm:$0xff] %vm86, %v660
    %693 = vst.msk [vmem:[%s1 + $0x690] sm:$0xff] %vm86, %v661
    %694 = vst.msk [vmem:[%s1 + $0x698] sm:$0xff] %vm86, %v662
    %695 = vst.msk [vmem:[%s1 + $0x6a0] sm:$0xff] %vm86, %v663
    %696 = vst.msk [vmem:[%s1 + $0x6a8] sm:$0xff] %vm86, %v664
    %697 = vst.msk [vmem:[%s1 + $0x6b0] sm:$0xff] %vm86, %v665
    %698 = vst.msk [vmem:[%s1 + $0x6b8] sm:$0xff] %vm86, %v666
    %699 = vst.msk [vmem:[%s1 + $0x6c0] sm:$0xff] %vm86, %v667
    %700 = vst.msk [vmem:[%s1 + $0x6c8] sm:$0xff] %vm86, %v668
    %701 = vst.msk [vmem:[%s1 + $0x6d0] sm:$0xff] %vm86, %v669
    %702 = vst.msk [vmem:[%s1 + $0x6d8] sm:$0xff] %vm86, %v670
    %703 = vst.msk [vmem:[%s1 + $0x6e0] sm:$0xff] %vm86, %v671
    %704 = vst.msk [vmem:[%s1 + $0x6e8] sm:$0xff] %vm86, %v672
    %705 = vst.msk [vmem:[%s1 + $0x6f0] sm:$0xff] %vm86, %v673
    %706 = vst.msk [vmem:[%s1 + $0x6f8] sm:$0xff] %vm86, %v674
    %v707 = vld [vmem:[#allocation2 + $0x70] sm:$0xff]
    %v708 = vld [vmem:[#allocation2 + $0x78] sm:$0xff]
    %709 = vxpose.xlu0.b32.start [1/16] %v707, 128
    %710 = vxpose.xlu0.b32.cont [2/16] 0.0, 128
    %711 = vxpose.xlu0.b32.cont [3/16] 0.0, 128
    %712 = vxpose.xlu0.b32.cont [4/16] 0.0, 128
    %713 = vxpose.xlu0.b32.cont [5/16] 0.0, 128
    %714 = vxpose.xlu0.b32.cont [6/16] 0.0, 128
    %715 = vxpose.xlu0.b32.cont [7/16] 0.0, 128
    %716 = vxpose.xlu0.b32.cont [8/16] 0.0, 128
    %717 = vxpose.xlu0.b32.cont [9/16] 0.0, 128
    %718 = vxpose.xlu0.b32.cont [10/16] 0.0, 128
    %719 = vxpose.xlu0.b32.cont [11/16] 0.0, 128
    %720 = vxpose.xlu0.b32.cont [12/16] 0.0, 128
    %721 = vxpose.xlu0.b32.cont [13/16] 0.0, 128
    %722 = vxpose.xlu0.b32.cont [14/16] 0.0, 128
    %723 = vxpose.xlu0.b32.cont [15/16] 0.0, 128
    %724 = vxpose.xlu0.b32.end [16/16] 0.0, 128
    %v725 = vpop.trf.xlu0
    %v726 = vpop.trf.xlu0
    %v727 = vpop.trf.xlu0
    %v728 = vpop.trf.xlu0
    %v729 = vpop.trf.xlu0
    %v730 = vpop.trf.xlu0
    %v731 = vpop.trf.xlu0
    %v732 = vpop.trf.xlu0
    %v733 = vpop.trf.xlu0
    %v734 = vpop.trf.xlu0
    %v735 = vpop.trf.xlu0
    %v736 = vpop.trf.xlu0
    %v737 = vpop.trf.xlu0
    %v738 = vpop.trf.xlu0
    %v739 = vpop.trf.xlu0
    %v740 = vpop.trf.xlu0
    %741 = vxpose.xlu0.b32.start [1/16] %v708, 128
    %742 = vxpose.xlu0.b32.cont [2/16] 0.0, 128
    %743 = vxpose.xlu0.b32.cont [3/16] 0.0, 128
    %744 = vxpose.xlu0.b32.cont [4/16] 0.0, 128
    %745 = vxpose.xlu0.b32.cont [5/16] 0.0, 128
    %746 = vxpose.xlu0.b32.cont [6/16] 0.0, 128
    %747 = vxpose.xlu0.b32.cont [7/16] 0.0, 128
    %748 = vxpose.xlu0.b32.cont [8/16] 0.0, 128
    %749 = vxpose.xlu0.b32.cont [9/16] 0.0, 128
    %750 = vxpose.xlu0.b32.cont [10/16] 0.0, 128
    %751 = vxpose.xlu0.b32.cont [11/16] 0.0, 128
    %752 = vxpose.xlu0.b32.cont [12/16] 0.0, 128
    %753 = vxpose.xlu0.b32.cont [13/16] 0.0, 128
    %754 = vxpose.xlu0.b32.cont [14/16] 0.0, 128
    %755 = vxpose.xlu0.b32.cont [15/16] 0.0, 128
    %756 = vxpose.xlu0.b32.end [16/16] 0.0, 128
    %v757 = vpop.trf.xlu0
    %v758 = vpop.trf.xlu0
    %v759 = vpop.trf.xlu0
    %v760 = vpop.trf.xlu0
    %v761 = vpop.trf.xlu0
    %v762 = vpop.trf.xlu0
    %v763 = vpop.trf.xlu0
    %v764 = vpop.trf.xlu0
    %v765 = vpop.trf.xlu0
    %v766 = vpop.trf.xlu0
    %v767 = vpop.trf.xlu0
    %v768 = vpop.trf.xlu0
    %v769 = vpop.trf.xlu0
    %v770 = vpop.trf.xlu0
    %v771 = vpop.trf.xlu0
    %v772 = vpop.trf.xlu0
    %773 = vst.msk [vmem:[%s1 + $0x700] sm:$0xff] %vm86, %v725
    %774 = vst.msk [vmem:[%s1 + $0x708] sm:$0xff] %vm86, %v726
    %775 = vst.msk [vmem:[%s1 + $0x710] sm:$0xff] %vm86, %v727
    %776 = vst.msk [vmem:[%s1 + $0x718] sm:$0xff] %vm86, %v728
    %777 = vst.msk [vmem:[%s1 + $0x720] sm:$0xff] %vm86, %v729
    %778 = vst.msk [vmem:[%s1 + $0x728] sm:$0xff] %vm86, %v730
    %779 = vst.msk [vmem:[%s1 + $0x730] sm:$0xff] %vm86, %v731
    %780 = vst.msk [vmem:[%s1 + $0x738] sm:$0xff] %vm86, %v732
    %781 = vst.msk [vmem:[%s1 + $0x740] sm:$0xff] %vm86, %v733
    %782 = vst.msk [vmem:[%s1 + $0x748] sm:$0xff] %vm86, %v734
    %783 = vst.msk [vmem:[%s1 + $0x750] sm:$0xff] %vm86, %v735
    %784 = vst.msk [vmem:[%s1 + $0x758] sm:$0xff] %vm86, %v736
    %785 = vst.msk [vmem:[%s1 + $0x760] sm:$0xff] %vm86, %v737
    %786 = vst.msk [vmem:[%s1 + $0x768] sm:$0xff] %vm86, %v738
    %787 = vst.msk [vmem:[%s1 + $0x770] sm:$0xff] %vm86, %v739
    %788 = vst.msk [vmem:[%s1 + $0x778] sm:$0xff] %vm86, %v740
    %789 = vst.msk [vmem:[%s1 + $0x780] sm:$0xff] %vm86, %v757
    %790 = vst.msk [vmem:[%s1 + $0x788] sm:$0xff] %vm86, %v758
    %791 = vst.msk [vmem:[%s1 + $0x790] sm:$0xff] %vm86, %v759
    %792 = vst.msk [vmem:[%s1 + $0x798] sm:$0xff] %vm86, %v760
    %793 = vst.msk [vmem:[%s1 + $0x7a0] sm:$0xff] %vm86, %v761
    %794 = vst.msk [vmem:[%s1 + $0x7a8] sm:$0xff] %vm86, %v762
    %795 = vst.msk [vmem:[%s1 + $0x7b0] sm:$0xff] %vm86, %v763
    %796 = vst.msk [vmem:[%s1 + $0x7b8] sm:$0xff] %vm86, %v764
    %797 = vst.msk [vmem:[%s1 + $0x7c0] sm:$0xff] %vm86, %v765
    %798 = vst.msk [vmem:[%s1 + $0x7c8] sm:$0xff] %vm86, %v766
    %799 = vst.msk [vmem:[%s1 + $0x7d0] sm:$0xff] %vm86, %v767
    %800 = vst.msk [vmem:[%s1 + $0x7d8] sm:$0xff] %vm86, %v768
    %801 = vst.msk [vmem:[%s1 + $0x7e0] sm:$0xff] %vm86, %v769
    %802 = vst.msk [vmem:[%s1 + $0x7e8] sm:$0xff] %vm86, %v770
    %803 = vst.msk [vmem:[%s1 + $0x7f0] sm:$0xff] %vm86, %v771
    %804 = vst.msk [vmem:[%s1 + $0x7f8] sm:$0xff] %vm86, %v772
    %v805 = vld [vmem:[#allocation2 + $0x80] sm:$0xff]
    %v806 = vld [vmem:[#allocation2 + $0x88] sm:$0xff]
    %807 = vxpose.xlu0.b32.start [1/16] %v805, 128
    %808 = vxpose.xlu0.b32.cont [2/16] 0.0, 128
    %809 = vxpose.xlu0.b32.cont [3/16] 0.0, 128
    %810 = vxpose.xlu0.b32.cont [4/16] 0.0, 128
    %811 = vxpose.xlu0.b32.cont [5/16] 0.0, 128
    %812 = vxpose.xlu0.b32.cont [6/16] 0.0, 128
    %813 = vxpose.xlu0.b32.cont [7/16] 0.0, 128
    %814 = vxpose.xlu0.b32.cont [8/16] 0.0, 128
    %815 = vxpose.xlu0.b32.cont [9/16] 0.0, 128
    %816 = vxpose.xlu0.b32.cont [10/16] 0.0, 128
    %817 = vxpose.xlu0.b32.cont [11/16] 0.0, 128
    %818 = vxpose.xlu0.b32.cont [12/16] 0.0, 128
    %819 = vxpose.xlu0.b32.cont [13/16] 0.0, 128
    %820 = vxpose.xlu0.b32.cont [14/16] 0.0, 128
    %821 = vxpose.xlu0.b32.cont [15/16] 0.0, 128
    %822 = vxpose.xlu0.b32.end [16/16] 0.0, 128
    %v823 = vpop.trf.xlu0
    %v824 = vpop.trf.xlu0
    %v825 = vpop.trf.xlu0
    %v826 = vpop.trf.xlu0
    %v827 = vpop.trf.xlu0
    %v828 = vpop.trf.xlu0
    %v829 = vpop.trf.xlu0
    %v830 = vpop.trf.xlu0
    %v831 = vpop.trf.xlu0
    %v832 = vpop.trf.xlu0
    %v833 = vpop.trf.xlu0
    %v834 = vpop.trf.xlu0
    %v835 = vpop.trf.xlu0
    %v836 = vpop.trf.xlu0
    %v837 = vpop.trf.xlu0
    %v838 = vpop.trf.xlu0
    %839 = vxpose.xlu0.b32.start [1/16] %v806, 128
    %840 = vxpose.xlu0.b32.cont [2/16] 0.0, 128
    %841 = vxpose.xlu0.b32.cont [3/16] 0.0, 128
    %842 = vxpose.xlu0.b32.cont [4/16] 0.0, 128
    %843 = vxpose.xlu0.b32.cont [5/16] 0.0, 128
    %844 = vxpose.xlu0.b32.cont [6/16] 0.0, 128
    %845 = vxpose.xlu0.b32.cont [7/16] 0.0, 128
    %846 = vxpose.xlu0.b32.cont [8/16] 0.0, 128
    %847 = vxpose.xlu0.b32.cont [9/16] 0.0, 128
    %848 = vxpose.xlu0.b32.cont [10/16] 0.0, 128
    %849 = vxpose.xlu0.b32.cont [11/16] 0.0, 128
    %850 = vxpose.xlu0.b32.cont [12/16] 0.0, 128
    %851 = vxpose.xlu0.b32.cont [13/16] 0.0, 128
    %852 = vxpose.xlu0.b32.cont [14/16] 0.0, 128
    %853 = vxpose.xlu0.b32.cont [15/16] 0.0, 128
    %854 = vxpose.xlu0.b32.end [16/16] 0.0, 128
    %v855 = vpop.trf.xlu0
    %v856 = vpop.trf.xlu0
    %v857 = vpop.trf.xlu0
    %v858 = vpop.trf.xlu0
    %v859 = vpop.trf.xlu0
    %v860 = vpop.trf.xlu0
    %v861 = vpop.trf.xlu0
    %v862 = vpop.trf.xlu0
    %v863 = vpop.trf.xlu0
    %v864 = vpop.trf.xlu0
    %v865 = vpop.trf.xlu0
    %v866 = vpop.trf.xlu0
    %v867 = vpop.trf.xlu0
    %v868 = vpop.trf.xlu0
    %v869 = vpop.trf.xlu0
    %v870 = vpop.trf.xlu0
    %871 = vst.msk [vmem:[%s1 + $0x800] sm:$0xff] %vm86, %v823
    %872 = vst.msk [vmem:[%s1 + $0x808] sm:$0xff] %vm86, %v824
    %873 = vst.msk [vmem:[%s1 + $0x810] sm:$0xff] %vm86, %v825
    %874 = vst.msk [vmem:[%s1 + $0x818] sm:$0xff] %vm86, %v826
    %875 = vst.msk [vmem:[%s1 + $0x820] sm:$0xff] %vm86, %v827
    %876 = vst.msk [vmem:[%s1 + $0x828] sm:$0xff] %vm86, %v828
    %877 = vst.msk [vmem:[%s1 + $0x830] sm:$0xff] %vm86, %v829
    %878 = vst.msk [vmem:[%s1 + $0x838] sm:$0xff] %vm86, %v830
    %879 = vst.msk [vmem:[%s1 + $0x840] sm:$0xff] %vm86, %v831
    %880 = vst.msk [vmem:[%s1 + $0x848] sm:$0xff] %vm86, %v832
    %881 = vst.msk [vmem:[%s1 + $0x850] sm:$0xff] %vm86, %v833
    %882 = vst.msk [vmem:[%s1 + $0x858] sm:$0xff] %vm86, %v834
    %883 = vst.msk [vmem:[%s1 + $0x860] sm:$0xff] %vm86, %v835
    %884 = vst.msk [vmem:[%s1 + $0x868] sm:$0xff] %vm86, %v836
    %885 = vst.msk [vmem:[%s1 + $0x870] sm:$0xff] %vm86, %v837
    %886 = vst.msk [vmem:[%s1 + $0x878] sm:$0xff] %vm86, %v838
    %887 = vst.msk [vmem:[%s1 + $0x880] sm:$0xff] %vm86, %v855
    %888 = vst.msk [vmem:[%s1 + $0x888] sm:$0xff] %vm86, %v856
    %889 = vst.msk [vmem:[%s1 + $0x890] sm:$0xff] %vm86, %v857
    %890 = vst.msk [vmem:[%s1 + $0x898] sm:$0xff] %vm86, %v858
    %891 = vst.msk [vmem:[%s1 + $0x8a0] sm:$0xff] %vm86, %v859
    %892 = vst.msk [vmem:[%s1 + $0x8a8] sm:$0xff] %vm86, %v860
    %893 = vst.msk [vmem:[%s1 + $0x8b0] sm:$0xff] %vm86, %v861
    %894 = vst.msk [vmem:[%s1 + $0x8b8] sm:$0xff] %vm86, %v862
    %895 = vst.msk [vmem:[%s1 + $0x8c0] sm:$0xff] %vm86, %v863
    %896 = vst.msk [vmem:[%s1 + $0x8c8] sm:$0xff] %vm86, %v864
    %897 = vst.msk [vmem:[%s1 + $0x8d0] sm:$0xff] %vm86, %v865
    %898 = vst.msk [vmem:[%s1 + $0x8d8] sm:$0xff] %vm86, %v866
    %899 = vst.msk [vmem:[%s1 + $0x8e0] sm:$0xff] %vm86, %v867
    %900 = vst.msk [vmem:[%s1 + $0x8e8] sm:$0xff] %vm86, %v868
    %901 = vst.msk [vmem:[%s1 + $0x8f0] sm:$0xff] %vm86, %v869
    %902 = vst.msk [vmem:[%s1 + $0x8f8] sm:$0xff] %vm86, %v870
    %v903 = vld [vmem:[#allocation2 + $0x90] sm:$0xff]
    %v904 = vld [vmem:[#allocation2 + $0x98] sm:$0xff]
    %905 = vxpose.xlu0.b32.start [1/16] %v903, 128
    %906 = vxpose.xlu0.b32.cont [2/16] 0.0, 128
    %907 = vxpose.xlu0.b32.cont [3/16] 0.0, 128
    %908 = vxpose.xlu0.b32.cont [4/16] 0.0, 128
    %909 = vxpose.xlu0.b32.cont [5/16] 0.0, 128
    %910 = vxpose.xlu0.b32.cont [6/16] 0.0, 128
    %911 = vxpose.xlu0.b32.cont [7/16] 0.0, 128
    %912 = vxpose.xlu0.b32.cont [8/16] 0.0, 128
    %913 = vxpose.xlu0.b32.cont [9/16] 0.0, 128
    %914 = vxpose.xlu0.b32.cont [10/16] 0.0, 128
    %915 = vxpose.xlu0.b32.cont [11/16] 0.0, 128
    %916 = vxpose.xlu0.b32.cont [12/16] 0.0, 128
    %917 = vxpose.xlu0.b32.cont [13/16] 0.0, 128
    %918 = vxpose.xlu0.b32.cont [14/16] 0.0, 128
    %919 = vxpose.xlu0.b32.cont [15/16] 0.0, 128
    %920 = vxpose.xlu0.b32.end [16/16] 0.0, 128
    %v921 = vpop.trf.xlu0
    %v922 = vpop.trf.xlu0
    %v923 = vpop.trf.xlu0
    %v924 = vpop.trf.xlu0
    %v925 = vpop.trf.xlu0
    %v926 = vpop.trf.xlu0
    %v927 = vpop.trf.xlu0
    %v928 = vpop.trf.xlu0
    %v929 = vpop.trf.xlu0
    %v930 = vpop.trf.xlu0
    %v931 = vpop.trf.xlu0
    %v932 = vpop.trf.xlu0
    %v933 = vpop.trf.xlu0
    %v934 = vpop.trf.xlu0
    %v935 = vpop.trf.xlu0
    %v936 = vpop.trf.xlu0
    %937 = vxpose.xlu0.b32.start [1/16] %v904, 128
    %938 = vxpose.xlu0.b32.cont [2/16] 0.0, 128
    %939 = vxpose.xlu0.b32.cont [3/16] 0.0, 128
    %940 = vxpose.xlu0.b32.cont [4/16] 0.0, 128
    %941 = vxpose.xlu0.b32.cont [5/16] 0.0, 128
    %942 = vxpose.xlu0.b32.cont [6/16] 0.0, 128
    %943 = vxpose.xlu0.b32.cont [7/16] 0.0, 128
    %944 = vxpose.xlu0.b32.cont [8/16] 0.0, 128
    %945 = vxpose.xlu0.b32.cont [9/16] 0.0, 128
    %946 = vxpose.xlu0.b32.cont [10/16] 0.0, 128
    %947 = vxpose.xlu0.b32.cont [11/16] 0.0, 128
    %948 = vxpose.xlu0.b32.cont [12/16] 0.0, 128
    %949 = vxpose.xlu0.b32.cont [13/16] 0.0, 128
    %950 = vxpose.xlu0.b32.cont [14/16] 0.0, 128
    %951 = vxpose.xlu0.b32.cont [15/16] 0.0, 128
    %952 = vxpose.xlu0.b32.end [16/16] 0.0, 128
    %v953 = vpop.trf.xlu0
    %v954 = vpop.trf.xlu0
    %v955 = vpop.trf.xlu0
    %v956 = vpop.trf.xlu0
    %v957 = vpop.trf.xlu0
    %v958 = vpop.trf.xlu0
    %v959 = vpop.trf.xlu0
    %v960 = vpop.trf.xlu0
    %v961 = vpop.trf.xlu0
    %v962 = vpop.trf.xlu0
    %v963 = vpop.trf.xlu0
    %v964 = vpop.trf.xlu0
    %v965 = vpop.trf.xlu0
    %v966 = vpop.trf.xlu0
    %v967 = vpop.trf.xlu0
    %v968 = vpop.trf.xlu0
    %969 = vst.msk [vmem:[%s1 + $0x900] sm:$0xff] %vm86, %v921
    %970 = vst.msk [vmem:[%s1 + $0x908] sm:$0xff] %vm86, %v922
    %971 = vst.msk [vmem:[%s1 + $0x910] sm:$0xff] %vm86, %v923
    %972 = vst.msk [vmem:[%s1 + $0x918] sm:$0xff] %vm86, %v924
    %973 = vst.msk [vmem:[%s1 + $0x920] sm:$0xff] %vm86, %v925
    %974 = vst.msk [vmem:[%s1 + $0x928] sm:$0xff] %vm86, %v926
    %975 = vst.msk [vmem:[%s1 + $0x930] sm:$0xff] %vm86, %v927
    %976 = vst.msk [vmem:[%s1 + $0x938] sm:$0xff] %vm86, %v928
    %977 = vst.msk [vmem:[%s1 + $0x940] sm:$0xff] %vm86, %v929
    %978 = vst.msk [vmem:[%s1 + $0x948] sm:$0xff] %vm86, %v930
    %979 = vst.msk [vmem:[%s1 + $0x950] sm:$0xff] %vm86, %v931
    %980 = vst.msk [vmem:[%s1 + $0x958] sm:$0xff] %vm86, %v932
    %981 = vst.msk [vmem:[%s1 + $0x960] sm:$0xff] %vm86, %v933
    %982 = vst.msk [vmem:[%s1 + $0x968] sm:$0xff] %vm86, %v934
    %983 = vst.msk [vmem:[%s1 + $0x970] sm:$0xff] %vm86, %v935
    %984 = vst.msk [vmem:[%s1 + $0x978] sm:$0xff] %vm86, %v936
    %985 = vst.msk [vmem:[%s1 + $0x980] sm:$0xff] %vm86, %v953
    %986 = vst.msk [vmem:[%s1 + $0x988] sm:$0xff] %vm86, %v954
    %987 = vst.msk [vmem:[%s1 + $0x990] sm:$0xff] %vm86, %v955
    %988 = vst.msk [vmem:[%s1 + $0x998] sm:$0xff] %vm86, %v956
    %989 = vst.msk [vmem:[%s1 + $0x9a0] sm:$0xff] %vm86, %v957
    %990 = vst.msk [vmem:[%s1 + $0x9a8] sm:$0xff] %vm86, %v958
    %991 = vst.msk [vmem:[%s1 + $0x9b0] sm:$0xff] %vm86, %v959
    %992 = vst.msk [vmem:[%s1 + $0x9b8] sm:$0xff] %vm86, %v960
    %993 = vst.msk [vmem:[%s1 + $0x9c0] sm:$0xff] %vm86, %v961
    %994 = vst.msk [vmem:[%s1 + $0x9c8] sm:$0xff] %vm86, %v962
    %995 = vst.msk [vmem:[%s1 + $0x9d0] sm:$0xff] %vm86, %v963
    %996 = vst.msk [vmem:[%s1 + $0x9d8] sm:$0xff] %vm86, %v964
    %997 = vst.msk [vmem:[%s1 + $0x9e0] sm:$0xff] %vm86, %v965
    %998 = vst.msk [vmem:[%s1 + $0x9e8] sm:$0xff] %vm86, %v966
    %999 = vst.msk [vmem:[%s1 + $0x9f0] sm:$0xff] %vm86, %v967
    %1000 = vst.msk [vmem:[%s1 + $0x9f8] sm:$0xff] %vm86, %v968
    %v1001 = vld [vmem:[#allocation2 + $0xa0] sm:$0xff]
    %v1002 = vld [vmem:[#allocation2 + $0xa8] sm:$0xff]
    %1003 = vxpose.xlu0.b32.start [1/16] %v1001, 128
    %1004 = vxpose.xlu0.b32.cont [2/16] 0.0, 128
    %1005 = vxpose.xlu0.b32.cont [3/16] 0.0, 128
    %1006 = vxpose.xlu0.b32.cont [4/16] 0.0, 128
    %1007 = vxpose.xlu0.b32.cont [5/16] 0.0, 128
    %1008 = vxpose.xlu0.b32.cont [6/16] 0.0, 128
    %1009 = vxpose.xlu0.b32.cont [7/16] 0.0, 128
    %1010 = vxpose.xlu0.b32.cont [8/16] 0.0, 128
    %1011 = vxpose.xlu0.b32.cont [9/16] 0.0, 128
    %1012 = vxpose.xlu0.b32.cont [10/16] 0.0, 128
    %1013 = vxpose.xlu0.b32.cont [11/16] 0.0, 128
    %1014 = vxpose.xlu0.b32.cont [12/16] 0.0, 128
    %1015 = vxpose.xlu0.b32.cont [13/16] 0.0, 128
    %1016 = vxpose.xlu0.b32.cont [14/16] 0.0, 128
    %1017 = vxpose.xlu0.b32.cont [15/16] 0.0, 128
    %1018 = vxpose.xlu0.b32.end [16/16] 0.0, 128
    %v1019 = vpop.trf.xlu0
    %v1020 = vpop.trf.xlu0
    %v1021 = vpop.trf.xlu0
    %v1022 = vpop.trf.xlu0
    %v1023 = vpop.trf.xlu0
    %v1024 = vpop.trf.xlu0
    %v1025 = vpop.trf.xlu0
    %v1026 = vpop.trf.xlu0
    %v1027 = vpop.trf.xlu0
    %v1028 = vpop.trf.xlu0
    %v1029 = vpop.trf.xlu0
    %v1030 = vpop.trf.xlu0
    %v1031 = vpop.trf.xlu0
    %v1032 = vpop.trf.xlu0
    %v1033 = vpop.trf.xlu0
    %v1034 = vpop.trf.xlu0
    %1035 = vxpose.xlu0.b32.start [1/16] %v1002, 128
    %1036 = vxpose.xlu0.b32.cont [2/16] 0.0, 128
    %1037 = vxpose.xlu0.b32.cont [3/16] 0.0, 128
    %1038 = vxpose.xlu0.b32.cont [4/16] 0.0, 128
    %1039 = vxpose.xlu0.b32.cont [5/16] 0.0, 128
    %1040 = vxpose.xlu0.b32.cont [6/16] 0.0, 128
    %1041 = vxpose.xlu0.b32.cont [7/16] 0.0, 128
    %1042 = vxpose.xlu0.b32.cont [8/16] 0.0, 128
    %1043 = vxpose.xlu0.b32.cont [9/16] 0.0, 128
    %1044 = vxpose.xlu0.b32.cont [10/16] 0.0, 128
    %1045 = vxpose.xlu0.b32.cont [11/16] 0.0, 128
    %1046 = vxpose.xlu0.b32.cont [12/16] 0.0, 128
    %1047 = vxpose.xlu0.b32.cont [13/16] 0.0, 128
    %1048 = vxpose.xlu0.b32.cont [14/16] 0.0, 128
    %1049 = vxpose.xlu0.b32.cont [15/16] 0.0, 128
    %1050 = vxpose.xlu0.b32.end [16/16] 0.0, 128
    %v1051 = vpop.trf.xlu0
    %v1052 = vpop.trf.xlu0
    %v1053 = vpop.trf.xlu0
    %v1054 = vpop.trf.xlu0
    %v1055 = vpop.trf.xlu0
    %v1056 = vpop.trf.xlu0
    %v1057 = vpop.trf.xlu0
    %v1058 = vpop.trf.xlu0
    %v1059 = vpop.trf.xlu0
    %v1060 = vpop.trf.xlu0
    %v1061 = vpop.trf.xlu0
    %v1062 = vpop.trf.xlu0
    %v1063 = vpop.trf.xlu0
    %v1064 = vpop.trf.xlu0
    %v1065 = vpop.trf.xlu0
    %v1066 = vpop.trf.xlu0
    %1067 = vst.msk [vmem:[%s1 + $0xa00] sm:$0xff] %vm86, %v1019
    %1068 = vst.msk [vmem:[%s1 + $0xa08] sm:$0xff] %vm86, %v1020
    %1069 = vst.msk [vmem:[%s1 + $0xa10] sm:$0xff] %vm86, %v1021
    %1070 = vst.msk [vmem:[%s1 + $0xa18] sm:$0xff] %vm86, %v1022
    %1071 = vst.msk [vmem:[%s1 + $0xa20] sm:$0xff] %vm86, %v1023
    %1072 = vst.msk [vmem:[%s1 + $0xa28] sm:$0xff] %vm86, %v1024
    %1073 = vst.msk [vmem:[%s1 + $0xa30] sm:$0xff] %vm86, %v1025
    %1074 = vst.msk [vmem:[%s1 + $0xa38] sm:$0xff] %vm86, %v1026
    %1075 = vst.msk [vmem:[%s1 + $0xa40] sm:$0xff] %vm86, %v1027
    %1076 = vst.msk [vmem:[%s1 + $0xa48] sm:$0xff] %vm86, %v1028
    %1077 = vst.msk [vmem:[%s1 + $0xa50] sm:$0xff] %vm86, %v1029
    %1078 = vst.msk [vmem:[%s1 + $0xa58] sm:$0xff] %vm86, %v1030
    %1079 = vst.msk [vmem:[%s1 + $0xa60] sm:$0xff] %vm86, %v1031
    %1080 = vst.msk [vmem:[%s1 + $0xa68] sm:$0xff] %vm86, %v1032
    %1081 = vst.msk [vmem:[%s1 + $0xa70] sm:$0xff] %vm86, %v1033
    %1082 = vst.msk [vmem:[%s1 + $0xa78] sm:$0xff] %vm86, %v1034
    %1083 = vst.msk [vmem:[%s1 + $0xa80] sm:$0xff] %vm86, %v1051
    %1084 = vst.msk [vmem:[%s1 + $0xa88] sm:$0xff] %vm86, %v1052
    %1085 = vst.msk [vmem:[%s1 + $0xa90] sm:$0xff] %vm86, %v1053
    %1086 = vst.msk [vmem:[%s1 + $0xa98] sm:$0xff] %vm86, %v1054
    %1087 = vst.msk [vmem:[%s1 + $0xaa0] sm:$0xff] %vm86, %v1055
    %1088 = vst.msk [vmem:[%s1 + $0xaa8] sm:$0xff] %vm86, %v1056
    %1089 = vst.msk [vmem:[%s1 + $0xab0] sm:$0xff] %vm86, %v1057
    %1090 = vst.msk [vmem:[%s1 + $0xab8] sm:$0xff] %vm86, %v1058
    %1091 = vst.msk [vmem:[%s1 + $0xac0] sm:$0xff] %vm86, %v1059
    %1092 = vst.msk [vmem:[%s1 + $0xac8] sm:$0xff] %vm86, %v1060
    %1093 = vst.msk [vmem:[%s1 + $0xad0] sm:$0xff] %vm86, %v1061
    %1094 = vst.msk [vmem:[%s1 + $0xad8] sm:$0xff] %vm86, %v1062
    %1095 = vst.msk [vmem:[%s1 + $0xae0] sm:$0xff] %vm86, %v1063
    %1096 = vst.msk [vmem:[%s1 + $0xae8] sm:$0xff] %vm86, %v1064
    %1097 = vst.msk [vmem:[%s1 + $0xaf0] sm:$0xff] %vm86, %v1065
    %1098 = vst.msk [vmem:[%s1 + $0xaf8] sm:$0xff] %vm86, %v1066
    %v1099 = vld [vmem:[#allocation2 + $0xb0] sm:$0xff]
    %v1100 = vld [vmem:[#allocation2 + $0xb8] sm:$0xff]
    %1101 = vxpose.xlu0.b32.start [1/16] %v1099, 128
    %1102 = vxpose.xlu0.b32.cont [2/16] 0.0, 128
    %1103 = vxpose.xlu0.b32.cont [3/16] 0.0, 128
    %1104 = vxpose.xlu0.b32.cont [4/16] 0.0, 128
    %1105 = vxpose.xlu0.b32.cont [5/16] 0.0, 128
    %1106 = vxpose.xlu0.b32.cont [6/16] 0.0, 128
    %1107 = vxpose.xlu0.b32.cont [7/16] 0.0, 128
    %1108 = vxpose.xlu0.b32.cont [8/16] 0.0, 128
    %1109 = vxpose.xlu0.b32.cont [9/16] 0.0, 128
    %1110 = vxpose.xlu0.b32.cont [10/16] 0.0, 128
    %1111 = vxpose.xlu0.b32.cont [11/16] 0.0, 128
    %1112 = vxpose.xlu0.b32.cont [12/16] 0.0, 128
    %1113 = vxpose.xlu0.b32.cont [13/16] 0.0, 128
    %1114 = vxpose.xlu0.b32.cont [14/16] 0.0, 128
    %1115 = vxpose.xlu0.b32.cont [15/16] 0.0, 128
    %1116 = vxpose.xlu0.b32.end [16/16] 0.0, 128
    %v1117 = vpop.trf.xlu0
    %v1118 = vpop.trf.xlu0
    %v1119 = vpop.trf.xlu0
    %v1120 = vpop.trf.xlu0
    %v1121 = vpop.trf.xlu0
    %v1122 = vpop.trf.xlu0
    %v1123 = vpop.trf.xlu0
    %v1124 = vpop.trf.xlu0
    %v1125 = vpop.trf.xlu0
    %v1126 = vpop.trf.xlu0
    %v1127 = vpop.trf.xlu0
    %v1128 = vpop.trf.xlu0
    %v1129 = vpop.trf.xlu0
    %v1130 = vpop.trf.xlu0
    %v1131 = vpop.trf.xlu0
    %v1132 = vpop.trf.xlu0
    %1133 = vxpose.xlu0.b32.start [1/16] %v1100, 128
    %1134 = vxpose.xlu0.b32.cont [2/16] 0.0, 128
    %1135 = vxpose.xlu0.b32.cont [3/16] 0.0, 128
    %1136 = vxpose.xlu0.b32.cont [4/16] 0.0, 128
    %1137 = vxpose.xlu0.b32.cont [5/16] 0.0, 128
    %1138 = vxpose.xlu0.b32.cont [6/16] 0.0, 128
    %1139 = vxpose.xlu0.b32.cont [7/16] 0.0, 128
    %1140 = vxpose.xlu0.b32.cont [8/16] 0.0, 128
    %1141 = vxpose.xlu0.b32.cont [9/16] 0.0, 128
    %1142 = vxpose.xlu0.b32.cont [10/16] 0.0, 128
    %1143 = vxpose.xlu0.b32.cont [11/16] 0.0, 128
    %1144 = vxpose.xlu0.b32.cont [12/16] 0.0, 128
    %1145 = vxpose.xlu0.b32.cont [13/16] 0.0, 128
    %1146 = vxpose.xlu0.b32.cont [14/16] 0.0, 128
    %1147 = vxpose.xlu0.b32.cont [15/16] 0.0, 128
    %1148 = vxpose.xlu0.b32.end [16/16] 0.0, 128
    %v1149 = vpop.trf.xlu0
    %v1150 = vpop.trf.xlu0
    %v1151 = vpop.trf.xlu0
    %v1152 = vpop.trf.xlu0
    %v1153 = vpop.trf.xlu0
    %v1154 = vpop.trf.xlu0
    %v1155 = vpop.trf.xlu0
    %v1156 = vpop.trf.xlu0
    %v1157 = vpop.trf.xlu0
    %v1158 = vpop.trf.xlu0
    %v1159 = vpop.trf.xlu0
    %v1160 = vpop.trf.xlu0
    %v1161 = vpop.trf.xlu0
    %v1162 = vpop.trf.xlu0
    %v1163 = vpop.trf.xlu0
    %v1164 = vpop.trf.xlu0
    %1165 = vst.msk [vmem:[%s1 + $0xb00] sm:$0xff] %vm86, %v1117
    %1166 = vst.msk [vmem:[%s1 + $0xb08] sm:$0xff] %vm86, %v1118
    %1167 = vst.msk [vmem:[%s1 + $0xb10] sm:$0xff] %vm86, %v1119
    %1168 = vst.msk [vmem:[%s1 + $0xb18] sm:$0xff] %vm86, %v1120
    %1169 = vst.msk [vmem:[%s1 + $0xb20] sm:$0xff] %vm86, %v1121
    %1170 = vst.msk [vmem:[%s1 + $0xb28] sm:$0xff] %vm86, %v1122
    %1171 = vst.msk [vmem:[%s1 + $0xb30] sm:$0xff] %vm86, %v1123
    %1172 = vst.msk [vmem:[%s1 + $0xb38] sm:$0xff] %vm86, %v1124
    %1173 = vst.msk [vmem:[%s1 + $0xb40] sm:$0xff] %vm86, %v1125
    %1174 = vst.msk [vmem:[%s1 + $0xb48] sm:$0xff] %vm86, %v1126
    %1175 = vst.msk [vmem:[%s1 + $0xb50] sm:$0xff] %vm86, %v1127
    %1176 = vst.msk [vmem:[%s1 + $0xb58] sm:$0xff] %vm86, %v1128
    %1177 = vst.msk [vmem:[%s1 + $0xb60] sm:$0xff] %vm86, %v1129
    %1178 = vst.msk [vmem:[%s1 + $0xb68] sm:$0xff] %vm86, %v1130
    %1179 = vst.msk [vmem:[%s1 + $0xb70] sm:$0xff] %vm86, %v1131
    %1180 = vst.msk [vmem:[%s1 + $0xb78] sm:$0xff] %vm86, %v1132
    %1181 = vst.msk [vmem:[%s1 + $0xb80] sm:$0xff] %vm86, %v1149
    %1182 = vst.msk [vmem:[%s1 + $0xb88] sm:$0xff] %vm86, %v1150
    %1183 = vst.msk [vmem:[%s1 + $0xb90] sm:$0xff] %vm86, %v1151
    %1184 = vst.msk [vmem:[%s1 + $0xb98] sm:$0xff] %vm86, %v1152
    %1185 = vst.msk [vmem:[%s1 + $0xba0] sm:$0xff] %vm86, %v1153
    %1186 = vst.msk [vmem:[%s1 + $0xba8] sm:$0xff] %vm86, %v1154
    %1187 = vst.msk [vmem:[%s1 + $0xbb0] sm:$0xff] %vm86, %v1155
    %1188 = vst.msk [vmem:[%s1 + $0xbb8] sm:$0xff] %vm86, %v1156
    %1189 = vst.msk [vmem:[%s1 + $0xbc0] sm:$0xff] %vm86, %v1157
    %1190 = vst.msk [vmem:[%s1 + $0xbc8] sm:$0xff] %vm86, %v1158
    %1191 = vst.msk [vmem:[%s1 + $0xbd0] sm:$0xff] %vm86, %v1159
    %1192 = vst.msk [vmem:[%s1 + $0xbd8] sm:$0xff] %vm86, %v1160
    %1193 = vst.msk [vmem:[%s1 + $0xbe0] sm:$0xff] %vm86, %v1161
    %1194 = vst.msk [vmem:[%s1 + $0xbe8] sm:$0xff] %vm86, %v1162
    %1195 = vst.msk [vmem:[%s1 + $0xbf0] sm:$0xff] %vm86, %v1163
    %1196 = vst.msk [vmem:[%s1 + $0xbf8] sm:$0xff] %vm86, %v1164
    %v1197 = vld [vmem:[#allocation2 + $0xc0] sm:$0xff]
    %v1198 = vld [vmem:[#allocation2 + $0xc8] sm:$0xff]
    %1199 = vxpose.xlu0.b32.start [1/16] %v1197, 128
    %1200 = vxpose.xlu0.b32.cont [2/16] 0.0, 128
    %1201 = vxpose.xlu0.b32.cont [3/16] 0.0, 128
    %1202 = vxpose.xlu0.b32.cont [4/16] 0.0, 128
    %1203 = vxpose.xlu0.b32.cont [5/16] 0.0, 128
    %1204 = vxpose.xlu0.b32.cont [6/16] 0.0, 128
    %1205 = vxpose.xlu0.b32.cont [7/16] 0.0, 128
    %1206 = vxpose.xlu0.b32.cont [8/16] 0.0, 128
    %1207 = vxpose.xlu0.b32.cont [9/16] 0.0, 128
    %1208 = vxpose.xlu0.b32.cont [10/16] 0.0, 128
    %1209 = vxpose.xlu0.b32.cont [11/16] 0.0, 128
    %1210 = vxpose.xlu0.b32.cont [12/16] 0.0, 128
    %1211 = vxpose.xlu0.b32.cont [13/16] 0.0, 128
    %1212 = vxpose.xlu0.b32.cont [14/16] 0.0, 128
    %1213 = vxpose.xlu0.b32.cont [15/16] 0.0, 128
    %1214 = vxpose.xlu0.b32.end [16/16] 0.0, 128
    %v1215 = vpop.trf.xlu0
    %v1216 = vpop.trf.xlu0
    %v1217 = vpop.trf.xlu0
    %v1218 = vpop.trf.xlu0
    %v1219 = vpop.trf.xlu0
    %v1220 = vpop.trf.xlu0
    %v1221 = vpop.trf.xlu0
    %v1222 = vpop.trf.xlu0
    %v1223 = vpop.trf.xlu0
    %v1224 = vpop.trf.xlu0
    %v1225 = vpop.trf.xlu0
    %v1226 = vpop.trf.xlu0
    %v1227 = vpop.trf.xlu0
    %v1228 = vpop.trf.xlu0
    %v1229 = vpop.trf.xlu0
    %v1230 = vpop.trf.xlu0
    %1231 = vxpose.xlu0.b32.start [1/16] %v1198, 128
    %1232 = vxpose.xlu0.b32.cont [2/16] 0.0, 128
    %1233 = vxpose.xlu0.b32.cont [3/16] 0.0, 128
    %1234 = vxpose.xlu0.b32.cont [4/16] 0.0, 128
    %1235 = vxpose.xlu0.b32.cont [5/16] 0.0, 128
    %1236 = vxpose.xlu0.b32.cont [6/16] 0.0, 128
    %1237 = vxpose.xlu0.b32.cont [7/16] 0.0, 128
    %1238 = vxpose.xlu0.b32.cont [8/16] 0.0, 128
    %1239 = vxpose.xlu0.b32.cont [9/16] 0.0, 128
    %1240 = vxpose.xlu0.b32.cont [10/16] 0.0, 128
    %1241 = vxpose.xlu0.b32.cont [11/16] 0.0, 128
    %1242 = vxpose.xlu0.b32.cont [12/16] 0.0, 128
    %1243 = vxpose.xlu0.b32.cont [13/16] 0.0, 128
    %1244 = vxpose.xlu0.b32.cont [14/16] 0.0, 128
    %1245 = vxpose.xlu0.b32.cont [15/16] 0.0, 128
    %1246 = vxpose.xlu0.b32.end [16/16] 0.0, 128
    %v1247 = vpop.trf.xlu0
    %v1248 = vpop.trf.xlu0
    %v1249 = vpop.trf.xlu0
    %v1250 = vpop.trf.xlu0
    %v1251 = vpop.trf.xlu0
    %v1252 = vpop.trf.xlu0
    %v1253 = vpop.trf.xlu0
    %v1254 = vpop.trf.xlu0
    %v1255 = vpop.trf.xlu0
    %v1256 = vpop.trf.xlu0
    %v1257 = vpop.trf.xlu0
    %v1258 = vpop.trf.xlu0
    %v1259 = vpop.trf.xlu0
    %v1260 = vpop.trf.xlu0
    %v1261 = vpop.trf.xlu0
    %v1262 = vpop.trf.xlu0
    %1263 = vst.msk [vmem:[%s1 + $0xc00] sm:$0xff] %vm86, %v1215
    %1264 = vst.msk [vmem:[%s1 + $0xc08] sm:$0xff] %vm86, %v1216
    %1265 = vst.msk [vmem:[%s1 + $0xc10] sm:$0xff] %vm86, %v1217
    %1266 = vst.msk [vmem:[%s1 + $0xc18] sm:$0xff] %vm86, %v1218
    %1267 = vst.msk [vmem:[%s1 + $0xc20] sm:$0xff] %vm86, %v1219
    %1268 = vst.msk [vmem:[%s1 + $0xc28] sm:$0xff] %vm86, %v1220
    %1269 = vst.msk [vmem:[%s1 + $0xc30] sm:$0xff] %vm86, %v1221
    %1270 = vst.msk [vmem:[%s1 + $0xc38] sm:$0xff] %vm86, %v1222
    %1271 = vst.msk [vmem:[%s1 + $0xc40] sm:$0xff] %vm86, %v1223
    %1272 = vst.msk [vmem:[%s1 + $0xc48] sm:$0xff] %vm86, %v1224
    %1273 = vst.msk [vmem:[%s1 + $0xc50] sm:$0xff] %vm86, %v1225
    %1274 = vst.msk [vmem:[%s1 + $0xc58] sm:$0xff] %vm86, %v1226
    %1275 = vst.msk [vmem:[%s1 + $0xc60] sm:$0xff] %vm86, %v1227
    %1276 = vst.msk [vmem:[%s1 + $0xc68] sm:$0xff] %vm86, %v1228
    %1277 = vst.msk [vmem:[%s1 + $0xc70] sm:$0xff] %vm86, %v1229
    %1278 = vst.msk [vmem:[%s1 + $0xc78] sm:$0xff] %vm86, %v1230
    %1279 = vst.msk [vmem:[%s1 + $0xc80] sm:$0xff] %vm86, %v1247
    %1280 = vst.msk [vmem:[%s1 + $0xc88] sm:$0xff] %vm86, %v1248
    %1281 = vst.msk [vmem:[%s1 + $0xc90] sm:$0xff] %vm86, %v1249
    %1282 = vst.msk [vmem:[%s1 + $0xc98] sm:$0xff] %vm86, %v1250
    %1283 = vst.msk [vmem:[%s1 + $0xca0] sm:$0xff] %vm86, %v1251
    %1284 = vst.msk [vmem:[%s1 + $0xca8] sm:$0xff] %vm86, %v1252
    %1285 = vst.msk [vmem:[%s1 + $0xcb0] sm:$0xff] %vm86, %v1253
    %1286 = vst.msk [vmem:[%s1 + $0xcb8] sm:$0xff] %vm86, %v1254
    %1287 = vst.msk [vmem:[%s1 + $0xcc0] sm:$0xff] %vm86, %v1255
    %1288 = vst.msk [vmem:[%s1 + $0xcc8] sm:$0xff] %vm86, %v1256
    %1289 = vst.msk [vmem:[%s1 + $0xcd0] sm:$0xff] %vm86, %v1257
    %1290 = vst.msk [vmem:[%s1 + $0xcd8] sm:$0xff] %vm86, %v1258
    %1291 = vst.msk [vmem:[%s1 + $0xce0] sm:$0xff] %vm86, %v1259
    %1292 = vst.msk [vmem:[%s1 + $0xce8] sm:$0xff] %vm86, %v1260
    %1293 = vst.msk [vmem:[%s1 + $0xcf0] sm:$0xff] %vm86, %v1261
    %1294 = vst.msk [vmem:[%s1 + $0xcf8] sm:$0xff] %vm86, %v1262
    %v1295 = vld [vmem:[#allocation2 + $0xd0] sm:$0xff]
    %v1296 = vld [vmem:[#allocation2 + $0xd8] sm:$0xff]
    %1297 = vxpose.xlu0.b32.start [1/16] %v1295, 128
    %1298 = vxpose.xlu0.b32.cont [2/16] 0.0, 128
    %1299 = vxpose.xlu0.b32.cont [3/16] 0.0, 128
    %1300 = vxpose.xlu0.b32.cont [4/16] 0.0, 128
    %1301 = vxpose.xlu0.b32.cont [5/16] 0.0, 128
    %1302 = vxpose.xlu0.b32.cont [6/16] 0.0, 128
    %1303 = vxpose.xlu0.b32.cont [7/16] 0.0, 128
    %1304 = vxpose.xlu0.b32.cont [8/16] 0.0, 128
    %1305 = vxpose.xlu0.b32.cont [9/16] 0.0, 128
    %1306 = vxpose.xlu0.b32.cont [10/16] 0.0, 128
    %1307 = vxpose.xlu0.b32.cont [11/16] 0.0, 128
    %1308 = vxpose.xlu0.b32.cont [12/16] 0.0, 128
    %1309 = vxpose.xlu0.b32.cont [13/16] 0.0, 128
    %1310 = vxpose.xlu0.b32.cont [14/16] 0.0, 128
    %1311 = vxpose.xlu0.b32.cont [15/16] 0.0, 128
    %1312 = vxpose.xlu0.b32.end [16/16] 0.0, 128
    %v1313 = vpop.trf.xlu0
    %v1314 = vpop.trf.xlu0
    %v1315 = vpop.trf.xlu0
    %v1316 = vpop.trf.xlu0
    %v1317 = vpop.trf.xlu0
    %v1318 = vpop.trf.xlu0
    %v1319 = vpop.trf.xlu0
    %v1320 = vpop.trf.xlu0
    %v1321 = vpop.trf.xlu0
    %v1322 = vpop.trf.xlu0
    %v1323 = vpop.trf.xlu0
    %v1324 = vpop.trf.xlu0
    %v1325 = vpop.trf.xlu0
    %v1326 = vpop.trf.xlu0
    %v1327 = vpop.trf.xlu0
    %v1328 = vpop.trf.xlu0
    %1329 = vxpose.xlu0.b32.start [1/16] %v1296, 128
    %1330 = vxpose.xlu0.b32.cont [2/16] 0.0, 128
    %1331 = vxpose.xlu0.b32.cont [3/16] 0.0, 128
    %1332 = vxpose.xlu0.b32.cont [4/16] 0.0, 128
    %1333 = vxpose.xlu0.b32.cont [5/16] 0.0, 128
    %1334 = vxpose.xlu0.b32.cont [6/16] 0.0, 128
    %1335 = vxpose.xlu0.b32.cont [7/16] 0.0, 128
    %1336 = vxpose.xlu0.b32.cont [8/16] 0.0, 128
    %1337 = vxpose.xlu0.b32.cont [9/16] 0.0, 128
    %1338 = vxpose.xlu0.b32.cont [10/16] 0.0, 128
    %1339 = vxpose.xlu0.b32.cont [11/16] 0.0, 128
    %1340 = vxpose.xlu0.b32.cont [12/16] 0.0, 128
    %1341 = vxpose.xlu0.b32.cont [13/16] 0.0, 128
    %1342 = vxpose.xlu0.b32.cont [14/16] 0.0, 128
    %1343 = vxpose.xlu0.b32.cont [15/16] 0.0, 128
    %1344 = vxpose.xlu0.b32.end [16/16] 0.0, 128
    %v1345 = vpop.trf.xlu0
    %v1346 = vpop.trf.xlu0
    %v1347 = vpop.trf.xlu0
    %v1348 = vpop.trf.xlu0
    %v1349 = vpop.trf.xlu0
    %v1350 = vpop.trf.xlu0
    %v1351 = vpop.trf.xlu0
    %v1352 = vpop.trf.xlu0
    %v1353 = vpop.trf.xlu0
    %v1354 = vpop.trf.xlu0
    %v1355 = vpop.trf.xlu0
    %v1356 = vpop.trf.xlu0
    %v1357 = vpop.trf.xlu0
    %v1358 = vpop.trf.xlu0
    %v1359 = vpop.trf.xlu0
    %v1360 = vpop.trf.xlu0
    %1361 = vst.msk [vmem:[%s1 + $0xd00] sm:$0xff] %vm86, %v1313
    %1362 = vst.msk [vmem:[%s1 + $0xd08] sm:$0xff] %vm86, %v1314
    %1363 = vst.msk [vmem:[%s1 + $0xd10] sm:$0xff] %vm86, %v1315
    %1364 = vst.msk [vmem:[%s1 + $0xd18] sm:$0xff] %vm86, %v1316
    %1365 = vst.msk [vmem:[%s1 + $0xd20] sm:$0xff] %vm86, %v1317
    %1366 = vst.msk [vmem:[%s1 + $0xd28] sm:$0xff] %vm86, %v1318
    %1367 = vst.msk [vmem:[%s1 + $0xd30] sm:$0xff] %vm86, %v1319
    %1368 = vst.msk [vmem:[%s1 + $0xd38] sm:$0xff] %vm86, %v1320
    %1369 = vst.msk [vmem:[%s1 + $0xd40] sm:$0xff] %vm86, %v1321
    %1370 = vst.msk [vmem:[%s1 + $0xd48] sm:$0xff] %vm86, %v1322
    %1371 = vst.msk [vmem:[%s1 + $0xd50] sm:$0xff] %vm86, %v1323
    %1372 = vst.msk [vmem:[%s1 + $0xd58] sm:$0xff] %vm86, %v1324
    %1373 = vst.msk [vmem:[%s1 + $0xd60] sm:$0xff] %vm86, %v1325
    %1374 = vst.msk [vmem:[%s1 + $0xd68] sm:$0xff] %vm86, %v1326
    %1375 = vst.msk [vmem:[%s1 + $0xd70] sm:$0xff] %vm86, %v1327
    %1376 = vst.msk [vmem:[%s1 + $0xd78] sm:$0xff] %vm86, %v1328
    %1377 = vst.msk [vmem:[%s1 + $0xd80] sm:$0xff] %vm86, %v1345
    %1378 = vst.msk [vmem:[%s1 + $0xd88] sm:$0xff] %vm86, %v1346
    %1379 = vst.msk [vmem:[%s1 + $0xd90] sm:$0xff] %vm86, %v1347
    %1380 = vst.msk [vmem:[%s1 + $0xd98] sm:$0xff] %vm86, %v1348
    %1381 = vst.msk [vmem:[%s1 + $0xda0] sm:$0xff] %vm86, %v1349
    %1382 = vst.msk [vmem:[%s1 + $0xda8] sm:$0xff] %vm86, %v1350
    %1383 = vst.msk [vmem:[%s1 + $0xdb0] sm:$0xff] %vm86, %v1351
    %1384 = vst.msk [vmem:[%s1 + $0xdb8] sm:$0xff] %vm86, %v1352
    %1385 = vst.msk [vmem:[%s1 + $0xdc0] sm:$0xff] %vm86, %v1353
    %1386 = vst.msk [vmem:[%s1 + $0xdc8] sm:$0xff] %vm86, %v1354
    %1387 = vst.msk [vmem:[%s1 + $0xdd0] sm:$0xff] %vm86, %v1355
    %1388 = vst.msk [vmem:[%s1 + $0xdd8] sm:$0xff] %vm86, %v1356
    %1389 = vst.msk [vmem:[%s1 + $0xde0] sm:$0xff] %vm86, %v1357
    %1390 = vst.msk [vmem:[%s1 + $0xde8] sm:$0xff] %vm86, %v1358
    %1391 = vst.msk [vmem:[%s1 + $0xdf0] sm:$0xff] %vm86, %v1359
    %1392 = vst.msk [vmem:[%s1 + $0xdf8] sm:$0xff] %vm86, %v1360
    %v1393 = vld [vmem:[#allocation2 + $0xe0] sm:$0xff]
    %v1394 = vld [vmem:[#allocation2 + $0xe8] sm:$0xff]
    %1395 = vxpose.xlu0.b32.start [1/16] %v1393, 128
    %1396 = vxpose.xlu0.b32.cont [2/16] 0.0, 128
    %1397 = vxpose.xlu0.b32.cont [3/16] 0.0, 128
    %1398 = vxpose.xlu0.b32.cont [4/16] 0.0, 128
    %1399 = vxpose.xlu0.b32.cont [5/16] 0.0, 128
    %1400 = vxpose.xlu0.b32.cont [6/16] 0.0, 128
    %1401 = vxpose.xlu0.b32.cont [7/16] 0.0, 128
    %1402 = vxpose.xlu0.b32.cont [8/16] 0.0, 128
    %1403 = vxpose.xlu0.b32.cont [9/16] 0.0, 128
    %1404 = vxpose.xlu0.b32.cont [10/16] 0.0, 128
    %1405 = vxpose.xlu0.b32.cont [11/16] 0.0, 128
    %1406 = vxpose.xlu0.b32.cont [12/16] 0.0, 128
    %1407 = vxpose.xlu0.b32.cont [13/16] 0.0, 128
    %1408 = vxpose.xlu0.b32.cont [14/16] 0.0, 128
    %1409 = vxpose.xlu0.b32.cont [15/16] 0.0, 128
    %1410 = vxpose.xlu0.b32.end [16/16] 0.0, 128
    %v1411 = vpop.trf.xlu0
    %v1412 = vpop.trf.xlu0
    %v1413 = vpop.trf.xlu0
    %v1414 = vpop.trf.xlu0
    %v1415 = vpop.trf.xlu0
    %v1416 = vpop.trf.xlu0
    %v1417 = vpop.trf.xlu0
    %v1418 = vpop.trf.xlu0
    %v1419 = vpop.trf.xlu0
    %v1420 = vpop.trf.xlu0
    %v1421 = vpop.trf.xlu0
    %v1422 = vpop.trf.xlu0
    %v1423 = vpop.trf.xlu0
    %v1424 = vpop.trf.xlu0
    %v1425 = vpop.trf.xlu0
    %v1426 = vpop.trf.xlu0
    %1427 = vxpose.xlu0.b32.start [1/16] %v1394, 128
    %1428 = vxpose.xlu0.b32.cont [2/16] 0.0, 128
    %1429 = vxpose.xlu0.b32.cont [3/16] 0.0, 128
    %1430 = vxpose.xlu0.b32.cont [4/16] 0.0, 128
    %1431 = vxpose.xlu0.b32.cont [5/16] 0.0, 128
    %1432 = vxpose.xlu0.b32.cont [6/16] 0.0, 128
    %1433 = vxpose.xlu0.b32.cont [7/16] 0.0, 128
    %1434 = vxpose.xlu0.b32.cont [8/16] 0.0, 128
    %1435 = vxpose.xlu0.b32.cont [9/16] 0.0, 128
    %1436 = vxpose.xlu0.b32.cont [10/16] 0.0, 128
    %1437 = vxpose.xlu0.b32.cont [11/16] 0.0, 128
    %1438 = vxpose.xlu0.b32.cont [12/16] 0.0, 128
    %1439 = vxpose.xlu0.b32.cont [13/16] 0.0, 128
    %1440 = vxpose.xlu0.b32.cont [14/16] 0.0, 128
    %1441 = vxpose.xlu0.b32.cont [15/16] 0.0, 128
    %1442 = vxpose.xlu0.b32.end [16/16] 0.0, 128
    %v1443 = vpop.trf.xlu0
    %v1444 = vpop.trf.xlu0
    %v1445 = vpop.trf.xlu0
    %v1446 = vpop.trf.xlu0
    %v1447 = vpop.trf.xlu0
    %v1448 = vpop.trf.xlu0
    %v1449 = vpop.trf.xlu0
    %v1450 = vpop.trf.xlu0
    %v1451 = vpop.trf.xlu0
    %v1452 = vpop.trf.xlu0
    %v1453 = vpop.trf.xlu0
    %v1454 = vpop.trf.xlu0
    %v1455 = vpop.trf.xlu0
    %v1456 = vpop.trf.xlu0
    %v1457 = vpop.trf.xlu0
    %v1458 = vpop.trf.xlu0
    %1459 = vst.msk [vmem:[%s1 + $0xe00] sm:$0xff] %vm86, %v1411
    %1460 = vst.msk [vmem:[%s1 + $0xe08] sm:$0xff] %vm86, %v1412
    %1461 = vst.msk [vmem:[%s1 + $0xe10] sm:$0xff] %vm86, %v1413
    %1462 = vst.msk [vmem:[%s1 + $0xe18] sm:$0xff] %vm86, %v1414
    %1463 = vst.msk [vmem:[%s1 + $0xe20] sm:$0xff] %vm86, %v1415
    %1464 = vst.msk [vmem:[%s1 + $0xe28] sm:$0xff] %vm86, %v1416
    %1465 = vst.msk [vmem:[%s1 + $0xe30] sm:$0xff] %vm86, %v1417
    %1466 = vst.msk [vmem:[%s1 + $0xe38] sm:$0xff] %vm86, %v1418
    %1467 = vst.msk [vmem:[%s1 + $0xe40] sm:$0xff] %vm86, %v1419
    %1468 = vst.msk [vmem:[%s1 + $0xe48] sm:$0xff] %vm86, %v1420
    %1469 = vst.msk [vmem:[%s1 + $0xe50] sm:$0xff] %vm86, %v1421
    %1470 = vst.msk [vmem:[%s1 + $0xe58] sm:$0xff] %vm86, %v1422
    %1471 = vst.msk [vmem:[%s1 + $0xe60] sm:$0xff] %vm86, %v1423
    %1472 = vst.msk [vmem:[%s1 + $0xe68] sm:$0xff] %vm86, %v1424
    %1473 = vst.msk [vmem:[%s1 + $0xe70] sm:$0xff] %vm86, %v1425
    %1474 = vst.msk [vmem:[%s1 + $0xe78] sm:$0xff] %vm86, %v1426
    %1475 = vst.msk [vmem:[%s1 + $0xe80] sm:$0xff] %vm86, %v1443
    %1476 = vst.msk [vmem:[%s1 + $0xe88] sm:$0xff] %vm86, %v1444
    %1477 = vst.msk [vmem:[%s1 + $0xe90] sm:$0xff] %vm86, %v1445
    %1478 = vst.msk [vmem:[%s1 + $0xe98] sm:$0xff] %vm86, %v1446
    %1479 = vst.msk [vmem:[%s1 + $0xea0] sm:$0xff] %vm86, %v1447
    %1480 = vst.msk [vmem:[%s1 + $0xea8] sm:$0xff] %vm86, %v1448
    %1481 = vst.msk [vmem:[%s1 + $0xeb0] sm:$0xff] %vm86, %v1449
    %1482 = vst.msk [vmem:[%s1 + $0xeb8] sm:$0xff] %vm86, %v1450
    %1483 = vst.msk [vmem:[%s1 + $0xec0] sm:$0xff] %vm86, %v1451
    %1484 = vst.msk [vmem:[%s1 + $0xec8] sm:$0xff] %vm86, %v1452
    %1485 = vst.msk [vmem:[%s1 + $0xed0] sm:$0xff] %vm86, %v1453
    %1486 = vst.msk [vmem:[%s1 + $0xed8] sm:$0xff] %vm86, %v1454
    %1487 = vst.msk [vmem:[%s1 + $0xee0] sm:$0xff] %vm86, %v1455
    %1488 = vst.msk [vmem:[%s1 + $0xee8] sm:$0xff] %vm86, %v1456
    %1489 = vst.msk [vmem:[%s1 + $0xef0] sm:$0xff] %vm86, %v1457
    %1490 = vst.msk [vmem:[%s1 + $0xef8] sm:$0xff] %vm86, %v1458
    %v1491 = vld [vmem:[#allocation2 + $0xf0] sm:$0xff]
    %v1492 = vld [vmem:[#allocation2 + $0xf8] sm:$0xff]
    %1493 = vxpose.xlu0.b32.start [1/16] %v1491, 128
    %1494 = vxpose.xlu0.b32.cont [2/16] 0.0, 128
    %1495 = vxpose.xlu0.b32.cont [3/16] 0.0, 128
    %1496 = vxpose.xlu0.b32.cont [4/16] 0.0, 128
    %1497 = vxpose.xlu0.b32.cont [5/16] 0.0, 128
    %1498 = vxpose.xlu0.b32.cont [6/16] 0.0, 128
    %1499 = vxpose.xlu0.b32.cont [7/16] 0.0, 128
    %1500 = vxpose.xlu0.b32.cont [8/16] 0.0, 128
    %1501 = vxpose.xlu0.b32.cont [9/16] 0.0, 128
    %1502 = vxpose.xlu0.b32.cont [10/16] 0.0, 128
    %1503 = vxpose.xlu0.b32.cont [11/16] 0.0, 128
    %1504 = vxpose.xlu0.b32.cont [12/16] 0.0, 128
    %1505 = vxpose.xlu0.b32.cont [13/16] 0.0, 128
    %1506 = vxpose.xlu0.b32.cont [14/16] 0.0, 128
    %1507 = vxpose.xlu0.b32.cont [15/16] 0.0, 128
    %1508 = vxpose.xlu0.b32.end [16/16] 0.0, 128
    %v1509 = vpop.trf.xlu0
    %v1510 = vpop.trf.xlu0
    %v1511 = vpop.trf.xlu0
    %v1512 = vpop.trf.xlu0
    %v1513 = vpop.trf.xlu0
    %v1514 = vpop.trf.xlu0
    %v1515 = vpop.trf.xlu0
    %v1516 = vpop.trf.xlu0
    %v1517 = vpop.trf.xlu0
    %v1518 = vpop.trf.xlu0
    %v1519 = vpop.trf.xlu0
    %v1520 = vpop.trf.xlu0
    %v1521 = vpop.trf.xlu0
    %v1522 = vpop.trf.xlu0
    %v1523 = vpop.trf.xlu0
    %v1524 = vpop.trf.xlu0
    %1525 = vxpose.xlu0.b32.start [1/16] %v1492, 128
    %1526 = vxpose.xlu0.b32.cont [2/16] 0.0, 128
    %1527 = vxpose.xlu0.b32.cont [3/16] 0.0, 128
    %1528 = vxpose.xlu0.b32.cont [4/16] 0.0, 128
    %1529 = vxpose.xlu0.b32.cont [5/16] 0.0, 128
    %1530 = vxpose.xlu0.b32.cont [6/16] 0.0, 128
    %1531 = vxpose.xlu0.b32.cont [7/16] 0.0, 128
    %1532 = vxpose.xlu0.b32.cont [8/16] 0.0, 128
    %1533 = vxpose.xlu0.b32.cont [9/16] 0.0, 128
    %1534 = vxpose.xlu0.b32.cont [10/16] 0.0, 128
    %1535 = vxpose.xlu0.b32.cont [11/16] 0.0, 128
    %1536 = vxpose.xlu0.b32.cont [12/16] 0.0, 128
    %1537 = vxpose.xlu0.b32.cont [13/16] 0.0, 128
    %1538 = vxpose.xlu0.b32.cont [14/16] 0.0, 128
    %1539 = vxpose.xlu0.b32.cont [15/16] 0.0, 128
    %1540 = vxpose.xlu0.b32.end [16/16] 0.0, 128
    %v1541 = vpop.trf.xlu0
    %v1542 = vpop.trf.xlu0
    %v1543 = vpop.trf.xlu0
    %v1544 = vpop.trf.xlu0
    %v1545 = vpop.trf.xlu0
    %v1546 = vpop.trf.xlu0
    %v1547 = vpop.trf.xlu0
    %v1548 = vpop.trf.xlu0
    %v1549 = vpop.trf.xlu0
    %v1550 = vpop.trf.xlu0
    %v1551 = vpop.trf.xlu0
    %v1552 = vpop.trf.xlu0
    %v1553 = vpop.trf.xlu0
    %v1554 = vpop.trf.xlu0
    %v1555 = vpop.trf.xlu0
    %v1556 = vpop.trf.xlu0
    %1557 = vst.msk [vmem:[%s1 + $0xf00] sm:$0xff] %vm86, %v1509
    %1558 = vst.msk [vmem:[%s1 + $0xf08] sm:$0xff] %vm86, %v1510
    %1559 = vst.msk [vmem:[%s1 + $0xf10] sm:$0xff] %vm86, %v1511
    %1560 = vst.msk [vmem:[%s1 + $0xf18] sm:$0xff] %vm86, %v1512
    %1561 = vst.msk [vmem:[%s1 + $0xf20] sm:$0xff] %vm86, %v1513
    %1562 = vst.msk [vmem:[%s1 + $0xf28] sm:$0xff] %vm86, %v1514
    %1563 = vst.msk [vmem:[%s1 + $0xf30] sm:$0xff] %vm86, %v1515
    %1564 = vst.msk [vmem:[%s1 + $0xf38] sm:$0xff] %vm86, %v1516
    %1565 = vst.msk [vmem:[%s1 + $0xf40] sm:$0xff] %vm86, %v1517
    %1566 = vst.msk [vmem:[%s1 + $0xf48] sm:$0xff] %vm86, %v1518
    %1567 = vst.msk [vmem:[%s1 + $0xf50] sm:$0xff] %vm86, %v1519
    %1568 = vst.msk [vmem:[%s1 + $0xf58] sm:$0xff] %vm86, %v1520
    %1569 = vst.msk [vmem:[%s1 + $0xf60] sm:$0xff] %vm86, %v1521
    %1570 = vst.msk [vmem:[%s1 + $0xf68] sm:$0xff] %vm86, %v1522
    %1571 = vst.msk [vmem:[%s1 + $0xf70] sm:$0xff] %vm86, %v1523
    %1572 = vst.msk [vmem:[%s1 + $0xf78] sm:$0xff] %vm86, %v1524
    %1573 = vst.msk [vmem:[%s1 + $0xf80] sm:$0xff] %vm86, %v1541
    %1574 = vst.msk [vmem:[%s1 + $0xf88] sm:$0xff] %vm86, %v1542
    %1575 = vst.msk [vmem:[%s1 + $0xf90] sm:$0xff] %vm86, %v1543
    %1576 = vst.msk [vmem:[%s1 + $0xf98] sm:$0xff] %vm86, %v1544
    %1577 = vst.msk [vmem:[%s1 + $0xfa0] sm:$0xff] %vm86, %v1545
    %1578 = vst.msk [vmem:[%s1 + $0xfa8] sm:$0xff] %vm86, %v1546
    %1579 = vst.msk [vmem:[%s1 + $0xfb0] sm:$0xff] %vm86, %v1547
    %1580 = vst.msk [vmem:[%s1 + $0xfb8] sm:$0xff] %vm86, %v1548
    %1581 = vst.msk [vmem:[%s1 + $0xfc0] sm:$0xff] %vm86, %v1549
    %1582 = vst.msk [vmem:[%s1 + $0xfc8] sm:$0xff] %vm86, %v1550
    %1583 = vst.msk [vmem:[%s1 + $0xfd0] sm:$0xff] %vm86, %v1551
    %1584 = vst.msk [vmem:[%s1 + $0xfd8] sm:$0xff] %vm86, %v1552
    %1585 = vst.msk [vmem:[%s1 + $0xfe0] sm:$0xff] %vm86, %v1553
    %1586 = vst.msk [vmem:[%s1 + $0xfe8] sm:$0xff] %vm86, %v1554
    %1587 = vst.msk [vmem:[%s1 + $0xff0] sm:$0xff] %vm86, %v1555
    %1588 = vst.msk [vmem:[%s1 + $0xff8] sm:$0xff] %vm86, %v1556
    // Predicated region
    $region10: #{tpu_custom_call.1} parent=1 // pred_check
      _
    $region11: #{tpu_custom_call.1} parent=1 // pred_check_branch
      %1590 = sbr.rel (0) target = $region13
    $region12: #{tpu_custom_call.1} parent=1 // pred_region
      _
    $region13: #{tpu_custom_call.1} parent=1 // pred_fallthru
      _
    // Predicated region
    $region14: #{tpu_custom_call.1} parent=1 // pred_check
      _
    $region15: #{tpu_custom_call.1} parent=1 // pred_check_branch
      %1592 = sbr.rel (0) target = $region17
    $region16: #{tpu_custom_call.1} parent=1 // pred_region
      _
    $region17: #{tpu_custom_call.1} parent=1 // pred_fallthru
      _
    %1593 = vsyncpa [#allocation3], 1

</llo_original>
